<compile_context>
chip_gen: v6e
topology: v6e:2x2x1
jax: 0.10.0
libtpu: 0.0.40
codegen_flags: <defaults>
</compile_context>

<pallas_src>
import jax
import jax.numpy as jnp
import numpy as np
from jax.experimental import pallas as pl
from jax.experimental.pallas import tpu as pltpu

# ----------------------------- small synthetic config -----------------------
B = 2            # batch
T = 16           # sequence length
H = 32           # hidden_size
NUM_HEADS = 4    # num_attention_heads
HEAD_DIM = H // NUM_HEADS
INTER = 64       # intermediate_size
NUM_LAYERS = 2   # num_hidden_layers
CONV_K = 16      # num_conv_pos_embeddings
CONV_GROUPS = 4  # num_conv_pos_embedding_groups
PAD = CONV_K // 2
LN_EPS = 1e-5    # layer_norm_eps
NEG = float(jnp.finfo(jnp.float32).min)


def _layernorm(x, g, b, eps):
    mu = jnp.mean(x, axis=-1, keepdims=True)
    var = jnp.mean((x - mu) ** 2, axis=-1, keepdims=True)
    return (x - mu) * jax.lax.rsqrt(var + eps) * g[None, :] + b[None, :]


def _gelu(x):
    # TODO(synk): torch nn.GELU / HF "gelu" use exact erf GELU; using the
    # tanh-approximate GELU here (Mosaic-supported transcendentals).
    return jax.nn.gelu(x, approximate=True)


def _softmax(s):
    # exp + lane-sum, normalize with the EUP reciprocal (free slot vs VALU div)
    m = jnp.max(s, axis=-1, keepdims=True)
    p = jnp.exp(s - m)
    return p * pl.reciprocal(jnp.sum(p, axis=-1, keepdims=True), approx=True)


# ----------------------------- fused encoder kernel --------------------------
# vech rows per layer: 0=bq(*scale) 1=bk 2=bv 3=bo 4=ln1_g 5=ln1_b 6=bo2 7=ln2_g 8=ln2_b
# wqkvo rows per layer: [wq*scale, wk, wv, wo] stacked along the leading axis.
def make_fused_encoder_kernel(block_b):
    R = block_b          # batch elements folded into this block's rows
    RT = R * T
    f32 = jnp.float32

    def kernel(h_ref, xcol_ref, bias_ref, hmask_ref,
               wconv_ref, cvec_ref, wqkvo_ref, wi_ref, wo2_ref,
               vech_ref, bi_ref, o_ref):
        h0 = h_ref[...].reshape(RT, H)                      # masked hidden, (RT, H)
        xcol = xcol_ref[...].reshape(RT, CONV_K * H)        # im2col (built in wrapper)
        bias = bias_ref[0]                                  # (NH*RT, RT) additive mask
        head_mask = hmask_ref[...]                          # (NH*RT, H) block-diag head mask

        # ---- positional conv embedding (grouped Conv1d + SamePad) as one matmul
        pos = jnp.dot(xcol, wconv_ref[...], preferred_element_type=f32)   # (RT, H)
        pos = _gelu(pos + cvec_ref[0][None, :])
        # residual add + encoder LayerNorm (dropout = identity in eval)
        h = _layernorm(h0 + pos, cvec_ref[1], cvec_ref[2], LN_EPS)

        for l in range(NUM_LAYERS):                         # static unroll (2 layers)
            vh = vech_ref[l]                                # (9, H)

            q = jnp.dot(h, wqkvo_ref[4 * l + 0], preferred_element_type=f32) + vh[0][None, :]
            k = jnp.dot(h, wqkvo_ref[4 * l + 1], preferred_element_type=f32) + vh[1][None, :]
            v = jnp.dot(h, wqkvo_ref[4 * l + 2], preferred_element_type=f32) + vh[2][None, :]

            # all heads at once: q stacked per head along rows, cross-head
            # columns zeroed; batch/key masking via the additive bias.
            q_stack = jnp.concatenate([q] * NUM_HEADS, axis=0) * head_mask   # (NH*RT, H)
            s = jnp.einsum('qh,kh->qk', q_stack, k,
                           preferred_element_type=f32) + bias                # (NH*RT, RT)
            p = _softmax(s)
            ctx_full = jnp.dot(p, v, preferred_element_type=f32) * head_mask # (NH*RT, H)
            ctx = ctx_full[0:RT]
            for hh in range(1, NUM_HEADS):
                ctx = ctx + ctx_full[hh * RT:(hh + 1) * RT]                  # (RT, H)

            # attention output projection + residual + LN
            attn = jnp.dot(ctx, wqkvo_ref[4 * l + 3],
                           preferred_element_type=f32) + vh[3][None, :]
            h = _layernorm(h + attn, vh[4], vh[5], LN_EPS)

            # feed-forward: dense -> GELU -> dense, residual + final LN
            ff = jnp.dot(h, wi_ref[l], preferred_element_type=f32) + bi_ref[l][None, :]
            ff = _gelu(ff)
            ff = jnp.dot(ff, wo2_ref[l], preferred_element_type=f32) + vh[6][None, :]
            h = _layernorm(h + ff, vh[7], vh[8], LN_EPS)

        o_ref[...] = h.reshape(R, T, H)

    return kernel


# ----------------------------- wrapper ---------------------------------------
def _pick_block_b():
    """Batch elements folded per grid step: fold everything on single-TC chips,
    keep one batch element per step on 2-TC (megacore) chips."""
    try:
        kind = jax.devices()[0].device_kind.lower()
    except Exception:
        return B
    if any(tag in kind for tag in ('v7', 'v4', 'v5p')):
        return 1
    return B


def packed_wav2vec2_encoder(hidden_states, attention_mask, params, block_b=None):
    """hidden_states: (B, T, H) f32; attention_mask: (B, T) of 0/1."""
    mask = attention_mask.astype(jnp.float32)
    # hidden_states[~expand_attention_mask] = 0  (boolean masking -> multiply)
    hidden = hidden_states * mask[:, :, None]

    R = _pick_block_b() if block_b is None else block_b
    assert B % R == 0
    NB = B // R
    RT = R * T

    # ---- im2col for the grouped pos-conv, built by XLA in the wrapper
    xp = jnp.pad(hidden, ((0, 0), (PAD, PAD), (0, 0)))
    xcol = jnp.concatenate([xp[:, k:k + T, :] for k in range(CONV_K)], axis=-1)  # (B,T,K*H)

    # ---- additive attention bias: (1 - mask)*finfo.min for invalid keys,
    # plus block-diagonal batch separation when batches share a block.
    valid = mask.reshape(NB, 1, RT)                                   # key validity per col
    same_batch = (np.arange(RT)[:, None] // T ==
                  np.arange(RT)[None, :] // T).astype(np.float32)     # (RT, RT)
    allowed = jnp.asarray(same_batch)[None] * valid                   # (NB, RT, RT)
    attn_bias = jnp.tile((1.0 - allowed) * NEG, (1, NUM_HEADS, 1))    # (NB, NH*RT, RT)

    # ---- static block-diagonal head mask (precomputed, replicated input)
    row_head = np.arange(NUM_HEADS * RT) // RT
    col_head = np.arange(H) // HEAD_DIM
    head_mask = jnp.asarray((row_head[:, None] == col_head[None, :]).astype(np.float32))

    def rep(shape):
        n = len(shape)
        return pl.BlockSpec(shape, lambda b, _n=n: (0,) * _n)

    # TODO(synk): the reference forward raises ValueError unconditionally right
    # before pos_conv_embed; we implement the intended (standard Wav2Vec2)
    # computation past that point.
    return pl.pallas_call(
        make_fused_encoder_kernel(R),
        out_shape=jax.ShapeDtypeStruct((B, T, H), jnp.float32),
        grid=(NB,),
        in_specs=[
            pl.BlockSpec((R, T, H), lambda b: (b, 0, 0)),             # masked hidden
            pl.BlockSpec((R, T, CONV_K * H), lambda b: (b, 0, 0)),    # im2col
            pl.BlockSpec((1, NUM_HEADS * RT, RT), lambda b: (b, 0, 0)),  # attn bias
            rep((NUM_HEADS * RT, H)),                                 # head mask
            rep((CONV_K * H, H)),                                     # packed conv weight
            rep((3, H)),                                              # conv_b, enc ln_g, enc ln_b
            rep((NUM_LAYERS * 4, H, H)),                              # [wq*s, wk, wv, wo] x L
            rep((NUM_LAYERS, H, INTER)),                              # wi
            rep((NUM_LAYERS, INTER, H)),                              # wo2
            rep((NUM_LAYERS, 9, H)),                                  # biases + LN params
            rep((NUM_LAYERS, INTER)),                                 # bi
        ],
        out_specs=pl.BlockSpec((R, T, H), lambda b: (b, 0, 0)),
        compiler_params=pltpu.CompilerParams(
            dimension_semantics=("parallel",)),
    )(hidden, xcol, attn_bias, head_mask,
      params['wconv'], params['cvec'], params['wqkvo'],
      params['wi'], params['wo2'], params['vech'], params['bi'])


# ----------------------------- deterministic params --------------------------
def init_params(key):
    keys = iter(jax.random.split(key, 64))

    def nrm(shape, scale=0.05):
        return (scale * jax.random.normal(next(keys), shape)).astype(jnp.float32)

    cpg = H // CONV_GROUPS  # channels per group (in == out here)
    # PyTorch grouped Conv1d weight: (out_channels=H, in_channels/groups, K)
    # (weight_norm's effective weight; initialized directly since synthetic)
    conv_w = nrm((H, cpg, CONV_K))
    conv_b = nrm((H,))
    # fold into dense per-tap (H_in, H_out) block-diagonal matrices, then
    # flatten taps into one (K*H, H) im2col weight
    w_dense = jnp.zeros((CONV_K, H, H), jnp.float32)
    for g in range(CONV_GROUPS):
        blk = conv_w[g * cpg:(g + 1) * cpg]            # (cout, cin, K)
        w_dense = w_dense.at[:, g * cpg:(g + 1) * cpg, g * cpg:(g + 1) * cpg].set(
            jnp.transpose(blk, (2, 1, 0)))             # (K, cin, cout)
    wconv = w_dense.reshape(CONV_K * H, H)

    cvec = jnp.stack([conv_b,
                      jnp.ones((H,), jnp.float32),     # encoder LN gamma
                      jnp.zeros((H,), jnp.float32)])   # encoder LN beta

    scale = HEAD_DIM ** -0.5
    wqkvo_l, wi_l, wo2_l, vech_l, bi_l = [], [], [], [], []
    for _ in range(NUM_LAYERS):
        # nn.Linear weights are stored here already as (in, out) matrices
        wq, wk, wv, wo = nrm((H, H)), nrm((H, H)), nrm((H, H)), nrm((H, H))
        wi, wo2 = nrm((H, INTER)), nrm((INTER, H))
        bq, bk, bv, bo = nrm((H,)), nrm((H,)), nrm((H,)), nrm((H,))
        bi, bo2 = nrm((INTER,)), nrm((H,))
        ln1_g, ln1_b = jnp.ones((H,), jnp.float32), jnp.zeros((H,), jnp.float32)
        ln2_g, ln2_b = jnp.ones((H,), jnp.float32), jnp.zeros((H,), jnp.float32)

        # fold the 1/sqrt(head_dim) query scale into wq / bq offline
        wqkvo_l.append(jnp.stack([wq * scale, wk, wv, wo]))          # (4, H, H)
        wi_l.append(wi)
        wo2_l.append(wo2)
        vech_l.append(jnp.stack([bq * scale, bk, bv, bo,
                                 ln1_g, ln1_b, bo2, ln2_g, ln2_b]))  # (9, H)
        bi_l.append(bi)

    return {
        'wconv': wconv,
        'cvec': cvec,
        'wqkvo': jnp.concatenate(wqkvo_l, axis=0),   # (L*4, H, H)
        'wi': jnp.stack(wi_l),                        # (L, H, INTER)
        'wo2': jnp.stack(wo2_l),                      # (L, INTER, H)
        'vech': jnp.stack(vech_l),                    # (L, 9, H)
        'bi': jnp.stack(bi_l),                        # (L, INTER)
    }


if __name__ == "__main__":
    key = jax.random.PRNGKey(0)
    k_p, k_h = jax.random.split(key)
    params = init_params(k_p)

    hidden = jax.random.normal(k_h, (B, T, H), jnp.float32)
    # attention mask: batch 0 fully valid, batch 1 has the last 4 steps masked
    attention_mask = jnp.ones((B, T), jnp.float32).at[1, 12:].set(0.0)

    out = packed_wav2vec2_encoder(hidden, attention_mask, params)
    out = jax.block_until_ready(out)
    assert out.shape == (B, T, H) and out.dtype == jnp.float32
    assert bool(jnp.isfinite(out).all())
    print("KERNEL_OK")
</pallas_src>

<mosaic_0001>
module attributes {stable_mosaic.version = 11 : i64} {
  func.func @kernel(%arg0: i32, %arg1: memref<2x16x32xf32, #tpu.memory_space<vmem>>, %arg2: memref<2x16x512xf32, #tpu.memory_space<vmem>>, %arg3: memref<1x128x32xf32, #tpu.memory_space<vmem>>, %arg4: memref<128x32xf32, #tpu.memory_space<vmem>>, %arg5: memref<512x32xf32, #tpu.memory_space<vmem>>, %arg6: memref<3x32xf32, #tpu.memory_space<vmem>>, %arg7: memref<8x32x32xf32, #tpu.memory_space<vmem>>, %arg8: memref<2x32x64xf32, #tpu.memory_space<vmem>>, %arg9: memref<2x64x32xf32, #tpu.memory_space<vmem>>, %arg10: memref<2x9x32xf32, #tpu.memory_space<vmem>>, %arg11: memref<2x64xf32, #tpu.memory_space<vmem>>, %arg12: memref<2x16x32xf32, #tpu.memory_space<vmem>>) attributes {dimension_semantics = [#tpu.dimension_semantics<parallel>], iteration_bounds = array<i64: 1>, scalar_prefetch = 0 : i64, scratch_operands = 0 : i64, tpu.core_type = #tpu.core_type<tc>, window_params = [{transform_indices = @transform_0, window_bounds = array<i64: 2, 16, 32>}, {transform_indices = @transform_1, window_bounds = array<i64: 2, 16, 512>}, {transform_indices = @transform_2, window_bounds = array<i64: 1, 128, 32>}, {pipeline_mode = #tpu.pipeline_mode<synchronous>, transform_indices = @transform_3, window_bounds = array<i64: 128, 32>}, {pipeline_mode = #tpu.pipeline_mode<synchronous>, transform_indices = @transform_4, window_bounds = array<i64: 512, 32>}, {pipeline_mode = #tpu.pipeline_mode<synchronous>, transform_indices = @transform_5, window_bounds = array<i64: 3, 32>}, {pipeline_mode = #tpu.pipeline_mode<synchronous>, transform_indices = @transform_6, window_bounds = array<i64: 8, 32, 32>}, {pipeline_mode = #tpu.pipeline_mode<synchronous>, transform_indices = @transform_7, window_bounds = array<i64: 2, 32, 64>}, {pipeline_mode = #tpu.pipeline_mode<synchronous>, transform_indices = @transform_8, window_bounds = array<i64: 2, 64, 32>}, {pipeline_mode = #tpu.pipeline_mode<synchronous>, transform_indices = @transform_9, window_bounds = array<i64: 2, 9, 32>}, {pipeline_mode = #tpu.pipeline_mode<synchronous>, transform_indices = @transform_10, window_bounds = array<i64: 2, 64>}, {transform_indices = @transform_11, window_bounds = array<i64: 2, 16, 32>}]} {
    %c0 = arith.constant 0 : index
    %c0_0 = arith.constant 0 : index
    %c0_1 = arith.constant 0 : index
    %0 = vector.load %arg1[%c0, %c0_0, %c0_1] : memref<2x16x32xf32, #tpu.memory_space<vmem>>, vector<2x16x32xf32>
    %1 = vector.shape_cast %0 : vector<2x16x32xf32> to vector<32x32xf32>
    %c0_2 = arith.constant 0 : index
    %c0_3 = arith.constant 0 : index
    %c0_4 = arith.constant 0 : index
    %2 = vector.load %arg2[%c0_2, %c0_3, %c0_4] : memref<2x16x512xf32, #tpu.memory_space<vmem>>, vector<2x16x512xf32>
    %3 = vector.shape_cast %2 : vector<2x16x512xf32> to vector<32x512xf32>
    %c0_5 = arith.constant 0 : index
    %c0_6 = arith.constant 0 : index
    %c0_7 = arith.constant 0 : index
    %4 = vector.load %arg3[%c0_5, %c0_6, %c0_7] : memref<1x128x32xf32, #tpu.memory_space<vmem>>, vector<1x128x32xf32>
    %5 = vector.shape_cast %4 : vector<1x128x32xf32> to vector<128x32xf32>
    %c0_8 = arith.constant 0 : index
    %c0_9 = arith.constant 0 : index
    %6 = vector.load %arg4[%c0_8, %c0_9] : memref<128x32xf32, #tpu.memory_space<vmem>>, vector<128x32xf32>
    %c0_10 = arith.constant 0 : index
    %c0_11 = arith.constant 0 : index
    %7 = vector.load %arg5[%c0_10, %c0_11] : memref<512x32xf32, #tpu.memory_space<vmem>>, vector<512x32xf32>
    %cst = arith.constant dense<0.000000e+00> : vector<32x32xf32>
    %8 = tpu.matmul %3, %7, %cst {dimension_numbers = #tpu.dot_dimension_numbers<[1], [0], [0], [1], [0, 0, 1, 1], [], []>} : vector<32x512xf32>, vector<512x32xf32>, vector<32x32xf32> -> vector<32x32xf32>
    %c0_12 = arith.constant 0 : index
    %c0_13 = arith.constant 0 : index
    %9 = vector.load %arg6[%c0_12, %c0_13] : memref<3x32xf32, #tpu.memory_space<vmem>>, vector<1x32xf32>
    %10 = vector.shape_cast %9 : vector<1x32xf32> to vector<32xf32>
    %11 = vector.shape_cast %10 : vector<32xf32> to vector<1x32xf32>
    %12 = vector.broadcast %11 : vector<1x32xf32> to vector<32x32xf32>
    %13 = arith.addf %8, %12 : vector<32x32xf32>
    %14 = arith.mulf %13, %13 : vector<32x32xf32>
    %15 = arith.mulf %13, %14 : vector<32x32xf32>
    %cst_14 = arith.constant 4.471500e-02 : f32
    %16 = vector.broadcast %cst_14 : f32 to vector<32x32xf32>
    %17 = arith.mulf %16, %15 : vector<32x32xf32>
    %18 = arith.addf %13, %17 : vector<32x32xf32>
    %cst_15 = arith.constant 0.797884583 : f32
    %19 = vector.broadcast %cst_15 : f32 to vector<32x32xf32>
    %20 = arith.mulf %19, %18 : vector<32x32xf32>
    %21 = math.tanh %20 : vector<32x32xf32>
    %cst_16 = arith.constant 1.000000e+00 : f32
    %22 = vector.broadcast %cst_16 : f32 to vector<32x32xf32>
    %23 = arith.addf %22, %21 : vector<32x32xf32>
    %cst_17 = arith.constant 5.000000e-01 : f32
    %24 = vector.broadcast %cst_17 : f32 to vector<32x32xf32>
    %25 = arith.mulf %24, %23 : vector<32x32xf32>
    %26 = arith.mulf %13, %25 : vector<32x32xf32>
    %27 = arith.addf %1, %26 : vector<32x32xf32>
    %c1 = arith.constant 1 : index
    %c0_18 = arith.constant 0 : index
    %28 = vector.load %arg6[%c1, %c0_18] : memref<3x32xf32, #tpu.memory_space<vmem>>, vector<1x32xf32>
    %29 = vector.shape_cast %28 : vector<1x32xf32> to vector<32xf32>
    %c2 = arith.constant 2 : index
    %c0_19 = arith.constant 0 : index
    %30 = vector.load %arg6[%c2, %c0_19] : memref<3x32xf32, #tpu.memory_space<vmem>>, vector<1x32xf32>
    %31 = vector.shape_cast %30 : vector<1x32xf32> to vector<32xf32>
    %cst_20 = arith.constant dense<0.000000e+00> : vector<32xf32>
    %32 = vector.multi_reduction <add>, %27, %cst_20 [1] : vector<32x32xf32> to vector<32xf32>
    %33 = vector.shape_cast %32 : vector<32xf32> to vector<32x1xf32>
    %cst_21 = arith.constant 3.200000e+01 : f32
    %34 = vector.broadcast %cst_21 : f32 to vector<32x1xf32>
    %35 = arith.divf %33, %34 : vector<32x1xf32>
    %36 = vector.broadcast %35 : vector<32x1xf32> to vector<32x32xf32>
    %37 = arith.subf %27, %36 : vector<32x32xf32>
    %38 = arith.mulf %37, %37 : vector<32x32xf32>
    %cst_22 = arith.constant dense<0.000000e+00> : vector<32xf32>
    %39 = vector.multi_reduction <add>, %38, %cst_22 [1] : vector<32x32xf32> to vector<32xf32>
    %40 = vector.shape_cast %39 : vector<32xf32> to vector<32x1xf32>
    %cst_23 = arith.constant 3.200000e+01 : f32
    %41 = vector.broadcast %cst_23 : f32 to vector<32x1xf32>
    %42 = arith.divf %40, %41 : vector<32x1xf32>
    %43 = vector.broadcast %35 : vector<32x1xf32> to vector<32x32xf32>
    %44 = arith.subf %27, %43 : vector<32x32xf32>
    %cst_24 = arith.constant 9.99999974E-6 : f32
    %45 = vector.broadcast %cst_24 : f32 to vector<32x1xf32>
    %46 = arith.addf %42, %45 : vector<32x1xf32>
    %47 = math.rsqrt %46 : vector<32x1xf32>
    %48 = vector.broadcast %47 : vector<32x1xf32> to vector<32x32xf32>
    %49 = arith.mulf %44, %48 : vector<32x32xf32>
    %50 = vector.shape_cast %29 : vector<32xf32> to vector<1x32xf32>
    %51 = vector.broadcast %50 : vector<1x32xf32> to vector<32x32xf32>
    %52 = arith.mulf %49, %51 : vector<32x32xf32>
    %53 = vector.shape_cast %31 : vector<32xf32> to vector<1x32xf32>
    %54 = vector.broadcast %53 : vector<1x32xf32> to vector<32x32xf32>
    %55 = arith.addf %52, %54 : vector<32x32xf32>
    %c0_25 = arith.constant 0 : index
    %c0_26 = arith.constant 0 : index
    %c0_27 = arith.constant 0 : index
    %56 = vector.load %arg10[%c0_25, %c0_26, %c0_27] : memref<2x9x32xf32, #tpu.memory_space<vmem>>, vector<1x9x32xf32>
    %57 = vector.shape_cast %56 : vector<1x9x32xf32> to vector<9x32xf32>
    %c0_28 = arith.constant 0 : index
    %c0_29 = arith.constant 0 : index
    %c0_30 = arith.constant 0 : index
    %58 = vector.load %arg7[%c0_28, %c0_29, %c0_30] : memref<8x32x32xf32, #tpu.memory_space<vmem>>, vector<1x32x32xf32>
    %59 = vector.shape_cast %58 : vector<1x32x32xf32> to vector<32x32xf32>
    %cst_31 = arith.constant dense<0.000000e+00> : vector<32x32xf32>
    %60 = tpu.matmul %55, %59, %cst_31 {dimension_numbers = #tpu.dot_dimension_numbers<[1], [0], [0], [1], [0, 0, 1, 1], [], []>} : vector<32x32xf32>, vector<32x32xf32>, vector<32x32xf32> -> vector<32x32xf32>
    %61 = vector.extract_strided_slice %57 {offsets = [0, 0], sizes = [1, 32], strides = [1, 1]} : vector<9x32xf32> to vector<1x32xf32>
    %62 = vector.shape_cast %61 : vector<1x32xf32> to vector<32xf32>
    %63 = vector.shape_cast %62 : vector<32xf32> to vector<1x32xf32>
    %64 = vector.broadcast %63 : vector<1x32xf32> to vector<32x32xf32>
    %65 = arith.addf %60, %64 : vector<32x32xf32>
    %c1_32 = arith.constant 1 : index
    %c0_33 = arith.constant 0 : index
    %c0_34 = arith.constant 0 : index
    %66 = vector.load %arg7[%c1_32, %c0_33, %c0_34] : memref<8x32x32xf32, #tpu.memory_space<vmem>>, vector<1x32x32xf32>
    %67 = vector.shape_cast %66 : vector<1x32x32xf32> to vector<32x32xf32>
    %cst_35 = arith.constant dense<0.000000e+00> : vector<32x32xf32>
    %68 = tpu.matmul %55, %67, %cst_35 {dimension_numbers = #tpu.dot_dimension_numbers<[1], [0], [0], [1], [0, 0, 1, 1], [], []>} : vector<32x32xf32>, vector<32x32xf32>, vector<32x32xf32> -> vector<32x32xf32>
    %69 = vector.extract_strided_slice %57 {offsets = [1, 0], sizes = [1, 32], strides = [1, 1]} : vector<9x32xf32> to vector<1x32xf32>
    %70 = vector.shape_cast %69 : vector<1x32xf32> to vector<32xf32>
    %71 = vector.shape_cast %70 : vector<32xf32> to vector<1x32xf32>
    %72 = vector.broadcast %71 : vector<1x32xf32> to vector<32x32xf32>
    %73 = arith.addf %68, %72 : vector<32x32xf32>
    %c2_36 = arith.constant 2 : index
    %c0_37 = arith.constant 0 : index
    %c0_38 = arith.constant 0 : index
    %74 = vector.load %arg7[%c2_36, %c0_37, %c0_38] : memref<8x32x32xf32, #tpu.memory_space<vmem>>, vector<1x32x32xf32>
    %75 = vector.shape_cast %74 : vector<1x32x32xf32> to vector<32x32xf32>
    %cst_39 = arith.constant dense<0.000000e+00> : vector<32x32xf32>
    %76 = tpu.matmul %55, %75, %cst_39 {dimension_numbers = #tpu.dot_dimension_numbers<[1], [0], [0], [1], [0, 0, 1, 1], [], []>} : vector<32x32xf32>, vector<32x32xf32>, vector<32x32xf32> -> vector<32x32xf32>
    %77 = vector.extract_strided_slice %57 {offsets = [2, 0], sizes = [1, 32], strides = [1, 1]} : vector<9x32xf32> to vector<1x32xf32>
    %78 = vector.shape_cast %77 : vector<1x32xf32> to vector<32xf32>
    %79 = vector.shape_cast %78 : vector<32xf32> to vector<1x32xf32>
    %80 = vector.broadcast %79 : vector<1x32xf32> to vector<32x32xf32>
    %81 = arith.addf %76, %80 : vector<32x32xf32>
    %82 = tpu.concatenate %65, %65, %65, %65 in 0 : vector<32x32xf32>, vector<32x32xf32>, vector<32x32xf32>, vector<32x32xf32> -> vector<128x32xf32>
    %83 = arith.mulf %82, %6 : vector<128x32xf32>
    "tpu.trace_start"() <{level = 10 : i32, message = "qh,kh->qk"}> : () -> ()
    %cst_40 = arith.constant dense<0.000000e+00> : vector<128x32xf32>
    %84 = tpu.matmul %83, %73, %cst_40 {dimension_numbers = #tpu.dot_dimension_numbers<[1], [1], [0], [0], [0, 0, 1, 0], [], []>} : vector<128x32xf32>, vector<32x32xf32>, vector<128x32xf32> -> vector<128x32xf32>
    "tpu.trace_stop"() : () -> ()
    %85 = arith.addf %84, %5 : vector<128x32xf32>
    %cst_41 = arith.constant dense<0xFF800000> : vector<128xf32>
    %86 = vector.multi_reduction <maximumf>, %85, %cst_41 [1] : vector<128x32xf32> to vector<128xf32>
    %87 = vector.shape_cast %86 : vector<128xf32> to vector<128x1xf32>
    %88 = vector.broadcast %87 : vector<128x1xf32> to vector<128x32xf32>
    %89 = arith.subf %85, %88 : vector<128x32xf32>
    %90 = math.exp %89 : vector<128x32xf32>
    %cst_42 = arith.constant dense<0.000000e+00> : vector<128xf32>
    %91 = vector.multi_reduction <add>, %90, %cst_42 [1] : vector<128x32xf32> to vector<128xf32>
    %92 = vector.shape_cast %91 : vector<128xf32> to vector<128x1xf32>
    %93 = tpu.reciprocal %92 {approx = true} : vector<128x1xf32> -> vector<128x1xf32>
    %94 = vector.broadcast %93 : vector<128x1xf32> to vector<128x32xf32>
    %95 = arith.mulf %90, %94 : vector<128x32xf32>
    %cst_43 = arith.constant dense<0.000000e+00> : vector<128x32xf32>
    %96 = tpu.matmul %95, %81, %cst_43 {dimension_numbers = #tpu.dot_dimension_numbers<[1], [0], [0], [1], [0, 0, 1, 1], [], []>} : vector<128x32xf32>, vector<32x32xf32>, vector<128x32xf32> -> vector<128x32xf32>
    %97 = arith.mulf %96, %6 : vector<128x32xf32>
    %98 = vector.extract_strided_slice %97 {offsets = [0, 0], sizes = [32, 32], strides = [1, 1]} : vector<128x32xf32> to vector<32x32xf32>
    %99 = vector.extract_strided_slice %97 {offsets = [32, 0], sizes = [32, 32], strides = [1, 1]} : vector<128x32xf32> to vector<32x32xf32>
    %100 = arith.addf %98, %99 : vector<32x32xf32>
    %101 = vector.extract_strided_slice %97 {offsets = [64, 0], sizes = [32, 32], strides = [1, 1]} : vector<128x32xf32> to vector<32x32xf32>
    %102 = arith.addf %100, %101 : vector<32x32xf32>
    %103 = vector.extract_strided_slice %97 {offsets = [96, 0], sizes = [32, 32], strides = [1, 1]} : vector<128x32xf32> to vector<32x32xf32>
    %104 = arith.addf %102, %103 : vector<32x32xf32>
    %c3 = arith.constant 3 : index
    %c0_44 = arith.constant 0 : index
    %c0_45 = arith.constant 0 : index
    %105 = vector.load %arg7[%c3, %c0_44, %c0_45] : memref<8x32x32xf32, #tpu.memory_space<vmem>>, vector<1x32x32xf32>
    %106 = vector.shape_cast %105 : vector<1x32x32xf32> to vector<32x32xf32>
    %cst_46 = arith.constant dense<0.000000e+00> : vector<32x32xf32>
    %107 = tpu.matmul %104, %106, %cst_46 {dimension_numbers = #tpu.dot_dimension_numbers<[1], [0], [0], [1], [0, 0, 1, 1], [], []>} : vector<32x32xf32>, vector<32x32xf32>, vector<32x32xf32> -> vector<32x32xf32>
    %108 = vector.extract_strided_slice %57 {offsets = [3, 0], sizes = [1, 32], strides = [1, 1]} : vector<9x32xf32> to vector<1x32xf32>
    %109 = vector.shape_cast %108 : vector<1x32xf32> to vector<32xf32>
    %110 = vector.shape_cast %109 : vector<32xf32> to vector<1x32xf32>
    %111 = vector.broadcast %110 : vector<1x32xf32> to vector<32x32xf32>
    %112 = arith.addf %107, %111 : vector<32x32xf32>
    %113 = arith.addf %55, %112 : vector<32x32xf32>
    %114 = vector.extract_strided_slice %57 {offsets = [4, 0], sizes = [1, 32], strides = [1, 1]} : vector<9x32xf32> to vector<1x32xf32>
    %115 = vector.shape_cast %114 : vector<1x32xf32> to vector<32xf32>
    %116 = vector.extract_strided_slice %57 {offsets = [5, 0], sizes = [1, 32], strides = [1, 1]} : vector<9x32xf32> to vector<1x32xf32>
    %117 = vector.shape_cast %116 : vector<1x32xf32> to vector<32xf32>
    %cst_47 = arith.constant dense<0.000000e+00> : vector<32xf32>
    %118 = vector.multi_reduction <add>, %113, %cst_47 [1] : vector<32x32xf32> to vector<32xf32>
    %119 = vector.shape_cast %118 : vector<32xf32> to vector<32x1xf32>
    %cst_48 = arith.constant 3.200000e+01 : f32
    %120 = vector.broadcast %cst_48 : f32 to vector<32x1xf32>
    %121 = arith.divf %119, %120 : vector<32x1xf32>
    %122 = vector.broadcast %121 : vector<32x1xf32> to vector<32x32xf32>
    %123 = arith.subf %113, %122 : vector<32x32xf32>
    %124 = arith.mulf %123, %123 : vector<32x32xf32>
    %cst_49 = arith.constant dense<0.000000e+00> : vector<32xf32>
    %125 = vector.multi_reduction <add>, %124, %cst_49 [1] : vector<32x32xf32> to vector<32xf32>
    %126 = vector.shape_cast %125 : vector<32xf32> to vector<32x1xf32>
    %cst_50 = arith.constant 3.200000e+01 : f32
    %127 = vector.broadcast %cst_50 : f32 to vector<32x1xf32>
    %128 = arith.divf %126, %127 : vector<32x1xf32>
    %129 = vector.broadcast %121 : vector<32x1xf32> to vector<32x32xf32>
    %130 = arith.subf %113, %129 : vector<32x32xf32>
    %cst_51 = arith.constant 9.99999974E-6 : f32
    %131 = vector.broadcast %cst_51 : f32 to vector<32x1xf32>
    %132 = arith.addf %128, %131 : vector<32x1xf32>
    %133 = math.rsqrt %132 : vector<32x1xf32>
    %134 = vector.broadcast %133 : vector<32x1xf32> to vector<32x32xf32>
    %135 = arith.mulf %130, %134 : vector<32x32xf32>
    %136 = vector.shape_cast %115 : vector<32xf32> to vector<1x32xf32>
    %137 = vector.broadcast %136 : vector<1x32xf32> to vector<32x32xf32>
    %138 = arith.mulf %135, %137 : vector<32x32xf32>
    %139 = vector.shape_cast %117 : vector<32xf32> to vector<1x32xf32>
    %140 = vector.broadcast %139 : vector<1x32xf32> to vector<32x32xf32>
    %141 = arith.addf %138, %140 : vector<32x32xf32>
    %c0_52 = arith.constant 0 : index
    %c0_53 = arith.constant 0 : index
    %c0_54 = arith.constant 0 : index
    %142 = vector.load %arg8[%c0_52, %c0_53, %c0_54] : memref<2x32x64xf32, #tpu.memory_space<vmem>>, vector<1x32x64xf32>
    %143 = vector.shape_cast %142 : vector<1x32x64xf32> to vector<32x64xf32>
    %cst_55 = arith.constant dense<0.000000e+00> : vector<32x64xf32>
    %144 = tpu.matmul %141, %143, %cst_55 {dimension_numbers = #tpu.dot_dimension_numbers<[1], [0], [0], [1], [0, 0, 1, 1], [], []>} : vector<32x32xf32>, vector<32x64xf32>, vector<32x64xf32> -> vector<32x64xf32>
    %c0_56 = arith.constant 0 : index
    %c0_57 = arith.constant 0 : index
    %145 = vector.load %arg11[%c0_56, %c0_57] : memref<2x64xf32, #tpu.memory_space<vmem>>, vector<1x64xf32>
    %146 = vector.shape_cast %145 : vector<1x64xf32> to vector<64xf32>
    %147 = vector.shape_cast %146 : vector<64xf32> to vector<1x64xf32>
    %148 = vector.broadcast %147 : vector<1x64xf32> to vector<32x64xf32>
    %149 = arith.addf %144, %148 : vector<32x64xf32>
    %150 = arith.mulf %149, %149 : vector<32x64xf32>
    %151 = arith.mulf %149, %150 : vector<32x64xf32>
    %cst_58 = arith.constant 4.471500e-02 : f32
    %152 = vector.broadcast %cst_58 : f32 to vector<32x64xf32>
    %153 = arith.mulf %152, %151 : vector<32x64xf32>
    %154 = arith.addf %149, %153 : vector<32x64xf32>
    %cst_59 = arith.constant 0.797884583 : f32
    %155 = vector.broadcast %cst_59 : f32 to vector<32x64xf32>
    %156 = arith.mulf %155, %154 : vector<32x64xf32>
    %157 = math.tanh %156 : vector<32x64xf32>
    %cst_60 = arith.constant 1.000000e+00 : f32
    %158 = vector.broadcast %cst_60 : f32 to vector<32x64xf32>
    %159 = arith.addf %158, %157 : vector<32x64xf32>
    %cst_61 = arith.constant 5.000000e-01 : f32
    %160 = vector.broadcast %cst_61 : f32 to vector<32x64xf32>
    %161 = arith.mulf %160, %159 : vector<32x64xf32>
    %162 = arith.mulf %149, %161 : vector<32x64xf32>
    %c0_62 = arith.constant 0 : index
    %c0_63 = arith.constant 0 : index
    %c0_64 = arith.constant 0 : index
    %163 = vector.load %arg9[%c0_62, %c0_63, %c0_64] : memref<2x64x32xf32, #tpu.memory_space<vmem>>, vector<1x64x32xf32>
    %164 = vector.shape_cast %163 : vector<1x64x32xf32> to vector<64x32xf32>
    %cst_65 = arith.constant dense<0.000000e+00> : vector<32x32xf32>
    %165 = tpu.matmul %162, %164, %cst_65 {dimension_numbers = #tpu.dot_dimension_numbers<[1], [0], [0], [1], [0, 0, 1, 1], [], []>} : vector<32x64xf32>, vector<64x32xf32>, vector<32x32xf32> -> vector<32x32xf32>
    %166 = vector.extract_strided_slice %57 {offsets = [6, 0], sizes = [1, 32], strides = [1, 1]} : vector<9x32xf32> to vector<1x32xf32>
    %167 = vector.shape_cast %166 : vector<1x32xf32> to vector<32xf32>
    %168 = vector.shape_cast %167 : vector<32xf32> to vector<1x32xf32>
    %169 = vector.broadcast %168 : vector<1x32xf32> to vector<32x32xf32>
    %170 = arith.addf %165, %169 : vector<32x32xf32>
    %171 = arith.addf %141, %170 : vector<32x32xf32>
    %172 = vector.extract_strided_slice %57 {offsets = [7, 0], sizes = [1, 32], strides = [1, 1]} : vector<9x32xf32> to vector<1x32xf32>
    %173 = vector.shape_cast %172 : vector<1x32xf32> to vector<32xf32>
    %174 = vector.extract_strided_slice %57 {offsets = [8, 0], sizes = [1, 32], strides = [1, 1]} : vector<9x32xf32> to vector<1x32xf32>
    %175 = vector.shape_cast %174 : vector<1x32xf32> to vector<32xf32>
    %cst_66 = arith.constant dense<0.000000e+00> : vector<32xf32>
    %176 = vector.multi_reduction <add>, %171, %cst_66 [1] : vector<32x32xf32> to vector<32xf32>
    %177 = vector.shape_cast %176 : vector<32xf32> to vector<32x1xf32>
    %cst_67 = arith.constant 3.200000e+01 : f32
    %178 = vector.broadcast %cst_67 : f32 to vector<32x1xf32>
    %179 = arith.divf %177, %178 : vector<32x1xf32>
    %180 = vector.broadcast %179 : vector<32x1xf32> to vector<32x32xf32>
    %181 = arith.subf %171, %180 : vector<32x32xf32>
    %182 = arith.mulf %181, %181 : vector<32x32xf32>
    %cst_68 = arith.constant dense<0.000000e+00> : vector<32xf32>
    %183 = vector.multi_reduction <add>, %182, %cst_68 [1] : vector<32x32xf32> to vector<32xf32>
    %184 = vector.shape_cast %183 : vector<32xf32> to vector<32x1xf32>
    %cst_69 = arith.constant 3.200000e+01 : f32
    %185 = vector.broadcast %cst_69 : f32 to vector<32x1xf32>
    %186 = arith.divf %184, %185 : vector<32x1xf32>
    %187 = vector.broadcast %179 : vector<32x1xf32> to vector<32x32xf32>
    %188 = arith.subf %171, %187 : vector<32x32xf32>
    %cst_70 = arith.constant 9.99999974E-6 : f32
    %189 = vector.broadcast %cst_70 : f32 to vector<32x1xf32>
    %190 = arith.addf %186, %189 : vector<32x1xf32>
    %191 = math.rsqrt %190 : vector<32x1xf32>
    %192 = vector.broadcast %191 : vector<32x1xf32> to vector<32x32xf32>
    %193 = arith.mulf %188, %192 : vector<32x32xf32>
    %194 = vector.shape_cast %173 : vector<32xf32> to vector<1x32xf32>
    %195 = vector.broadcast %194 : vector<1x32xf32> to vector<32x32xf32>
    %196 = arith.mulf %193, %195 : vector<32x32xf32>
    %197 = vector.shape_cast %175 : vector<32xf32> to vector<1x32xf32>
    %198 = vector.broadcast %197 : vector<1x32xf32> to vector<32x32xf32>
    %199 = arith.addf %196, %198 : vector<32x32xf32>
    %c1_71 = arith.constant 1 : index
    %c0_72 = arith.constant 0 : index
    %c0_73 = arith.constant 0 : index
    %200 = vector.load %arg10[%c1_71, %c0_72, %c0_73] : memref<2x9x32xf32, #tpu.memory_space<vmem>>, vector<1x9x32xf32>
    %201 = vector.shape_cast %200 : vector<1x9x32xf32> to vector<9x32xf32>
    %c4 = arith.constant 4 : index
    %c0_74 = arith.constant 0 : index
    %c0_75 = arith.constant 0 : index
    %202 = vector.load %arg7[%c4, %c0_74, %c0_75] : memref<8x32x32xf32, #tpu.memory_space<vmem>>, vector<1x32x32xf32>
    %203 = vector.shape_cast %202 : vector<1x32x32xf32> to vector<32x32xf32>
    %cst_76 = arith.constant dense<0.000000e+00> : vector<32x32xf32>
    %204 = tpu.matmul %199, %203, %cst_76 {dimension_numbers = #tpu.dot_dimension_numbers<[1], [0], [0], [1], [0, 0, 1, 1], [], []>} : vector<32x32xf32>, vector<32x32xf32>, vector<32x32xf32> -> vector<32x32xf32>
    %205 = vector.extract_strided_slice %201 {offsets = [0, 0], sizes = [1, 32], strides = [1, 1]} : vector<9x32xf32> to vector<1x32xf32>
    %206 = vector.shape_cast %205 : vector<1x32xf32> to vector<32xf32>
    %207 = vector.shape_cast %206 : vector<32xf32> to vector<1x32xf32>
    %208 = vector.broadcast %207 : vector<1x32xf32> to vector<32x32xf32>
    %209 = arith.addf %204, %208 : vector<32x32xf32>
    %c5 = arith.constant 5 : index
    %c0_77 = arith.constant 0 : index
    %c0_78 = arith.constant 0 : index
    %210 = vector.load %arg7[%c5, %c0_77, %c0_78] : memref<8x32x32xf32, #tpu.memory_space<vmem>>, vector<1x32x32xf32>
    %211 = vector.shape_cast %210 : vector<1x32x32xf32> to vector<32x32xf32>
    %cst_79 = arith.constant dense<0.000000e+00> : vector<32x32xf32>
    %212 = tpu.matmul %199, %211, %cst_79 {dimension_numbers = #tpu.dot_dimension_numbers<[1], [0], [0], [1], [0, 0, 1, 1], [], []>} : vector<32x32xf32>, vector<32x32xf32>, vector<32x32xf32> -> vector<32x32xf32>
    %213 = vector.extract_strided_slice %201 {offsets = [1, 0], sizes = [1, 32], strides = [1, 1]} : vector<9x32xf32> to vector<1x32xf32>
    %214 = vector.shape_cast %213 : vector<1x32xf32> to vector<32xf32>
    %215 = vector.shape_cast %214 : vector<32xf32> to vector<1x32xf32>
    %216 = vector.broadcast %215 : vector<1x32xf32> to vector<32x32xf32>
    %217 = arith.addf %212, %216 : vector<32x32xf32>
    %c6 = arith.constant 6 : index
    %c0_80 = arith.constant 0 : index
    %c0_81 = arith.constant 0 : index
    %218 = vector.load %arg7[%c6, %c0_80, %c0_81] : memref<8x32x32xf32, #tpu.memory_space<vmem>>, vector<1x32x32xf32>
    %219 = vector.shape_cast %218 : vector<1x32x32xf32> to vector<32x32xf32>
    %cst_82 = arith.constant dense<0.000000e+00> : vector<32x32xf32>
    %220 = tpu.matmul %199, %219, %cst_82 {dimension_numbers = #tpu.dot_dimension_numbers<[1], [0], [0], [1], [0, 0, 1, 1], [], []>} : vector<32x32xf32>, vector<32x32xf32>, vector<32x32xf32> -> vector<32x32xf32>
    %221 = vector.extract_strided_slice %201 {offsets = [2, 0], sizes = [1, 32], strides = [1, 1]} : vector<9x32xf32> to vector<1x32xf32>
    %222 = vector.shape_cast %221 : vector<1x32xf32> to vector<32xf32>
    %223 = vector.shape_cast %222 : vector<32xf32> to vector<1x32xf32>
    %224 = vector.broadcast %223 : vector<1x32xf32> to vector<32x32xf32>
    %225 = arith.addf %220, %224 : vector<32x32xf32>
    %226 = tpu.concatenate %209, %209, %209, %209 in 0 : vector<32x32xf32>, vector<32x32xf32>, vector<32x32xf32>, vector<32x32xf32> -> vector<128x32xf32>
    %227 = arith.mulf %226, %6 : vector<128x32xf32>
    "tpu.trace_start"() <{level = 10 : i32, message = "qh,kh->qk"}> : () -> ()
    %cst_83 = arith.constant dense<0.000000e+00> : vector<128x32xf32>
    %228 = tpu.matmul %227, %217, %cst_83 {dimension_numbers = #tpu.dot_dimension_numbers<[1], [1], [0], [0], [0, 0, 1, 0], [], []>} : vector<128x32xf32>, vector<32x32xf32>, vector<128x32xf32> -> vector<128x32xf32>
    "tpu.trace_stop"() : () -> ()
    %229 = arith.addf %228, %5 : vector<128x32xf32>
    %cst_84 = arith.constant dense<0xFF800000> : vector<128xf32>
    %230 = vector.multi_reduction <maximumf>, %229, %cst_84 [1] : vector<128x32xf32> to vector<128xf32>
    %231 = vector.shape_cast %230 : vector<128xf32> to vector<128x1xf32>
    %232 = vector.broadcast %231 : vector<128x1xf32> to vector<128x32xf32>
    %233 = arith.subf %229, %232 : vector<128x32xf32>
    %234 = math.exp %233 : vector<128x32xf32>
    %cst_85 = arith.constant dense<0.000000e+00> : vector<128xf32>
    %235 = vector.multi_reduction <add>, %234, %cst_85 [1] : vector<128x32xf32> to vector<128xf32>
    %236 = vector.shape_cast %235 : vector<128xf32> to vector<128x1xf32>
    %237 = tpu.reciprocal %236 {approx = true} : vector<128x1xf32> -> vector<128x1xf32>
    %238 = vector.broadcast %237 : vector<128x1xf32> to vector<128x32xf32>
    %239 = arith.mulf %234, %238 : vector<128x32xf32>
    %cst_86 = arith.constant dense<0.000000e+00> : vector<128x32xf32>
    %240 = tpu.matmul %239, %225, %cst_86 {dimension_numbers = #tpu.dot_dimension_numbers<[1], [0], [0], [1], [0, 0, 1, 1], [], []>} : vector<128x32xf32>, vector<32x32xf32>, vector<128x32xf32> -> vector<128x32xf32>
    %241 = arith.mulf %240, %6 : vector<128x32xf32>
    %242 = vector.extract_strided_slice %241 {offsets = [0, 0], sizes = [32, 32], strides = [1, 1]} : vector<128x32xf32> to vector<32x32xf32>
    %243 = vector.extract_strided_slice %241 {offsets = [32, 0], sizes = [32, 32], strides = [1, 1]} : vector<128x32xf32> to vector<32x32xf32>
    %244 = arith.addf %242, %243 : vector<32x32xf32>
    %245 = vector.extract_strided_slice %241 {offsets = [64, 0], sizes = [32, 32], strides = [1, 1]} : vector<128x32xf32> to vector<32x32xf32>
    %246 = arith.addf %244, %245 : vector<32x32xf32>
    %247 = vector.extract_strided_slice %241 {offsets = [96, 0], sizes = [32, 32], strides = [1, 1]} : vector<128x32xf32> to vector<32x32xf32>
    %248 = arith.addf %246, %247 : vector<32x32xf32>
    %c7 = arith.constant 7 : index
    %c0_87 = arith.constant 0 : index
    %c0_88 = arith.constant 0 : index
    %249 = vector.load %arg7[%c7, %c0_87, %c0_88] : memref<8x32x32xf32, #tpu.memory_space<vmem>>, vector<1x32x32xf32>
    %250 = vector.shape_cast %249 : vector<1x32x32xf32> to vector<32x32xf32>
    %cst_89 = arith.constant dense<0.000000e+00> : vector<32x32xf32>
    %251 = tpu.matmul %248, %250, %cst_89 {dimension_numbers = #tpu.dot_dimension_numbers<[1], [0], [0], [1], [0, 0, 1, 1], [], []>} : vector<32x32xf32>, vector<32x32xf32>, vector<32x32xf32> -> vector<32x32xf32>
    %252 = vector.extract_strided_slice %201 {offsets = [3, 0], sizes = [1, 32], strides = [1, 1]} : vector<9x32xf32> to vector<1x32xf32>
    %253 = vector.shape_cast %252 : vector<1x32xf32> to vector<32xf32>
    %254 = vector.shape_cast %253 : vector<32xf32> to vector<1x32xf32>
    %255 = vector.broadcast %254 : vector<1x32xf32> to vector<32x32xf32>
    %256 = arith.addf %251, %255 : vector<32x32xf32>
    %257 = arith.addf %199, %256 : vector<32x32xf32>
    %258 = vector.extract_strided_slice %201 {offsets = [4, 0], sizes = [1, 32], strides = [1, 1]} : vector<9x32xf32> to vector<1x32xf32>
    %259 = vector.shape_cast %258 : vector<1x32xf32> to vector<32xf32>
    %260 = vector.extract_strided_slice %201 {offsets = [5, 0], sizes = [1, 32], strides = [1, 1]} : vector<9x32xf32> to vector<1x32xf32>
    %261 = vector.shape_cast %260 : vector<1x32xf32> to vector<32xf32>
    %cst_90 = arith.constant dense<0.000000e+00> : vector<32xf32>
    %262 = vector.multi_reduction <add>, %257, %cst_90 [1] : vector<32x32xf32> to vector<32xf32>
    %263 = vector.shape_cast %262 : vector<32xf32> to vector<32x1xf32>
    %cst_91 = arith.constant 3.200000e+01 : f32
    %264 = vector.broadcast %cst_91 : f32 to vector<32x1xf32>
    %265 = arith.divf %263, %264 : vector<32x1xf32>
    %266 = vector.broadcast %265 : vector<32x1xf32> to vector<32x32xf32>
    %267 = arith.subf %257, %266 : vector<32x32xf32>
    %268 = arith.mulf %267, %267 : vector<32x32xf32>
    %cst_92 = arith.constant dense<0.000000e+00> : vector<32xf32>
    %269 = vector.multi_reduction <add>, %268, %cst_92 [1] : vector<32x32xf32> to vector<32xf32>
    %270 = vector.shape_cast %269 : vector<32xf32> to vector<32x1xf32>
    %cst_93 = arith.constant 3.200000e+01 : f32
    %271 = vector.broadcast %cst_93 : f32 to vector<32x1xf32>
    %272 = arith.divf %270, %271 : vector<32x1xf32>
    %273 = vector.broadcast %265 : vector<32x1xf32> to vector<32x32xf32>
    %274 = arith.subf %257, %273 : vector<32x32xf32>
    %cst_94 = arith.constant 9.99999974E-6 : f32
    %275 = vector.broadcast %cst_94 : f32 to vector<32x1xf32>
    %276 = arith.addf %272, %275 : vector<32x1xf32>
    %277 = math.rsqrt %276 : vector<32x1xf32>
    %278 = vector.broadcast %277 : vector<32x1xf32> to vector<32x32xf32>
    %279 = arith.mulf %274, %278 : vector<32x32xf32>
    %280 = vector.shape_cast %259 : vector<32xf32> to vector<1x32xf32>
    %281 = vector.broadcast %280 : vector<1x32xf32> to vector<32x32xf32>
    %282 = arith.mulf %279, %281 : vector<32x32xf32>
    %283 = vector.shape_cast %261 : vector<32xf32> to vector<1x32xf32>
    %284 = vector.broadcast %283 : vector<1x32xf32> to vector<32x32xf32>
    %285 = arith.addf %282, %284 : vector<32x32xf32>
    %c1_95 = arith.constant 1 : index
    %c0_96 = arith.constant 0 : index
    %c0_97 = arith.constant 0 : index
    %286 = vector.load %arg8[%c1_95, %c0_96, %c0_97] : memref<2x32x64xf32, #tpu.memory_space<vmem>>, vector<1x32x64xf32>
    %287 = vector.shape_cast %286 : vector<1x32x64xf32> to vector<32x64xf32>
    %cst_98 = arith.constant dense<0.000000e+00> : vector<32x64xf32>
    %288 = tpu.matmul %285, %287, %cst_98 {dimension_numbers = #tpu.dot_dimension_numbers<[1], [0], [0], [1], [0, 0, 1, 1], [], []>} : vector<32x32xf32>, vector<32x64xf32>, vector<32x64xf32> -> vector<32x64xf32>
    %c1_99 = arith.constant 1 : index
    %c0_100 = arith.constant 0 : index
    %289 = vector.load %arg11[%c1_99, %c0_100] : memref<2x64xf32, #tpu.memory_space<vmem>>, vector<1x64xf32>
    %290 = vector.shape_cast %289 : vector<1x64xf32> to vector<64xf32>
    %291 = vector.shape_cast %290 : vector<64xf32> to vector<1x64xf32>
    %292 = vector.broadcast %291 : vector<1x64xf32> to vector<32x64xf32>
    %293 = arith.addf %288, %292 : vector<32x64xf32>
    %294 = arith.mulf %293, %293 : vector<32x64xf32>
    %295 = arith.mulf %293, %294 : vector<32x64xf32>
    %cst_101 = arith.constant 4.471500e-02 : f32
    %296 = vector.broadcast %cst_101 : f32 to vector<32x64xf32>
    %297 = arith.mulf %296, %295 : vector<32x64xf32>
    %298 = arith.addf %293, %297 : vector<32x64xf32>
    %cst_102 = arith.constant 0.797884583 : f32
    %299 = vector.broadcast %cst_102 : f32 to vector<32x64xf32>
    %300 = arith.mulf %299, %298 : vector<32x64xf32>
    %301 = math.tanh %300 : vector<32x64xf32>
    %cst_103 = arith.constant 1.000000e+00 : f32
    %302 = vector.broadcast %cst_103 : f32 to vector<32x64xf32>
    %303 = arith.addf %302, %301 : vector<32x64xf32>
    %cst_104 = arith.constant 5.000000e-01 : f32
    %304 = vector.broadcast %cst_104 : f32 to vector<32x64xf32>
    %305 = arith.mulf %304, %303 : vector<32x64xf32>
    %306 = arith.mulf %293, %305 : vector<32x64xf32>
    %c1_105 = arith.constant 1 : index
    %c0_106 = arith.constant 0 : index
    %c0_107 = arith.constant 0 : index
    %307 = vector.load %arg9[%c1_105, %c0_106, %c0_107] : memref<2x64x32xf32, #tpu.memory_space<vmem>>, vector<1x64x32xf32>
    %308 = vector.shape_cast %307 : vector<1x64x32xf32> to vector<64x32xf32>
    %cst_108 = arith.constant dense<0.000000e+00> : vector<32x32xf32>
    %309 = tpu.matmul %306, %308, %cst_108 {dimension_numbers = #tpu.dot_dimension_numbers<[1], [0], [0], [1], [0, 0, 1, 1], [], []>} : vector<32x64xf32>, vector<64x32xf32>, vector<32x32xf32> -> vector<32x32xf32>
    %310 = vector.extract_strided_slice %201 {offsets = [6, 0], sizes = [1, 32], strides = [1, 1]} : vector<9x32xf32> to vector<1x32xf32>
    %311 = vector.shape_cast %310 : vector<1x32xf32> to vector<32xf32>
    %312 = vector.shape_cast %311 : vector<32xf32> to vector<1x32xf32>
    %313 = vector.broadcast %312 : vector<1x32xf32> to vector<32x32xf32>
    %314 = arith.addf %309, %313 : vector<32x32xf32>
    %315 = arith.addf %285, %314 : vector<32x32xf32>
    %316 = vector.extract_strided_slice %201 {offsets = [7, 0], sizes = [1, 32], strides = [1, 1]} : vector<9x32xf32> to vector<1x32xf32>
    %317 = vector.shape_cast %316 : vector<1x32xf32> to vector<32xf32>
    %318 = vector.extract_strided_slice %201 {offsets = [8, 0], sizes = [1, 32], strides = [1, 1]} : vector<9x32xf32> to vector<1x32xf32>
    %319 = vector.shape_cast %318 : vector<1x32xf32> to vector<32xf32>
    %cst_109 = arith.constant dense<0.000000e+00> : vector<32xf32>
    %320 = vector.multi_reduction <add>, %315, %cst_109 [1] : vector<32x32xf32> to vector<32xf32>
    %321 = vector.shape_cast %320 : vector<32xf32> to vector<32x1xf32>
    %cst_110 = arith.constant 3.200000e+01 : f32
    %322 = vector.broadcast %cst_110 : f32 to vector<32x1xf32>
    %323 = arith.divf %321, %322 : vector<32x1xf32>
    %324 = vector.broadcast %323 : vector<32x1xf32> to vector<32x32xf32>
    %325 = arith.subf %315, %324 : vector<32x32xf32>
    %326 = arith.mulf %325, %325 : vector<32x32xf32>
    %cst_111 = arith.constant dense<0.000000e+00> : vector<32xf32>
    %327 = vector.multi_reduction <add>, %326, %cst_111 [1] : vector<32x32xf32> to vector<32xf32>
    %328 = vector.shape_cast %327 : vector<32xf32> to vector<32x1xf32>
    %cst_112 = arith.constant 3.200000e+01 : f32
    %329 = vector.broadcast %cst_112 : f32 to vector<32x1xf32>
    %330 = arith.divf %328, %329 : vector<32x1xf32>
    %331 = vector.broadcast %323 : vector<32x1xf32> to vector<32x32xf32>
    %332 = arith.subf %315, %331 : vector<32x32xf32>
    %cst_113 = arith.constant 9.99999974E-6 : f32
    %333 = vector.broadcast %cst_113 : f32 to vector<32x1xf32>
    %334 = arith.addf %330, %333 : vector<32x1xf32>
    %335 = math.rsqrt %334 : vector<32x1xf32>
    %336 = vector.broadcast %335 : vector<32x1xf32> to vector<32x32xf32>
    %337 = arith.mulf %332, %336 : vector<32x32xf32>
    %338 = vector.shape_cast %317 : vector<32xf32> to vector<1x32xf32>
    %339 = vector.broadcast %338 : vector<1x32xf32> to vector<32x32xf32>
    %340 = arith.mulf %337, %339 : vector<32x32xf32>
    %341 = vector.shape_cast %319 : vector<32xf32> to vector<1x32xf32>
    %342 = vector.broadcast %341 : vector<1x32xf32> to vector<32x32xf32>
    %343 = arith.addf %340, %342 : vector<32x32xf32>
    %344 = vector.shape_cast %343 : vector<32x32xf32> to vector<2x16x32xf32>
    %c0_114 = arith.constant 0 : index
    %c0_115 = arith.constant 0 : index
    %c0_116 = arith.constant 0 : index
    %345 = vector.load %arg12[%c0_114, %c0_115, %c0_116] : memref<2x16x32xf32, #tpu.memory_space<vmem>>, vector<2x16x32xf32>
    tpu.vector_store %arg12[%c0_114, %c0_115, %c0_116], %344 {strides = array<i32>} : memref<2x16x32xf32, #tpu.memory_space<vmem>>, vector<2x16x32xf32>,
    return
  }
  func.func @transform_0(%arg0: i32) -> (i32, i32, i32) {
    %c0_i32 = arith.constant 0 : i32
    %c0_i32_0 = arith.constant 0 : i32
    %c0_i32_1 = arith.constant 0 : i32
    return %arg0, %c0_i32, %c0_i32_0 : i32, i32, i32
  }
  func.func @transform_1(%arg0: i32) -> (i32, i32, i32) {
    %c0_i32 = arith.constant 0 : i32
    %c0_i32_0 = arith.constant 0 : i32
    %c0_i32_1 = arith.constant 0 : i32
    return %arg0, %c0_i32, %c0_i32_0 : i32, i32, i32
  }
  func.func @transform_2(%arg0: i32) -> (i32, i32, i32) {
    %c0_i32 = arith.constant 0 : i32
    %c0_i32_0 = arith.constant 0 : i32
    %c0_i32_1 = arith.constant 0 : i32
    return %arg0, %c0_i32, %c0_i32_0 : i32, i32, i32
  }
  func.func @transform_3(%arg0: i32) -> (i32, i32) {
    %c0_i32 = arith.constant 0 : i32
    %c0_i32_0 = arith.constant 0 : i32
    %c0_i32_1 = arith.constant 0 : i32
    return %c0_i32, %c0_i32_0 : i32, i32
  }
  func.func @transform_4(%arg0: i32) -> (i32, i32) {
    %c0_i32 = arith.constant 0 : i32
    %c0_i32_0 = arith.constant 0 : i32
    %c0_i32_1 = arith.constant 0 : i32
    return %c0_i32, %c0_i32_0 : i32, i32
  }
  func.func @transform_5(%arg0: i32) -> (i32, i32) {
    %c0_i32 = arith.constant 0 : i32
    %c0_i32_0 = arith.constant 0 : i32
    %c0_i32_1 = arith.constant 0 : i32
    return %c0_i32, %c0_i32_0 : i32, i32
  }
  func.func @transform_6(%arg0: i32) -> (i32, i32, i32) {
    %c0_i32 = arith.constant 0 : i32
    %c0_i32_0 = arith.constant 0 : i32
    %c0_i32_1 = arith.constant 0 : i32
    %c0_i32_2 = arith.constant 0 : i32
    return %c0_i32, %c0_i32_0, %c0_i32_1 : i32, i32, i32
  }
  func.func @transform_7(%arg0: i32) -> (i32, i32, i32) {
    %c0_i32 = arith.constant 0 : i32
    %c0_i32_0 = arith.constant 0 : i32
    %c0_i32_1 = arith.constant 0 : i32
    %c0_i32_2 = arith.constant 0 : i32
    return %c0_i32, %c0_i32_0, %c0_i32_1 : i32, i32, i32
  }
  func.func @transform_8(%arg0: i32) -> (i32, i32, i32) {
    %c0_i32 = arith.constant 0 : i32
    %c0_i32_0 = arith.constant 0 : i32
    %c0_i32_1 = arith.constant 0 : i32
    %c0_i32_2 = arith.constant 0 : i32
    return %c0_i32, %c0_i32_0, %c0_i32_1 : i32, i32, i32
  }
  func.func @transform_9(%arg0: i32) -> (i32, i32, i32) {
    %c0_i32 = arith.constant 0 : i32
    %c0_i32_0 = arith.constant 0 : i32
    %c0_i32_1 = arith.constant 0 : i32
    %c0_i32_2 = arith.constant 0 : i32
    return %c0_i32, %c0_i32_0, %c0_i32_1 : i32, i32, i32
  }
  func.func @transform_10(%arg0: i32) -> (i32, i32) {
    %c0_i32 = arith.constant 0 : i32
    %c0_i32_0 = arith.constant 0 : i32
    %c0_i32_1 = arith.constant 0 : i32
    return %c0_i32, %c0_i32_0 : i32, i32
  }
  func.func @transform_11(%arg0: i32) -> (i32, i32, i32) {
    %c0_i32 = arith.constant 0 : i32
    %c0_i32_0 = arith.constant 0 : i32
    %c0_i32_1 = arith.constant 0 : i32
    return %arg0, %c0_i32, %c0_i32_0 : i32, i32, i32
  }
}

</mosaic_0001>

<llo_original>
// kernel: tpu_custom_call.1
$region0: #{tpu_custom_call.1}
  #allocation0 [shape = 'u32[]', space=smem, size = 0x4, offset = 0x4, fixed_abs, tag = 'smem constant byte address 0x4 - core index']
  #allocation1 [shape = 'u32[144,128]{1,0:T(1,128)}', space=vmem, size = 0x12000, scoped, tag = 'internal scratch']
  %s0 = inlined_call_operand.vmem [shape: f32[2,16,32], index: 0, kind: input, shape index: {}]
  %s1 = inlined_call_operand.vmem [shape: f32[2,16,512], index: 1, kind: input, shape index: {}]
  %s2 = inlined_call_operand.vmem [shape: f32[1,128,32], index: 2, kind: input, shape index: {}]
  %s3 = inlined_call_operand.vmem [shape: f32[128,32], index: 3, kind: input, shape index: {}]
  %s4 = inlined_call_operand.vmem [shape: f32[512,32], index: 4, kind: input, shape index: {}]
  %s5 = inlined_call_operand.vmem [shape: f32[3,32], index: 5, kind: input, shape index: {}]
  %s6 = inlined_call_operand.vmem [shape: f32[8,32,32], index: 6, kind: input, shape index: {}]
  %s7 = inlined_call_operand.vmem [shape: f32[2,32,64], index: 7, kind: input, shape index: {}]
  %s8 = inlined_call_operand.vmem [shape: f32[2,64,32], index: 8, kind: input, shape index: {}]
  %s9 = inlined_call_operand.vmem [shape: f32[2,9,32], index: 9, kind: input, shape index: {}]
  %s10 = inlined_call_operand.vmem [shape: f32[2,64], index: 10, kind: input, shape index: {}]
  %s11 = inlined_call_operand.hbm [shape: f32[2,16,32], index: 11, kind: output, shape index: {}]
  %s12 = sld [smem:[#allocation0]]
  $region54: #{tpu_custom_call.1} parent=0
    _
  %s14 = ssub.s32 1, %s12
  %s15 = scalar_select 0, %s14, %s12
  $region1: #{tpu_custom_call.1} parent=0
    #allocation2 [shape = 'u8[16384]{0}', space=vmem, size = 0x4000, scoped, tag = 'output window, operand 0, single buffered']
    #allocation3 [shape = 's32[1]{0}', space=sflag, size = 0x4, scoped, tag = 'scoped memory for tpu_custom_call.1']
    %16 = vsyncpa [#allocation3], 0
    // Predicated region
    $region2: #{tpu_custom_call.1} parent=1 // pred_check
      _
    $region3: #{tpu_custom_call.1} parent=1 // pred_check_branch
      %18 = sbr.rel (0) target = $region5
    $region4: #{tpu_custom_call.1} parent=1 // pred_region
      _
    $region5: #{tpu_custom_call.1} parent=1 // pred_fallthru
      _
    // Predicated region
    $region6: #{tpu_custom_call.1} parent=1 // pred_check
      _
    $region7: #{tpu_custom_call.1} parent=1 // pred_check_branch
      %20 = sbr.rel (0) target = $region9
    $region8: #{tpu_custom_call.1} parent=1 // pred_region
      _
    $region9: #{tpu_custom_call.1} parent=1 // pred_fallthru
      _
    // Predicated region
    $region10: #{tpu_custom_call.1} parent=1 // pred_check
      _
    $region11: #{tpu_custom_call.1} parent=1 // pred_check_branch
      %22 = sbr.rel (0) target = $region13
    $region12: #{tpu_custom_call.1} parent=1 // pred_region
      _
    $region13: #{tpu_custom_call.1} parent=1 // pred_fallthru
      _
    // Predicated region
    $region14: #{tpu_custom_call.1} parent=1 // pred_check
      _
    $region15: #{tpu_custom_call.1} parent=1 // pred_check_branch
      %24 = sbr.rel (0) target = $region17
    $region16: #{tpu_custom_call.1} parent=1 // pred_region
      _
    $region17: #{tpu_custom_call.1} parent=1 // pred_fallthru
      _
    // Predicated region
    $region18: #{tpu_custom_call.1} parent=1 // pred_check
      _
    $region19: #{tpu_custom_call.1} parent=1 // pred_check_branch
      %26 = sbr.rel (0) target = $region21
    $region20: #{tpu_custom_call.1} parent=1 // pred_region
      _
    $region21: #{tpu_custom_call.1} parent=1 // pred_fallthru
      _
    // Predicated region
    $region22: #{tpu_custom_call.1} parent=1 // pred_check
      _
    $region23: #{tpu_custom_call.1} parent=1 // pred_check_branch
      %28 = sbr.rel (0) target = $region25
    $region24: #{tpu_custom_call.1} parent=1 // pred_region
      _
    $region25: #{tpu_custom_call.1} parent=1 // pred_fallthru
      _
    // Predicated region
    $region26: #{tpu_custom_call.1} parent=1 // pred_check
      _
    $region27: #{tpu_custom_call.1} parent=1 // pred_check_branch
      %30 = sbr.rel (0) target = $region29
    $region28: #{tpu_custom_call.1} parent=1 // pred_region
      _
    $region29: #{tpu_custom_call.1} parent=1 // pred_fallthru
      _
    // Predicated region
    $region30: #{tpu_custom_call.1} parent=1 // pred_check
      _
    $region31: #{tpu_custom_call.1} parent=1 // pred_check_branch
      %32 = sbr.rel (0) target = $region33
    $region32: #{tpu_custom_call.1} parent=1 // pred_region
      _
    $region33: #{tpu_custom_call.1} parent=1 // pred_fallthru
      _
    // Predicated region
    $region34: #{tpu_custom_call.1} parent=1 // pred_check
      _
    $region35: #{tpu_custom_call.1} parent=1 // pred_check_branch
      %34 = sbr.rel (0) target = $region37
    $region36: #{tpu_custom_call.1} parent=1 // pred_region
      _
    $region37: #{tpu_custom_call.1} parent=1 // pred_fallthru
      _
    // Predicated region
    $region38: #{tpu_custom_call.1} parent=1 // pred_check
      _
    $region39: #{tpu_custom_call.1} parent=1 // pred_check_branch
      %36 = sbr.rel (0) target = $region41
    $region40: #{tpu_custom_call.1} parent=1 // pred_region
      _
    $region41: #{tpu_custom_call.1} parent=1 // pred_fallthru
      _
    // Predicated region
    $region42: #{tpu_custom_call.1} parent=1 // pred_check
      _
    $region43: #{tpu_custom_call.1} parent=1 // pred_check_branch
      %38 = sbr.rel (0) target = $region45
    $region44: #{tpu_custom_call.1} parent=1 // pred_region
      _
    $region45: #{tpu_custom_call.1} parent=1 // pred_fallthru
      _
    %v39 = vld [vmem:[%s0] sm:$0xff]
    %v40 = vld [vmem:[%s0 + $0x8] sm:$0xff]
    %v41 = vld [vmem:[%s0 + $0x10] sm:$0xff]
    %v42 = vld [vmem:[%s0 + $0x18] sm:$0xff]
    %v43 = vld [vmem:[%s1] sm:$0xff]
    %v44 = vld [vmem:[%s1 + $0x8] sm:$0xff]
    %v45 = vld [vmem:[%s1 + $0x10] sm:$0xff]
    %v46 = vld [vmem:[%s1 + $0x18] sm:$0xff]
    %v47 = vld [vmem:[%s1 + $0x20] sm:$0xff]
    %v48 = vld [vmem:[%s1 + $0x28] sm:$0xff]
    %v49 = vld [vmem:[%s1 + $0x30] sm:$0xff]
    %v50 = vld [vmem:[%s1 + $0x38] sm:$0xff]
    %v51 = vld [vmem:[%s1 + $0x40] sm:$0xff]
    %v52 = vld [vmem:[%s1 + $0x48] sm:$0xff]
    %v53 = vld [vmem:[%s1 + $0x50] sm:$0xff]
    %v54 = vld [vmem:[%s1 + $0x58] sm:$0xff]
    %v55 = vld [vmem:[%s1 + $0x60] sm:$0xff]
    %v56 = vld [vmem:[%s1 + $0x68] sm:$0xff]
    %v57 = vld [vmem:[%s1 + $0x70] sm:$0xff]
    %v58 = vld [vmem:[%s1 + $0x78] sm:$0xff]
    %v59 = vld [vmem:[%s2] sm:$0xff]
    %v60 = vld [vmem:[%s2 + $0x8] sm:$0xff]
    %v61 = vld [vmem:[%s2 + $0x10] sm:$0xff]
    %v62 = vld [vmem:[%s2 + $0x18] sm:$0xff]
    %v63 = vld [vmem:[%s2 + $0x20] sm:$0xff]
    %v64 = vld [vmem:[%s2 + $0x28] sm:$0xff]
    %v65 = vld [vmem:[%s2 + $0x30] sm:$0xff]
    %v66 = vld [vmem:[%s2 + $0x38] sm:$0xff]
    %v67 = vld [vmem:[%s2 + $0x40] sm:$0xff]
    %v68 = vld [vmem:[%s2 + $0x48] sm:$0xff]
    %v69 = vld [vmem:[%s2 + $0x50] sm:$0xff]
    %v70 = vld [vmem:[%s2 + $0x58] sm:$0xff]
    %v71 = vld [vmem:[%s2 + $0x60] sm:$0xff]
    %v72 = vld [vmem:[%s2 + $0x68] sm:$0xff]
    %v73 = vld [vmem:[%s2 + $0x70] sm:$0xff]
    %v74 = vld [vmem:[%s2 + $0x78] sm:$0xff]
    %v75 = vld [vmem:[%s3] sm:$0xff]
    %v76 = vld [vmem:[%s3 + $0x8] sm:$0xff]
    %v77 = vld [vmem:[%s3 + $0x10] sm:$0xff]
    %v78 = vld [vmem:[%s3 + $0x18] sm:$0xff]
    %v79 = vld [vmem:[%s3 + $0x20] sm:$0xff]
    %v80 = vld [vmem:[%s3 + $0x28] sm:$0xff]
    %v81 = vld [vmem:[%s3 + $0x30] sm:$0xff]
    %v82 = vld [vmem:[%s3 + $0x38] sm:$0xff]
    %v83 = vld [vmem:[%s3 + $0x40] sm:$0xff]
    %v84 = vld [vmem:[%s3 + $0x48] sm:$0xff]
    %v85 = vld [vmem:[%s3 + $0x50] sm:$0xff]
    %v86 = vld [vmem:[%s3 + $0x58] sm:$0xff]
    %v87 = vld [vmem:[%s3 + $0x60] sm:$0xff]
    %v88 = vld [vmem:[%s3 + $0x68] sm:$0xff]
    %v89 = vld [vmem:[%s3 + $0x70] sm:$0xff]
    %v90 = vld [vmem:[%s3 + $0x78] sm:$0xff]
    %v91 = vld [vmem:[%s4] sm:$0xff]
    %v92 = vld [vmem:[%s4 + $0x8] sm:$0xff]
    %v93 = vld [vmem:[%s4 + $0x10] sm:$0xff]
    %v94 = vld [vmem:[%s4 + $0x18] sm:$0xff]
    %v95 = vld [vmem:[%s4 + $0x20] sm:$0xff]
    %v96 = vld [vmem:[%s4 + $0x28] sm:$0xff]
    %v97 = vld [vmem:[%s4 + $0x30] sm:$0xff]
    %v98 = vld [vmem:[%s4 + $0x38] sm:$0xff]
    %v99 = vld [vmem:[%s4 + $0x40] sm:$0xff]
    %v100 = vld [vmem:[%s4 + $0x48] sm:$0xff]
    %v101 = vld [vmem:[%s4 + $0x50] sm:$0xff]
    %v102 = vld [vmem:[%s4 + $0x58] sm:$0xff]
    %v103 = vld [vmem:[%s4 + $0x60] sm:$0xff]
    %v104 = vld [vmem:[%s4 + $0x68] sm:$0xff]
    %v105 = vld [vmem:[%s4 + $0x70] sm:$0xff]
    %v106 = vld [vmem:[%s4 + $0x78] sm:$0xff]
    %v107 = vld [vmem:[%s4 + $0x80] sm:$0xff]
    %v108 = vld [vmem:[%s4 + $0x88] sm:$0xff]
    %v109 = vld [vmem:[%s4 + $0x90] sm:$0xff]
    %v110 = vld [vmem:[%s4 + $0x98] sm:$0xff]
    %v111 = vld [vmem:[%s4 + $0xa0] sm:$0xff]
    %v112 = vld [vmem:[%s4 + $0xa8] sm:$0xff]
    %v113 = vld [vmem:[%s4 + $0xb0] sm:$0xff]
    %v114 = vld [vmem:[%s4 + $0xb8] sm:$0xff]
    %v115 = vld [vmem:[%s4 + $0xc0] sm:$0xff]
    %v116 = vld [vmem:[%s4 + $0xc8] sm:$0xff]
    %v117 = vld [vmem:[%s4 + $0xd0] sm:$0xff]
    %v118 = vld [vmem:[%s4 + $0xd8] sm:$0xff]
    %v119 = vld [vmem:[%s4 + $0xe0] sm:$0xff]
    %v120 = vld [vmem:[%s4 + $0xe8] sm:$0xff]
    %v121 = vld [vmem:[%s4 + $0xf0] sm:$0xff]
    %v122 = vld [vmem:[%s4 + $0xf8] sm:$0xff]
    %v123 = vld [vmem:[%s4 + $0x100] sm:$0xff]
    %v124 = vld [vmem:[%s4 + $0x108] sm:$0xff]
    %v125 = vld [vmem:[%s4 + $0x110] sm:$0xff]
    %v126 = vld [vmem:[%s4 + $0x118] sm:$0xff]
    %v127 = vld [vmem:[%s4 + $0x120] sm:$0xff]
    %v128 = vld [vmem:[%s4 + $0x128] sm:$0xff]
    %v129 = vld [vmem:[%s4 + $0x130] sm:$0xff]
    %v130 = vld [vmem:[%s4 + $0x138] sm:$0xff]
    %v131 = vld [vmem:[%s4 + $0x140] sm:$0xff]
    %v132 = vld [vmem:[%s4 + $0x148] sm:$0xff]
    %v133 = vld [vmem:[%s4 + $0x150] sm:$0xff]
    %v134 = vld [vmem:[%s4 + $0x158] sm:$0xff]
    %v135 = vld [vmem:[%s4 + $0x160] sm:$0xff]
    %v136 = vld [vmem:[%s4 + $0x168] sm:$0xff]
    %v137 = vld [vmem:[%s4 + $0x170] sm:$0xff]
    %v138 = vld [vmem:[%s4 + $0x178] sm:$0xff]
    %v139 = vld [vmem:[%s4 + $0x180] sm:$0xff]
    %v140 = vld [vmem:[%s4 + $0x188] sm:$0xff]
    %v141 = vld [vmem:[%s4 + $0x190] sm:$0xff]
    %v142 = vld [vmem:[%s4 + $0x198] sm:$0xff]
    %v143 = vld [vmem:[%s4 + $0x1a0] sm:$0xff]
    %v144 = vld [vmem:[%s4 + $0x1a8] sm:$0xff]
    %v145 = vld [vmem:[%s4 + $0x1b0] sm:$0xff]
    %v146 = vld [vmem:[%s4 + $0x1b8] sm:$0xff]
    %v147 = vld [vmem:[%s4 + $0x1c0] sm:$0xff]
    %v148 = vld [vmem:[%s4 + $0x1c8] sm:$0xff]
    %v149 = vld [vmem:[%s4 + $0x1d0] sm:$0xff]
    %v150 = vld [vmem:[%s4 + $0x1d8] sm:$0xff]
    %v151 = vld [vmem:[%s4 + $0x1e0] sm:$0xff]
    %v152 = vld [vmem:[%s4 + $0x1e8] sm:$0xff]
    %v153 = vld [vmem:[%s4 + $0x1f0] sm:$0xff]
    %v154 = vld [vmem:[%s4 + $0x1f8] sm:$0xff]
    %v155 = vld [vmem:[%s5] sm:$0x1]
    %v156 = vlaneseq
    %v157 = vshrl.u32 %v156, 7
    %v158 = vsub.s32 0, %v157
    %v159 = vrot.slane %v155, %v158
    %160 = vmatprep.subr.mxu0 0.0
    %161 = vmatpush1.msra.mxu0 %v106
    %162 = vmatprep.subr.mxu0 0.0
    %163 = vmatpush1.msra.mxu0 %v105
    %164 = vmatprep.subr.mxu0 0.0
    %165 = vmatpush1.msra.mxu0 %v104
    %166 = vmatprep.subr.mxu0 0.0
    %167 = vmatpush1.msra.mxu0 %v103
    %168 = vmatprep.subr.mxu0 0.0
    %169 = vmatpush1.msra.mxu0 %v102
    %170 = vmatprep.subr.mxu0 0.0
    %171 = vmatpush1.msra.mxu0 %v101
    %172 = vmatprep.subr.mxu0 0.0
    %173 = vmatpush1.msra.mxu0 %v100
    %174 = vmatprep.subr.mxu0 0.0
    %175 = vmatpush1.msra.mxu0 %v99
    %176 = vmatprep.subr.mxu0 0.0
    %177 = vmatpush1.msra.mxu0 %v98
    %178 = vmatprep.subr.mxu0 0.0
    %179 = vmatpush1.msra.mxu0 %v97
    %180 = vmatprep.subr.mxu0 0.0
    %181 = vmatpush1.msra.mxu0 %v96
    %182 = vmatprep.subr.mxu0 0.0
    %183 = vmatpush1.msra.mxu0 %v95
    %184 = vmatprep.subr.mxu0 0.0
    %185 = vmatpush1.msra.mxu0 %v94
    %186 = vmatprep.subr.mxu0 0.0
    %187 = vmatpush1.msra.mxu0 %v93
    %188 = vmatprep.subr.mxu0 0.0
    %189 = vmatpush1.msra.mxu0 %v92
    %190 = vmatprep.subr.mxu0 0.0
    %191 = vmatpush1.msra.mxu0 %v91
    %192 = vmatprep.subr.mxu0 0.0
    %193 = vmatpush2.msra.mxu0 %v122
    %194 = vmatprep.subr.mxu0 0.0
    %195 = vmatpush2.msra.mxu0 %v121
    %196 = vmatprep.subr.mxu0 0.0
    %197 = vmatpush2.msra.mxu0 %v120
    %198 = vmatprep.subr.mxu0 0.0
    %199 = vmatpush2.msra.mxu0 %v119
    %200 = vmatprep.subr.mxu0 0.0
    %201 = vmatpush2.msra.mxu0 %v118
    %202 = vmatprep.subr.mxu0 0.0
    %203 = vmatpush2.msra.mxu0 %v117
    %204 = vmatprep.subr.mxu0 0.0
    %205 = vmatpush2.msra.mxu0 %v116
    %206 = vmatprep.subr.mxu0 0.0
    %207 = vmatpush2.msra.mxu0 %v115
    %208 = vmatprep.subr.mxu0 0.0
    %209 = vmatpush2.msra.mxu0 %v114
    %210 = vmatprep.subr.mxu0 0.0
    %211 = vmatpush2.msra.mxu0 %v113
    %212 = vmatprep.subr.mxu0 0.0
    %213 = vmatpush2.msra.mxu0 %v112
    %214 = vmatprep.subr.mxu0 0.0
    %215 = vmatpush2.msra.mxu0 %v111
    %216 = vmatprep.subr.mxu0 0.0
    %217 = vmatpush2.msra.mxu0 %v110
    %218 = vmatprep.subr.mxu0 0.0
    %219 = vmatpush2.msra.mxu0 %v109
    %220 = vmatprep.subr.mxu0 0.0
    %221 = vmatpush2.msra.mxu0 %v108
    %222 = vmatprep.subr.mxu0 0.0
    %223 = vmatpush2.msra.mxu0 %v107
    %224 = vmatprep.mubr.f32.mxu0 %v44
    %225 = vmatmul.mubr.f32.gmra.mxu0 %v43
    %v226 = vpop.f32.mrf.mxu0
    %v227 = vadd.f32 %v159, %v226
    %v228 = vpop.f32.mrf.mxu0
    %229 = vmatprep.mubr.f32.mxu0 %v48
    %230 = vmatmul.mubr.f32.gmra.mxu0 %v47
    %v231 = vpop.f32.mrf.mxu0
    %v232 = vadd.f32 %v159, %v231
    %v233 = vpop.f32.mrf.mxu0
    %234 = vmatprep.mubr.f32.mxu0 %v52
    %235 = vmatmul.mubr.f32.gmra.mxu0 %v51
    %v236 = vpop.f32.mrf.mxu0
    %v237 = vadd.f32 %v159, %v236
    %v238 = vpop.f32.mrf.mxu0
    %239 = vmatprep.mubr.f32.mxu0 %v56
    %240 = vmatmul.mubr.f32.gmra.mxu0 %v55
    %v241 = vpop.f32.mrf.mxu0
    %v242 = vadd.f32 %v159, %v241
    %v243 = vpop.f32.mrf.mxu0
    %244 = vdwg.mxu0
    %245 = vmatprep.subr.mxu0 0.0
    %246 = vmatpush1.msra.mxu0 %v138
    %247 = vmatprep.subr.mxu0 0.0
    %248 = vmatpush1.msra.mxu0 %v137
    %249 = vmatprep.subr.mxu0 0.0
    %250 = vmatpush1.msra.mxu0 %v136
    %251 = vmatprep.subr.mxu0 0.0
    %252 = vmatpush1.msra.mxu0 %v135
    %253 = vmatprep.subr.mxu0 0.0
    %254 = vmatpush1.msra.mxu0 %v134
    %255 = vmatprep.subr.mxu0 0.0
    %256 = vmatpush1.msra.mxu0 %v133
    %257 = vmatprep.subr.mxu0 0.0
    %258 = vmatpush1.msra.mxu0 %v132
    %259 = vmatprep.subr.mxu0 0.0
    %260 = vmatpush1.msra.mxu0 %v131
    %261 = vmatprep.subr.mxu0 0.0
    %262 = vmatpush1.msra.mxu0 %v130
    %263 = vmatprep.subr.mxu0 0.0
    %264 = vmatpush1.msra.mxu0 %v129
    %265 = vmatprep.subr.mxu0 0.0
    %266 = vmatpush1.msra.mxu0 %v128
    %267 = vmatprep.subr.mxu0 0.0
    %268 = vmatpush1.msra.mxu0 %v127
    %269 = vmatprep.subr.mxu0 0.0
    %270 = vmatpush1.msra.mxu0 %v126
    %271 = vmatprep.subr.mxu0 0.0
    %272 = vmatpush1.msra.mxu0 %v125
    %273 = vmatprep.subr.mxu0 0.0
    %274 = vmatpush1.msra.mxu0 %v124
    %275 = vmatprep.subr.mxu0 0.0
    %276 = vmatpush1.msra.mxu0 %v123
    %277 = vmatprep.subr.mxu0 0.0
    %278 = vmatpush2.msra.mxu0 %v154
    %279 = vmatprep.subr.mxu0 0.0
    %280 = vmatpush2.msra.mxu0 %v153
    %281 = vmatprep.subr.mxu0 0.0
    %282 = vmatpush2.msra.mxu0 %v152
    %283 = vmatprep.subr.mxu0 0.0
    %284 = vmatpush2.msra.mxu0 %v151
    %285 = vmatprep.subr.mxu0 0.0
    %286 = vmatpush2.msra.mxu0 %v150
    %287 = vmatprep.subr.mxu0 0.0
    %288 = vmatpush2.msra.mxu0 %v149
    %289 = vmatprep.subr.mxu0 0.0
    %290 = vmatpush2.msra.mxu0 %v148
    %291 = vmatprep.subr.mxu0 0.0
    %292 = vmatpush2.msra.mxu0 %v147
    %293 = vmatprep.subr.mxu0 0.0
    %294 = vmatpush2.msra.mxu0 %v146
    %295 = vmatprep.subr.mxu0 0.0
    %296 = vmatpush2.msra.mxu0 %v145
    %297 = vmatprep.subr.mxu0 0.0
    %298 = vmatpush2.msra.mxu0 %v144
    %299 = vmatprep.subr.mxu0 0.0
    %300 = vmatpush2.msra.mxu0 %v143
    %301 = vmatprep.subr.mxu0 0.0
    %302 = vmatpush2.msra.mxu0 %v142
    %303 = vmatprep.subr.mxu0 0.0
    %304 = vmatpush2.msra.mxu0 %v141
    %305 = vmatprep.subr.mxu0 0.0
    %306 = vmatpush2.msra.mxu0 %v140
    %307 = vmatprep.subr.mxu0 0.0
    %308 = vmatpush2.msra.mxu0 %v139
    %309 = vmatprep.mubr.f32.mxu0 %v46
    %310 = vmatmul.mubr.f32.gmra.mxu0 %v45
    %v311 = vpop.f32.mrf.mxu0
    %v312 = vadd.f32 %v227, %v311
    %v313 = vpop.f32.mrf.mxu0
    %314 = vmatprep.mubr.f32.mxu0 %v50
    %315 = vmatmul.mubr.f32.gmra.mxu0 %v49
    %v316 = vpop.f32.mrf.mxu0
    %v317 = vadd.f32 %v232, %v316
    %v318 = vpop.f32.mrf.mxu0
    %319 = vmatprep.mubr.f32.mxu0 %v54
    %320 = vmatmul.mubr.f32.gmra.mxu0 %v53
    %v321 = vpop.f32.mrf.mxu0
    %v322 = vadd.f32 %v237, %v321
    %v323 = vpop.f32.mrf.mxu0
    %324 = vmatprep.mubr.f32.mxu0 %v58
    %325 = vmatmul.mubr.f32.gmra.mxu0 %v57
    %v326 = vpop.f32.mrf.mxu0
    %v327 = vadd.f32 %v242, %v326
    %v328 = vpop.f32.mrf.mxu0
    %329 = vdwg.mxu0
    %v330 = vmul.f32 %v312, %v312
    %v331 = vmul.f32 %v317, %v317
    %v332 = vmul.f32 %v322, %v322
    %v333 = vmul.f32 %v327, %v327
    %v334 = vmul.f32 %v312, %v330
    %v335 = vmul.f32 %v317, %v331
    %v336 = vmul.f32 %v322, %v332
    %v337 = vmul.f32 %v327, %v333
    %v338 = vmul.f32 %v334, 0.044715
    %v339 = vmul.f32 %v335, 0.044715
    %v340 = vmul.f32 %v336, 0.044715
    %v341 = vmul.f32 %v337, 0.044715
    %v342 = vadd.f32 %v312, %v338
    %v343 = vadd.f32 %v317, %v339
    %v344 = vadd.f32 %v322, %v340
    %v345 = vadd.f32 %v327, %v341
    %v346 = vmul.f32 %v342, 0.7978846
    %v347 = vmul.f32 %v343, 0.7978846
    %v348 = vmul.f32 %v344, 0.7978846
    %v349 = vmul.f32 %v345, 0.7978846
    %v350 = vtanh.pop %v346
    %v351 = vtanh.pop %v347
    %v352 = vtanh.pop %v348
    %v353 = vtanh.pop %v349
    %v354 = vadd.f32 %v350, 1.0
    %v355 = vadd.f32 %v351, 1.0
    %v356 = vadd.f32 %v352, 1.0
    %v357 = vadd.f32 %v353, 1.0
    %v358 = vmul.f32 %v354, 0.5
    %v359 = vmul.f32 %v355, 0.5
    %v360 = vmul.f32 %v356, 0.5
    %v361 = vmul.f32 %v357, 0.5
    %v362 = vmul.f32 %v312, %v358
    %v363 = vmul.f32 %v317, %v359
    %v364 = vmul.f32 %v322, %v360
    %v365 = vmul.f32 %v327, %v361
    %v366 = vadd.f32 %v39, %v362
    %v367 = vadd.f32 %v40, %v363
    %v368 = vadd.f32 %v41, %v364
    %v369 = vadd.f32 %v42, %v365
    %v370 = vld [vmem:[%s5 + $0x1] sm:$0x1]
    %v371 = vld [vmem:[%s5 + $0x2] sm:$0x1]
    %vm372 = vcmask 261120
    %v373 = vsel %vm372, %v366, 0.0
    %374 = vadd.xlane.f32.xlu0 %v373
    %v375 = vpop.xlane.xlu0 %374
    %v376 = vsel %vm372, %v367, 0.0
    %377 = vadd.xlane.f32.xlu0 %v376
    %v378 = vpop.xlane.xlu0 %377
    %v379 = vsel %vm372, %v368, 0.0
    %380 = vadd.xlane.f32.xlu0 %v379
    %v381 = vpop.xlane.xlu0 %380
    %v382 = vsel %vm372, %v369, 0.0
    %383 = vadd.xlane.f32.xlu0 %v382
    %v384 = vpop.xlane.xlu0 %383
    %v385 = vrcp.pop 32.0
    %v386 = vmul.f32 %v375, %v385
    %v387 = vmul.f32 %v378, %v385
    %v388 = vmul.f32 %v381, %v385
    %v389 = vmul.f32 %v384, %v385
    %v390 = vsub.f32 %v366, %v386
    %v391 = vsub.f32 %v367, %v387
    %v392 = vsub.f32 %v368, %v388
    %v393 = vsub.f32 %v369, %v389
    %v394 = vmul.f32 %v390, %v390
    %v395 = vmul.f32 %v391, %v391
    %v396 = vmul.f32 %v392, %v392
    %v397 = vmul.f32 %v393, %v393
    %v398 = vsel %vm372, %v394, 0.0
    %399 = vadd.xlane.f32.xlu0 %v398
    %v400 = vpop.xlane.xlu0 %399
    %v401 = vsel %vm372, %v395, 0.0
    %402 = vadd.xlane.f32.xlu0 %v401
    %v403 = vpop.xlane.xlu0 %402
    %v404 = vsel %vm372, %v396, 0.0
    %405 = vadd.xlane.f32.xlu0 %v404
    %v406 = vpop.xlane.xlu0 %405
    %v407 = vsel %vm372, %v397, 0.0
    %408 = vadd.xlane.f32.xlu0 %v407
    %v409 = vpop.xlane.xlu0 %408
    %v410 = vmul.f32 %v400, %v385
    %v411 = vmul.f32 %v403, %v385
    %v412 = vmul.f32 %v406, %v385
    %v413 = vmul.f32 %v409, %v385
    %v414 = vadd.f32 %v410, 1e-05
    %v415 = vadd.f32 %v411, 1e-05
    %v416 = vadd.f32 %v412, 1e-05
    %v417 = vadd.f32 %v413, 1e-05
    %v418 = vrsqrt.pop %v414
    %v419 = vrsqrt.pop %v415
    %v420 = vrsqrt.pop %v416
    %v421 = vrsqrt.pop %v417
    %v422 = vmul.f32 %v390, %v418
    %v423 = vmul.f32 %v391, %v419
    %v424 = vmul.f32 %v392, %v420
    %v425 = vmul.f32 %v393, %v421
    %v426 = vlaneseq
    %v427 = vshrl.u32 %v426, 7
    %v428 = vsub.s32 0, %v427
    %v429 = vrot.slane %v370, %v428
    %v430 = vmul.f32 %v422, %v429
    %v431 = vmul.f32 %v423, %v429
    %v432 = vmul.f32 %v424, %v429
    %v433 = vmul.f32 %v425, %v429
    %v434 = vlaneseq
    %v435 = vshrl.u32 %v434, 7
    %v436 = vsub.s32 0, %v435
    %v437 = vrot.slane %v371, %v436
    %v438 = vadd.f32 %v430, %v437
    %v439 = vadd.f32 %v431, %v437
    %v440 = vadd.f32 %v432, %v437
    %v441 = vadd.f32 %v433, %v437
    %v442 = vld [vmem:[%s9] sm:$0xff]
    %v443 = vld [vmem:[%s9 + $0x8] sm:$0x1]
    %v444 = vld [vmem:[%s6] sm:$0xff]
    %v445 = vld [vmem:[%s6 + $0x8] sm:$0xff]
    %v446 = vld [vmem:[%s6 + $0x10] sm:$0xff]
    %v447 = vld [vmem:[%s6 + $0x18] sm:$0xff]
    %v448 = vlaneseq
    %v449 = vshrl.u32 %v448, 7
    %v450 = vsub.s32 0, %v449
    %v451 = vrot.slane %v442, %v450
    %v453 = vsel %vm372, %v438, 0
    %v456 = vsel %vm372, %v439, 0
    %v459 = vsel %vm372, %v440, 0
    %v462 = vsel %vm372, %v441, 0
    %464 = vmatprep.subr.mxu0 0.0
    %465 = vmatpush1.msra.mxu0 0.0
    %466 = vmatprep.subr.mxu0 0.0
    %467 = vmatpush1.msra.mxu0 0.0
    %468 = vmatprep.subr.mxu0 0.0
    %469 = vmatpush1.msra.mxu0 0.0
    %470 = vmatprep.subr.mxu0 0.0
    %471 = vmatpush1.msra.mxu0 0.0
    %472 = vmatprep.subr.mxu0 0.0
    %473 = vmatpush1.msra.mxu0 0.0
    %474 = vmatprep.subr.mxu0 0.0
    %475 = vmatpush1.msra.mxu0 0.0
    %476 = vmatprep.subr.mxu0 0.0
    %477 = vmatpush1.msra.mxu0 0.0
    %478 = vmatprep.subr.mxu0 0.0
    %479 = vmatpush1.msra.mxu0 0.0
    %480 = vmatprep.subr.mxu0 0.0
    %481 = vmatpush1.msra.mxu0 0.0
    %482 = vmatprep.subr.mxu0 0.0
    %483 = vmatpush1.msra.mxu0 0.0
    %484 = vmatprep.subr.mxu0 0.0
    %485 = vmatpush1.msra.mxu0 0.0
    %486 = vmatprep.subr.mxu0 0.0
    %487 = vmatpush1.msra.mxu0 0.0
    %488 = vmatprep.subr.mxu0 0.0
    %489 = vmatpush1.msra.mxu0 %v447
    %490 = vmatprep.subr.mxu0 0.0
    %491 = vmatpush1.msra.mxu0 %v446
    %492 = vmatprep.subr.mxu0 0.0
    %493 = vmatpush1.msra.mxu0 %v445
    %494 = vmatprep.subr.mxu0 0.0
    %495 = vmatpush1.msra.mxu0 %v444
    %496 = vmatprep.subr.mxu0 0.0
    %497 = vmatpush2.msra.mxu0 0.0
    %498 = vmatprep.subr.mxu0 0.0
    %499 = vmatpush2.msra.mxu0 0.0
    %500 = vmatprep.subr.mxu0 0.0
    %501 = vmatpush2.msra.mxu0 0.0
    %502 = vmatprep.subr.mxu0 0.0
    %503 = vmatpush2.msra.mxu0 0.0
    %504 = vmatprep.subr.mxu0 0.0
    %505 = vmatpush2.msra.mxu0 0.0
    %506 = vmatprep.subr.mxu0 0.0
    %507 = vmatpush2.msra.mxu0 0.0
    %508 = vmatprep.subr.mxu0 0.0
    %509 = vmatpush2.msra.mxu0 0.0
    %510 = vmatprep.subr.mxu0 0.0
    %511 = vmatpush2.msra.mxu0 0.0
    %512 = vmatprep.subr.mxu0 0.0
    %513 = vmatpush2.msra.mxu0 0.0
    %514 = vmatprep.subr.mxu0 0.0
    %515 = vmatpush2.msra.mxu0 0.0
    %516 = vmatprep.subr.mxu0 0.0
    %517 = vmatpush2.msra.mxu0 0.0
    %518 = vmatprep.subr.mxu0 0.0
    %519 = vmatpush2.msra.mxu0 0.0
    %520 = vmatprep.subr.mxu0 0.0
    %521 = vmatpush2.msra.mxu0 0.0
    %522 = vmatprep.subr.mxu0 0.0
    %523 = vmatpush2.msra.mxu0 0.0
    %524 = vmatprep.subr.mxu0 0.0
    %525 = vmatpush2.msra.mxu0 0.0
    %526 = vmatprep.subr.mxu0 0.0
    %527 = vmatpush2.msra.mxu0 0.0
    %528 = vmatprep.mubr.f32.mxu0 0.0
    %529 = vmatmul.mubr.f32.gmra.mxu0 %v453
    %v530 = vpop.f32.mrf.mxu0
    %v531 = vadd.f32 %v451, %v530
    %v532 = vpop.f32.mrf.mxu0
    %533 = vmatprep.mubr.f32.mxu0 0.0
    %534 = vmatmul.mubr.f32.gmra.mxu0 %v456
    %v535 = vpop.f32.mrf.mxu0
    %v536 = vadd.f32 %v451, %v535
    %v537 = vpop.f32.mrf.mxu0
    %538 = vmatprep.mubr.f32.mxu0 0.0
    %539 = vmatmul.mubr.f32.gmra.mxu0 %v459
    %v540 = vpop.f32.mrf.mxu0
    %v541 = vadd.f32 %v451, %v540
    %v542 = vpop.f32.mrf.mxu0
    %543 = vmatprep.mubr.f32.mxu0 0.0
    %544 = vmatmul.mubr.f32.gmra.mxu0 %v462
    %v545 = vpop.f32.mrf.mxu0
    %v546 = vadd.f32 %v451, %v545
    %v547 = vpop.f32.mrf.mxu0
    %548 = vdwg.mxu0
    %s549 = scalar_lea.vmem %s6, 32
    %v550 = vld [vmem:[%s549] sm:$0xff]
    %v551 = vld [vmem:[%s549 + $0x8] sm:$0xff]
    %v552 = vld [vmem:[%s549 + $0x10] sm:$0xff]
    %v553 = vld [vmem:[%s549 + $0x18] sm:$0xff]
    %v554 = vlaneseq
    %v555 = vshrl.u32 %v554, 7
    %v556 = vsub.s32 1, %v555
    %v557 = vrot.slane %v442, %v556
    %558 = vmatprep.subr.mxu0 0.0
    %559 = vmatpush1.msra.mxu0 0.0
    %560 = vmatprep.subr.mxu0 0.0
    %561 = vmatpush1.msra.mxu0 0.0
    %562 = vmatprep.subr.mxu0 0.0
    %563 = vmatpush1.msra.mxu0 0.0
    %564 = vmatprep.subr.mxu0 0.0
    %565 = vmatpush1.msra.mxu0 0.0
    %566 = vmatprep.subr.mxu0 0.0
    %567 = vmatpush1.msra.mxu0 0.0
    %568 = vmatprep.subr.mxu0 0.0
    %569 = vmatpush1.msra.mxu0 0.0
    %570 = vmatprep.subr.mxu0 0.0
    %571 = vmatpush1.msra.mxu0 0.0
    %572 = vmatprep.subr.mxu0 0.0
    %573 = vmatpush1.msra.mxu0 0.0
    %574 = vmatprep.subr.mxu0 0.0
    %575 = vmatpush1.msra.mxu0 0.0
    %576 = vmatprep.subr.mxu0 0.0
    %577 = vmatpush1.msra.mxu0 0.0
    %578 = vmatprep.subr.mxu0 0.0
    %579 = vmatpush1.msra.mxu0 0.0
    %580 = vmatprep.subr.mxu0 0.0
    %581 = vmatpush1.msra.mxu0 0.0
    %582 = vmatprep.subr.mxu0 0.0
    %583 = vmatpush1.msra.mxu0 %v553
    %584 = vmatprep.subr.mxu0 0.0
    %585 = vmatpush1.msra.mxu0 %v552
    %586 = vmatprep.subr.mxu0 0.0
    %587 = vmatpush1.msra.mxu0 %v551
    %588 = vmatprep.subr.mxu0 0.0
    %589 = vmatpush1.msra.mxu0 %v550
    %590 = vmatprep.subr.mxu0 0.0
    %591 = vmatpush2.msra.mxu0 0.0
    %592 = vmatprep.subr.mxu0 0.0
    %593 = vmatpush2.msra.mxu0 0.0
    %594 = vmatprep.subr.mxu0 0.0
    %595 = vmatpush2.msra.mxu0 0.0
    %596 = vmatprep.subr.mxu0 0.0
    %597 = vmatpush2.msra.mxu0 0.0
    %598 = vmatprep.subr.mxu0 0.0
    %599 = vmatpush2.msra.mxu0 0.0
    %600 = vmatprep.subr.mxu0 0.0
    %601 = vmatpush2.msra.mxu0 0.0
    %602 = vmatprep.subr.mxu0 0.0
    %603 = vmatpush2.msra.mxu0 0.0
    %604 = vmatprep.subr.mxu0 0.0
    %605 = vmatpush2.msra.mxu0 0.0
    %606 = vmatprep.subr.mxu0 0.0
    %607 = vmatpush2.msra.mxu0 0.0
    %608 = vmatprep.subr.mxu0 0.0
    %609 = vmatpush2.msra.mxu0 0.0
    %610 = vmatprep.subr.mxu0 0.0
    %611 = vmatpush2.msra.mxu0 0.0
    %612 = vmatprep.subr.mxu0 0.0
    %613 = vmatpush2.msra.mxu0 0.0
    %614 = vmatprep.subr.mxu0 0.0
    %615 = vmatpush2.msra.mxu0 0.0
    %616 = vmatprep.subr.mxu0 0.0
    %617 = vmatpush2.msra.mxu0 0.0
    %618 = vmatprep.subr.mxu0 0.0
    %619 = vmatpush2.msra.mxu0 0.0
    %620 = vmatprep.subr.mxu0 0.0
    %621 = vmatpush2.msra.mxu0 0.0
    %622 = vmatprep.mubr.f32.mxu0 0.0
    %623 = vmatmul.mubr.f32.gmra.mxu0 %v453
    %v624 = vpop.f32.mrf.mxu0
    %v625 = vadd.f32 %v557, %v624
    %v626 = vpop.f32.mrf.mxu0
    %627 = vmatprep.mubr.f32.mxu0 0.0
    %628 = vmatmul.mubr.f32.gmra.mxu0 %v456
    %v629 = vpop.f32.mrf.mxu0
    %v630 = vadd.f32 %v557, %v629
    %v631 = vpop.f32.mrf.mxu0
    %632 = vmatprep.mubr.f32.mxu0 0.0
    %633 = vmatmul.mubr.f32.gmra.mxu0 %v459
    %v634 = vpop.f32.mrf.mxu0
    %v635 = vadd.f32 %v557, %v634
    %v636 = vpop.f32.mrf.mxu0
    %637 = vmatprep.mubr.f32.mxu0 0.0
    %638 = vmatmul.mubr.f32.gmra.mxu0 %v462
    %v639 = vpop.f32.mrf.mxu0
    %v640 = vadd.f32 %v557, %v639
    %v641 = vpop.f32.mrf.mxu0
    %642 = vdwg.mxu0
    %s643 = scalar_lea.vmem %s6, 64
    %v644 = vld [vmem:[%s643] sm:$0xff]
    %v645 = vld [vmem:[%s643 + $0x8] sm:$0xff]
    %v646 = vld [vmem:[%s643 + $0x10] sm:$0xff]
    %v647 = vld [vmem:[%s643 + $0x18] sm:$0xff]
    %v648 = vlaneseq
    %v649 = vshrl.u32 %v648, 7
    %v650 = vsub.s32 2, %v649
    %v651 = vrot.slane %v442, %v650
    %652 = vmatprep.subr.mxu0 0.0
    %653 = vmatpush1.msra.mxu0 0.0
    %654 = vmatprep.subr.mxu0 0.0
    %655 = vmatpush1.msra.mxu0 0.0
    %656 = vmatprep.subr.mxu0 0.0
    %657 = vmatpush1.msra.mxu0 0.0
    %658 = vmatprep.subr.mxu0 0.0
    %659 = vmatpush1.msra.mxu0 0.0
    %660 = vmatprep.subr.mxu0 0.0
    %661 = vmatpush1.msra.mxu0 0.0
    %662 = vmatprep.subr.mxu0 0.0
    %663 = vmatpush1.msra.mxu0 0.0
    %664 = vmatprep.subr.mxu0 0.0
    %665 = vmatpush1.msra.mxu0 0.0
    %666 = vmatprep.subr.mxu0 0.0
    %667 = vmatpush1.msra.mxu0 0.0
    %668 = vmatprep.subr.mxu0 0.0
    %669 = vmatpush1.msra.mxu0 0.0
    %670 = vmatprep.subr.mxu0 0.0
    %671 = vmatpush1.msra.mxu0 0.0
    %672 = vmatprep.subr.mxu0 0.0
    %673 = vmatpush1.msra.mxu0 0.0
    %674 = vmatprep.subr.mxu0 0.0
    %675 = vmatpush1.msra.mxu0 0.0
    %676 = vmatprep.subr.mxu0 0.0
    %677 = vmatpush1.msra.mxu0 %v647
    %678 = vmatprep.subr.mxu0 0.0
    %679 = vmatpush1.msra.mxu0 %v646
    %680 = vmatprep.subr.mxu0 0.0
    %681 = vmatpush1.msra.mxu0 %v645
    %682 = vmatprep.subr.mxu0 0.0
    %683 = vmatpush1.msra.mxu0 %v644
    %684 = vmatprep.subr.mxu0 0.0
    %685 = vmatpush2.msra.mxu0 0.0
    %686 = vmatprep.subr.mxu0 0.0
    %687 = vmatpush2.msra.mxu0 0.0
    %688 = vmatprep.subr.mxu0 0.0
    %689 = vmatpush2.msra.mxu0 0.0
    %690 = vmatprep.subr.mxu0 0.0
    %691 = vmatpush2.msra.mxu0 0.0
    %692 = vmatprep.subr.mxu0 0.0
    %693 = vmatpush2.msra.mxu0 0.0
    %694 = vmatprep.subr.mxu0 0.0
    %695 = vmatpush2.msra.mxu0 0.0
    %696 = vmatprep.subr.mxu0 0.0
    %697 = vmatpush2.msra.mxu0 0.0
    %698 = vmatprep.subr.mxu0 0.0
    %699 = vmatpush2.msra.mxu0 0.0
    %700 = vmatprep.subr.mxu0 0.0
    %701 = vmatpush2.msra.mxu0 0.0
    %702 = vmatprep.subr.mxu0 0.0
    %703 = vmatpush2.msra.mxu0 0.0
    %704 = vmatprep.subr.mxu0 0.0
    %705 = vmatpush2.msra.mxu0 0.0
    %706 = vmatprep.subr.mxu0 0.0
    %707 = vmatpush2.msra.mxu0 0.0
    %708 = vmatprep.subr.mxu0 0.0
    %709 = vmatpush2.msra.mxu0 0.0
    %710 = vmatprep.subr.mxu0 0.0
    %711 = vmatpush2.msra.mxu0 0.0
    %712 = vmatprep.subr.mxu0 0.0
    %713 = vmatpush2.msra.mxu0 0.0
    %714 = vmatprep.subr.mxu0 0.0
    %715 = vmatpush2.msra.mxu0 0.0
    %716 = vmatprep.mubr.f32.mxu0 0.0
    %717 = vmatmul.mubr.f32.gmra.mxu0 %v453
    %v718 = vpop.f32.mrf.mxu0
    %v719 = vadd.f32 %v651, %v718
    %v720 = vpop.f32.mrf.mxu0
    %721 = vmatprep.mubr.f32.mxu0 0.0
    %722 = vmatmul.mubr.f32.gmra.mxu0 %v456
    %v723 = vpop.f32.mrf.mxu0
    %v724 = vadd.f32 %v651, %v723
    %v725 = vpop.f32.mrf.mxu0
    %726 = vmatprep.mubr.f32.mxu0 0.0
    %727 = vmatmul.mubr.f32.gmra.mxu0 %v459
    %v728 = vpop.f32.mrf.mxu0
    %v729 = vadd.f32 %v651, %v728
    %v730 = vpop.f32.mrf.mxu0
    %731 = vmatprep.mubr.f32.mxu0 0.0
    %732 = vmatmul.mubr.f32.gmra.mxu0 %v462
    %v733 = vpop.f32.mrf.mxu0
    %v734 = vadd.f32 %v651, %v733
    %v735 = vpop.f32.mrf.mxu0
    %736 = vdwg.mxu0
    %v737 = vmul.f32 %v531, %v75
    %v738 = vmul.f32 %v536, %v76
    %v739 = vmul.f32 %v541, %v77
    %v740 = vmul.f32 %v546, %v78
    %v741 = vmul.f32 %v531, %v79
    %v742 = vmul.f32 %v536, %v80
    %v743 = vmul.f32 %v541, %v81
    %v744 = vmul.f32 %v546, %v82
    %v745 = vmul.f32 %v531, %v83
    %v746 = vmul.f32 %v536, %v84
    %v747 = vmul.f32 %v541, %v85
    %v748 = vmul.f32 %v546, %v86
    %v749 = vmul.f32 %v531, %v87
    %v750 = vmul.f32 %v536, %v88
    %v751 = vmul.f32 %v541, %v89
    %v752 = vmul.f32 %v546, %v90
    %v754 = vsel %vm372, %v737, 0
    %v757 = vsel %vm372, %v738, 0
    %v760 = vsel %vm372, %v739, 0
    %v763 = vsel %vm372, %v740, 0
    %v766 = vsel %vm372, %v741, 0
    %v769 = vsel %vm372, %v742, 0
    %v772 = vsel %vm372, %v743, 0
    %v775 = vsel %vm372, %v744, 0
    %v778 = vsel %vm372, %v745, 0
    %v781 = vsel %vm372, %v746, 0
    %v784 = vsel %vm372, %v747, 0
    %v787 = vsel %vm372, %v748, 0
    %v790 = vsel %vm372, %v749, 0
    %v793 = vsel %vm372, %v750, 0
    %v796 = vsel %vm372, %v751, 0
    %v799 = vsel %vm372, %v752, 0
    %v802 = vsel %vm372, %v625, 0
    %v805 = vsel %vm372, %v630, 0
    %v808 = vsel %vm372, %v635, 0
    %v811 = vsel %vm372, %v640, 0
    %813 = vmatprep.subr.mxu0 0.0
    %814 = vmatpush1.xpose.msra.mxu0 0.0
    %815 = vmatprep.subr.mxu0 0.0
    %816 = vmatpush1.xpose.msra.mxu0 0.0
    %817 = vmatprep.subr.mxu0 0.0
    %818 = vmatpush1.xpose.msra.mxu0 0.0
    %819 = vmatprep.subr.mxu0 0.0
    %820 = vmatpush1.xpose.msra.mxu0 0.0
    %821 = vmatprep.subr.mxu0 0.0
    %822 = vmatpush1.xpose.msra.mxu0 0.0
    %823 = vmatprep.subr.mxu0 0.0
    %824 = vmatpush1.xpose.msra.mxu0 0.0
    %825 = vmatprep.subr.mxu0 0.0
    %826 = vmatpush1.xpose.msra.mxu0 0.0
    %827 = vmatprep.subr.mxu0 0.0
    %828 = vmatpush1.xpose.msra.mxu0 0.0
    %829 = vmatprep.subr.mxu0 0.0
    %830 = vmatpush1.xpose.msra.mxu0 0.0
    %831 = vmatprep.subr.mxu0 0.0
    %832 = vmatpush1.xpose.msra.mxu0 0.0
    %833 = vmatprep.subr.mxu0 0.0
    %834 = vmatpush1.xpose.msra.mxu0 0.0
    %835 = vmatprep.subr.mxu0 0.0
    %836 = vmatpush1.xpose.msra.mxu0 0.0
    %837 = vmatprep.subr.mxu0 0.0
    %838 = vmatpush1.xpose.msra.mxu0 %v811
    %839 = vmatprep.subr.mxu0 0.0
    %840 = vmatpush1.xpose.msra.mxu0 %v808
    %841 = vmatprep.subr.mxu0 0.0
    %842 = vmatpush1.xpose.msra.mxu0 %v805
    %843 = vmatprep.subr.mxu0 0.0
    %844 = vmatpush1.xpose.msra.mxu0 %v802
    %845 = vmatprep.subr.mxu0 0.0
    %846 = vmatpush2.xpose.msra.mxu0 0.0
    %847 = vmatprep.subr.mxu0 0.0
    %848 = vmatpush2.xpose.msra.mxu0 0.0
    %849 = vmatprep.subr.mxu0 0.0
    %850 = vmatpush2.xpose.msra.mxu0 0.0
    %851 = vmatprep.subr.mxu0 0.0
    %852 = vmatpush2.xpose.msra.mxu0 0.0
    %853 = vmatprep.subr.mxu0 0.0
    %854 = vmatpush2.xpose.msra.mxu0 0.0
    %855 = vmatprep.subr.mxu0 0.0
    %856 = vmatpush2.xpose.msra.mxu0 0.0
    %857 = vmatprep.subr.mxu0 0.0
    %858 = vmatpush2.xpose.msra.mxu0 0.0
    %859 = vmatprep.subr.mxu0 0.0
    %860 = vmatpush2.xpose.msra.mxu0 0.0
    %861 = vmatprep.subr.mxu0 0.0
    %862 = vmatpush2.xpose.msra.mxu0 0.0
    %863 = vmatprep.subr.mxu0 0.0
    %864 = vmatpush2.xpose.msra.mxu0 0.0
    %865 = vmatprep.subr.mxu0 0.0
    %866 = vmatpush2.xpose.msra.mxu0 0.0
    %867 = vmatprep.subr.mxu0 0.0
    %868 = vmatpush2.xpose.msra.mxu0 0.0
    %869 = vmatprep.subr.mxu0 0.0
    %870 = vmatpush2.xpose.msra.mxu0 0.0
    %871 = vmatprep.subr.mxu0 0.0
    %872 = vmatpush2.xpose.msra.mxu0 0.0
    %873 = vmatprep.subr.mxu0 0.0
    %874 = vmatpush2.xpose.msra.mxu0 0.0
    %875 = vmatprep.subr.mxu0 0.0
    %876 = vmatpush2.xpose.msra.mxu0 0.0
    %877 = vmatprep.mubr.f32.mxu0 0.0
    %878 = vmatmul.mubr.f32.gmra.mxu0 %v754
    %v879 = vpop.f32.mrf.mxu0
    %v880 = vadd.f32 %v59, %v879
    %v881 = vpop.f32.mrf.mxu0
    %882 = vmatprep.mubr.f32.mxu0 0.0
    %883 = vmatmul.mubr.f32.gmra.mxu0 %v757
    %v884 = vpop.f32.mrf.mxu0
    %v885 = vadd.f32 %v60, %v884
    %v886 = vpop.f32.mrf.mxu0
    %887 = vmatprep.mubr.f32.mxu0 0.0
    %888 = vmatmul.mubr.f32.gmra.mxu0 %v760
    %v889 = vpop.f32.mrf.mxu0
    %v890 = vadd.f32 %v61, %v889
    %v891 = vpop.f32.mrf.mxu0
    %892 = vmatprep.mubr.f32.mxu0 0.0
    %893 = vmatmul.mubr.f32.gmra.mxu0 %v763
    %v894 = vpop.f32.mrf.mxu0
    %v895 = vadd.f32 %v62, %v894
    %v896 = vpop.f32.mrf.mxu0
    %897 = vmatprep.mubr.f32.mxu0 0.0
    %898 = vmatmul.mubr.f32.gmra.mxu0 %v766
    %v899 = vpop.f32.mrf.mxu0
    %v900 = vadd.f32 %v63, %v899
    %v901 = vpop.f32.mrf.mxu0
    %902 = vmatprep.mubr.f32.mxu0 0.0
    %903 = vmatmul.mubr.f32.gmra.mxu0 %v769
    %v904 = vpop.f32.mrf.mxu0
    %v905 = vadd.f32 %v64, %v904
    %v906 = vpop.f32.mrf.mxu0
    %907 = vmatprep.mubr.f32.mxu0 0.0
    %908 = vmatmul.mubr.f32.gmra.mxu0 %v772
    %v909 = vpop.f32.mrf.mxu0
    %v910 = vadd.f32 %v65, %v909
    %v911 = vpop.f32.mrf.mxu0
    %912 = vmatprep.mubr.f32.mxu0 0.0
    %913 = vmatmul.mubr.f32.gmra.mxu0 %v775
    %v914 = vpop.f32.mrf.mxu0
    %v915 = vadd.f32 %v66, %v914
    %v916 = vpop.f32.mrf.mxu0
    %917 = vmatprep.mubr.f32.mxu0 0.0
    %918 = vmatmul.mubr.f32.gmra.mxu0 %v778
    %v919 = vpop.f32.mrf.mxu0
    %v920 = vadd.f32 %v67, %v919
    %v921 = vpop.f32.mrf.mxu0
    %922 = vmatprep.mubr.f32.mxu0 0.0
    %923 = vmatmul.mubr.f32.gmra.mxu0 %v781
    %v924 = vpop.f32.mrf.mxu0
    %v925 = vadd.f32 %v68, %v924
    %v926 = vpop.f32.mrf.mxu0
    %927 = vmatprep.mubr.f32.mxu0 0.0
    %928 = vmatmul.mubr.f32.gmra.mxu0 %v784
    %v929 = vpop.f32.mrf.mxu0
    %v930 = vadd.f32 %v69, %v929
    %v931 = vpop.f32.mrf.mxu0
    %932 = vmatprep.mubr.f32.mxu0 0.0
    %933 = vmatmul.mubr.f32.gmra.mxu0 %v787
    %v934 = vpop.f32.mrf.mxu0
    %v935 = vadd.f32 %v70, %v934
    %v936 = vpop.f32.mrf.mxu0
    %937 = vmatprep.mubr.f32.mxu0 0.0
    %938 = vmatmul.mubr.f32.gmra.mxu0 %v790
    %v939 = vpop.f32.mrf.mxu0
    %v940 = vadd.f32 %v71, %v939
    %v941 = vpop.f32.mrf.mxu0
    %942 = vmatprep.mubr.f32.mxu0 0.0
    %943 = vmatmul.mubr.f32.gmra.mxu0 %v793
    %v944 = vpop.f32.mrf.mxu0
    %v945 = vadd.f32 %v72, %v944
    %v946 = vpop.f32.mrf.mxu0
    %947 = vmatprep.mubr.f32.mxu0 0.0
    %948 = vmatmul.mubr.f32.gmra.mxu0 %v796
    %v949 = vpop.f32.mrf.mxu0
    %v950 = vadd.f32 %v73, %v949
    %v951 = vpop.f32.mrf.mxu0
    %952 = vmatprep.mubr.f32.mxu0 0.0
    %953 = vmatmul.mubr.f32.gmra.mxu0 %v799
    %v954 = vpop.f32.mrf.mxu0
    %v955 = vadd.f32 %v74, %v954
    %v956 = vpop.f32.mrf.mxu0
    %957 = vdwg.mxu0
    %v958 = vsel %vm372, %v880, -inf
    %959 = vmax.xlane.f32.xlu0 %v958
    %v960 = vpop.xlane.xlu0 %959
    %v961 = vsel %vm372, %v885, -inf
    %962 = vmax.xlane.f32.xlu0 %v961
    %v963 = vpop.xlane.xlu0 %962
    %v964 = vsel %vm372, %v890, -inf
    %965 = vmax.xlane.f32.xlu0 %v964
    %v966 = vpop.xlane.xlu0 %965
    %v967 = vsel %vm372, %v895, -inf
    %968 = vmax.xlane.f32.xlu0 %v967
    %v969 = vpop.xlane.xlu0 %968
    %v970 = vsel %vm372, %v900, -inf
    %971 = vmax.xlane.f32.xlu0 %v970
    %v972 = vpop.xlane.xlu0 %971
    %v973 = vsel %vm372, %v905, -inf
    %974 = vmax.xlane.f32.xlu0 %v973
    %v975 = vpop.xlane.xlu0 %974
    %v976 = vsel %vm372, %v910, -inf
    %977 = vmax.xlane.f32.xlu0 %v976
    %v978 = vpop.xlane.xlu0 %977
    %v979 = vsel %vm372, %v915, -inf
    %980 = vmax.xlane.f32.xlu0 %v979
    %v981 = vpop.xlane.xlu0 %980
    %v982 = vsel %vm372, %v920, -inf
    %983 = vmax.xlane.f32.xlu0 %v982
    %v984 = vpop.xlane.xlu0 %983
    %v985 = vsel %vm372, %v925, -inf
    %986 = vmax.xlane.f32.xlu0 %v985
    %v987 = vpop.xlane.xlu0 %986
    %v988 = vsel %vm372, %v930, -inf
    %989 = vmax.xlane.f32.xlu0 %v988
    %v990 = vpop.xlane.xlu0 %989
    %v991 = vsel %vm372, %v935, -inf
    %992 = vmax.xlane.f32.xlu0 %v991
    %v993 = vpop.xlane.xlu0 %992
    %v994 = vsel %vm372, %v940, -inf
    %995 = vmax.xlane.f32.xlu0 %v994
    %v996 = vpop.xlane.xlu0 %995
    %v997 = vsel %vm372, %v945, -inf
    %998 = vmax.xlane.f32.xlu0 %v997
    %v999 = vpop.xlane.xlu0 %998
    %v1000 = vsel %vm372, %v950, -inf
    %1001 = vmax.xlane.f32.xlu0 %v1000
    %v1002 = vpop.xlane.xlu0 %1001
    %v1003 = vsel %vm372, %v955, -inf
    %1004 = vmax.xlane.f32.xlu0 %v1003
    %v1005 = vpop.xlane.xlu0 %1004
    %v1006 = vsub.f32 %v880, %v960
    %v1007 = vsub.f32 %v885, %v963
    %v1008 = vsub.f32 %v890, %v966
    %v1009 = vsub.f32 %v895, %v969
    %v1010 = vsub.f32 %v900, %v972
    %v1011 = vsub.f32 %v905, %v975
    %v1012 = vsub.f32 %v910, %v978
    %v1013 = vsub.f32 %v915, %v981
    %v1014 = vsub.f32 %v920, %v984
    %v1015 = vsub.f32 %v925, %v987
    %v1016 = vsub.f32 %v930, %v990
    %v1017 = vsub.f32 %v935, %v993
    %v1018 = vsub.f32 %v940, %v996
    %v1019 = vsub.f32 %v945, %v999
    %v1020 = vsub.f32 %v950, %v1002
    %v1021 = vsub.f32 %v955, %v1005
    %v1022 = vmul.f32 %v1006, 1.442695
    %v1023 = vpow.pop %v1022
    %v1024 = vmul.f32 %v1007, 1.442695
    %v1025 = vpow.pop %v1024
    %v1026 = vmul.f32 %v1008, 1.442695
    %v1027 = vpow.pop %v1026
    %v1028 = vmul.f32 %v1009, 1.442695
    %v1029 = vpow.pop %v1028
    %v1030 = vmul.f32 %v1010, 1.442695
    %v1031 = vpow.pop %v1030
    %v1032 = vmul.f32 %v1011, 1.442695
    %v1033 = vpow.pop %v1032
    %v1034 = vmul.f32 %v1012, 1.442695
    %v1035 = vpow.pop %v1034
    %v1036 = vmul.f32 %v1013, 1.442695
    %v1037 = vpow.pop %v1036
    %v1038 = vmul.f32 %v1014, 1.442695
    %v1039 = vpow.pop %v1038
    %v1040 = vmul.f32 %v1015, 1.442695
    %v1041 = vpow.pop %v1040
    %v1042 = vmul.f32 %v1016, 1.442695
    %v1043 = vpow.pop %v1042
    %v1044 = vmul.f32 %v1017, 1.442695
    %v1045 = vpow.pop %v1044
    %v1046 = vmul.f32 %v1018, 1.442695
    %v1047 = vpow.pop %v1046
    %v1048 = vmul.f32 %v1019, 1.442695
    %v1049 = vpow.pop %v1048
    %v1050 = vmul.f32 %v1020, 1.442695
    %v1051 = vpow.pop %v1050
    %v1052 = vmul.f32 %v1021, 1.442695
    %v1053 = vpow.pop %v1052
    %v1054 = vsel %vm372, %v1023, 0.0
    %1055 = vadd.xlane.f32.xlu0 %v1054
    %v1056 = vpop.xlane.xlu0 %1055
    %v1057 = vsel %vm372, %v1025, 0.0
    %1058 = vadd.xlane.f32.xlu0 %v1057
    %v1059 = vpop.xlane.xlu0 %1058
    %v1060 = vsel %vm372, %v1027, 0.0
    %1061 = vadd.xlane.f32.xlu0 %v1060
    %v1062 = vpop.xlane.xlu0 %1061
    %v1063 = vsel %vm372, %v1029, 0.0
    %1064 = vadd.xlane.f32.xlu0 %v1063
    %v1065 = vpop.xlane.xlu0 %1064
    %v1066 = vsel %vm372, %v1031, 0.0
    %1067 = vadd.xlane.f32.xlu0 %v1066
    %v1068 = vpop.xlane.xlu0 %1067
    %v1069 = vsel %vm372, %v1033, 0.0
    %1070 = vadd.xlane.f32.xlu0 %v1069
    %v1071 = vpop.xlane.xlu0 %1070
    %v1072 = vsel %vm372, %v1035, 0.0
    %1073 = vadd.xlane.f32.xlu0 %v1072
    %v1074 = vpop.xlane.xlu0 %1073
    %v1075 = vsel %vm372, %v1037, 0.0
    %1076 = vadd.xlane.f32.xlu0 %v1075
    %v1077 = vpop.xlane.xlu0 %1076
    %v1078 = vsel %vm372, %v1039, 0.0
    %1079 = vadd.xlane.f32.xlu0 %v1078
    %v1080 = vpop.xlane.xlu0 %1079
    %v1081 = vsel %vm372, %v1041, 0.0
    %1082 = vadd.xlane.f32.xlu0 %v1081
    %v1083 = vpop.xlane.xlu0 %1082
    %v1084 = vsel %vm372, %v1043, 0.0
    %1085 = vadd.xlane.f32.xlu0 %v1084
    %v1086 = vpop.xlane.xlu0 %1085
    %v1087 = vsel %vm372, %v1045, 0.0
    %1088 = vadd.xlane.f32.xlu0 %v1087
    %v1089 = vpop.xlane.xlu0 %1088
    %v1090 = vsel %vm372, %v1047, 0.0
    %1091 = vadd.xlane.f32.xlu0 %v1090
    %v1092 = vpop.xlane.xlu0 %1091
    %v1093 = vsel %vm372, %v1049, 0.0
    %1094 = vadd.xlane.f32.xlu0 %v1093
    %v1095 = vpop.xlane.xlu0 %1094
    %v1096 = vsel %vm372, %v1051, 0.0
    %1097 = vadd.xlane.f32.xlu0 %v1096
    %v1098 = vpop.xlane.xlu0 %1097
    %v1099 = vsel %vm372, %v1053, 0.0
    %1100 = vadd.xlane.f32.xlu0 %v1099
    %v1101 = vpop.xlane.xlu0 %1100
    %v1102 = vrcp.pop %v1056
    %v1103 = vrcp.pop %v1059
    %v1104 = vrcp.pop %v1062
    %v1105 = vrcp.pop %v1065
    %v1106 = vrcp.pop %v1068
    %v1107 = vrcp.pop %v1071
    %v1108 = vrcp.pop %v1074
    %v1109 = vrcp.pop %v1077
    %v1110 = vrcp.pop %v1080
    %v1111 = vrcp.pop %v1083
    %v1112 = vrcp.pop %v1086
    %v1113 = vrcp.pop %v1089
    %v1114 = vrcp.pop %v1092
    %v1115 = vrcp.pop %v1095
    %v1116 = vrcp.pop %v1098
    %v1117 = vrcp.pop %v1101
    %v1118 = vmul.f32 %v1023, %v1102
    %v1119 = vmul.f32 %v1025, %v1103
    %v1120 = vmul.f32 %v1027, %v1104
    %v1121 = vmul.f32 %v1029, %v1105
    %v1122 = vmul.f32 %v1031, %v1106
    %v1123 = vmul.f32 %v1033, %v1107
    %v1124 = vmul.f32 %v1035, %v1108
    %v1125 = vmul.f32 %v1037, %v1109
    %v1126 = vmul.f32 %v1039, %v1110
    %v1127 = vmul.f32 %v1041, %v1111
    %v1128 = vmul.f32 %v1043, %v1112
    %v1129 = vmul.f32 %v1045, %v1113
    %v1130 = vmul.f32 %v1047, %v1114
    %v1131 = vmul.f32 %v1049, %v1115
    %v1132 = vmul.f32 %v1051, %v1116
    %v1133 = vmul.f32 %v1053, %v1117
    %v1135 = vsel %vm372, %v1118, 0
    %v1138 = vsel %vm372, %v1119, 0
    %v1141 = vsel %vm372, %v1120, 0
    %v1144 = vsel %vm372, %v1121, 0
    %v1147 = vsel %vm372, %v1122, 0
    %v1150 = vsel %vm372, %v1123, 0
    %v1153 = vsel %vm372, %v1124, 0
    %v1156 = vsel %vm372, %v1125, 0
    %v1159 = vsel %vm372, %v1126, 0
    %v1162 = vsel %vm372, %v1127, 0
    %v1165 = vsel %vm372, %v1128, 0
    %v1168 = vsel %vm372, %v1129, 0
    %v1171 = vsel %vm372, %v1130, 0
    %v1174 = vsel %vm372, %v1131, 0
    %v1177 = vsel %vm372, %v1132, 0
    %v1180 = vsel %vm372, %v1133, 0
    %1182 = vmatprep.subr.mxu0 0.0
    %1183 = vmatpush1.msra.mxu0 0.0
    %1184 = vmatprep.subr.mxu0 0.0
    %1185 = vmatpush1.msra.mxu0 0.0
    %1186 = vmatprep.subr.mxu0 0.0
    %1187 = vmatpush1.msra.mxu0 0.0
    %1188 = vmatprep.subr.mxu0 0.0
    %1189 = vmatpush1.msra.mxu0 0.0
    %1190 = vmatprep.subr.mxu0 0.0
    %1191 = vmatpush1.msra.mxu0 0.0
    %1192 = vmatprep.subr.mxu0 0.0
    %1193 = vmatpush1.msra.mxu0 0.0
    %1194 = vmatprep.subr.mxu0 0.0
    %1195 = vmatpush1.msra.mxu0 0.0
    %1196 = vmatprep.subr.mxu0 0.0
    %1197 = vmatpush1.msra.mxu0 0.0
    %1198 = vmatprep.subr.mxu0 0.0
    %1199 = vmatpush1.msra.mxu0 0.0
    %1200 = vmatprep.subr.mxu0 0.0
    %1201 = vmatpush1.msra.mxu0 0.0
    %1202 = vmatprep.subr.mxu0 0.0
    %1203 = vmatpush1.msra.mxu0 0.0
    %1204 = vmatprep.subr.mxu0 0.0
    %1205 = vmatpush1.msra.mxu0 0.0
    %1206 = vmatprep.subr.mxu0 0.0
    %1207 = vmatpush1.msra.mxu0 %v734
    %1208 = vmatprep.subr.mxu0 0.0
    %1209 = vmatpush1.msra.mxu0 %v729
    %1210 = vmatprep.subr.mxu0 0.0
    %1211 = vmatpush1.msra.mxu0 %v724
    %1212 = vmatprep.subr.mxu0 0.0
    %1213 = vmatpush1.msra.mxu0 %v719
    %1214 = vmatprep.subr.mxu0 0.0
    %1215 = vmatpush2.msra.mxu0 0.0
    %1216 = vmatprep.subr.mxu0 0.0
    %1217 = vmatpush2.msra.mxu0 0.0
    %1218 = vmatprep.subr.mxu0 0.0
    %1219 = vmatpush2.msra.mxu0 0.0
    %1220 = vmatprep.subr.mxu0 0.0
    %1221 = vmatpush2.msra.mxu0 0.0
    %1222 = vmatprep.subr.mxu0 0.0
    %1223 = vmatpush2.msra.mxu0 0.0
    %1224 = vmatprep.subr.mxu0 0.0
    %1225 = vmatpush2.msra.mxu0 0.0
    %1226 = vmatprep.subr.mxu0 0.0
    %1227 = vmatpush2.msra.mxu0 0.0
    %1228 = vmatprep.subr.mxu0 0.0
    %1229 = vmatpush2.msra.mxu0 0.0
    %1230 = vmatprep.subr.mxu0 0.0
    %1231 = vmatpush2.msra.mxu0 0.0
    %1232 = vmatprep.subr.mxu0 0.0
    %1233 = vmatpush2.msra.mxu0 0.0
    %1234 = vmatprep.subr.mxu0 0.0
    %1235 = vmatpush2.msra.mxu0 0.0
    %1236 = vmatprep.subr.mxu0 0.0
    %1237 = vmatpush2.msra.mxu0 0.0
    %1238 = vmatprep.subr.mxu0 0.0
    %1239 = vmatpush2.msra.mxu0 0.0
    %1240 = vmatprep.subr.mxu0 0.0
    %1241 = vmatpush2.msra.mxu0 0.0
    %1242 = vmatprep.subr.mxu0 0.0
    %1243 = vmatpush2.msra.mxu0 0.0
    %1244 = vmatprep.subr.mxu0 0.0
    %1245 = vmatpush2.msra.mxu0 0.0
    %1246 = vmatprep.mubr.f32.mxu0 0.0
    %1247 = vmatmul.mubr.f32.gmra.mxu0 %v1135
    %v1248 = vpop.f32.mrf.mxu0
    %v1249 = vadd.f32 0.0, %v1248
    %v1250 = vpop.f32.mrf.mxu0
    %1251 = vmatprep.mubr.f32.mxu0 0.0
    %1252 = vmatmul.mubr.f32.gmra.mxu0 %v1138
    %v1253 = vpop.f32.mrf.mxu0
    %v1254 = vadd.f32 0.0, %v1253
    %v1255 = vpop.f32.mrf.mxu0
    %1256 = vmatprep.mubr.f32.mxu0 0.0
    %1257 = vmatmul.mubr.f32.gmra.mxu0 %v1141
    %v1258 = vpop.f32.mrf.mxu0
    %v1259 = vadd.f32 0.0, %v1258
    %v1260 = vpop.f32.mrf.mxu0
    %1261 = vmatprep.mubr.f32.mxu0 0.0
    %1262 = vmatmul.mubr.f32.gmra.mxu0 %v1144
    %v1263 = vpop.f32.mrf.mxu0
    %v1264 = vadd.f32 0.0, %v1263
    %v1265 = vpop.f32.mrf.mxu0
    %1266 = vmatprep.mubr.f32.mxu0 0.0
    %1267 = vmatmul.mubr.f32.gmra.mxu0 %v1147
    %v1268 = vpop.f32.mrf.mxu0
    %v1269 = vadd.f32 0.0, %v1268
    %v1270 = vpop.f32.mrf.mxu0
    %1271 = vmatprep.mubr.f32.mxu0 0.0
    %1272 = vmatmul.mubr.f32.gmra.mxu0 %v1150
    %v1273 = vpop.f32.mrf.mxu0
    %v1274 = vadd.f32 0.0, %v1273
    %v1275 = vpop.f32.mrf.mxu0
    %1276 = vmatprep.mubr.f32.mxu0 0.0
    %1277 = vmatmul.mubr.f32.gmra.mxu0 %v1153
    %v1278 = vpop.f32.mrf.mxu0
    %v1279 = vadd.f32 0.0, %v1278
    %v1280 = vpop.f32.mrf.mxu0
    %1281 = vmatprep.mubr.f32.mxu0 0.0
    %1282 = vmatmul.mubr.f32.gmra.mxu0 %v1156
    %v1283 = vpop.f32.mrf.mxu0
    %v1284 = vadd.f32 0.0, %v1283
    %v1285 = vpop.f32.mrf.mxu0
    %1286 = vmatprep.mubr.f32.mxu0 0.0
    %1287 = vmatmul.mubr.f32.gmra.mxu0 %v1159
    %v1288 = vpop.f32.mrf.mxu0
    %v1289 = vadd.f32 0.0, %v1288
    %v1290 = vpop.f32.mrf.mxu0
    %1291 = vmatprep.mubr.f32.mxu0 0.0
    %1292 = vmatmul.mubr.f32.gmra.mxu0 %v1162
    %v1293 = vpop.f32.mrf.mxu0
    %v1294 = vadd.f32 0.0, %v1293
    %v1295 = vpop.f32.mrf.mxu0
    %1296 = vmatprep.mubr.f32.mxu0 0.0
    %1297 = vmatmul.mubr.f32.gmra.mxu0 %v1165
    %v1298 = vpop.f32.mrf.mxu0
    %v1299 = vadd.f32 0.0, %v1298
    %v1300 = vpop.f32.mrf.mxu0
    %1301 = vmatprep.mubr.f32.mxu0 0.0
    %1302 = vmatmul.mubr.f32.gmra.mxu0 %v1168
    %v1303 = vpop.f32.mrf.mxu0
    %v1304 = vadd.f32 0.0, %v1303
    %v1305 = vpop.f32.mrf.mxu0
    %1306 = vmatprep.mubr.f32.mxu0 0.0
    %1307 = vmatmul.mubr.f32.gmra.mxu0 %v1171
    %v1308 = vpop.f32.mrf.mxu0
    %v1309 = vadd.f32 0.0, %v1308
    %v1310 = vpop.f32.mrf.mxu0
    %1311 = vmatprep.mubr.f32.mxu0 0.0
    %1312 = vmatmul.mubr.f32.gmra.mxu0 %v1174
    %v1313 = vpop.f32.mrf.mxu0
    %v1314 = vadd.f32 0.0, %v1313
    %v1315 = vpop.f32.mrf.mxu0
    %1316 = vmatprep.mubr.f32.mxu0 0.0
    %1317 = vmatmul.mubr.f32.gmra.mxu0 %v1177
    %v1318 = vpop.f32.mrf.mxu0
    %v1319 = vadd.f32 0.0, %v1318
    %v1320 = vpop.f32.mrf.mxu0
    %1321 = vmatprep.mubr.f32.mxu0 0.0
    %1322 = vmatmul.mubr.f32.gmra.mxu0 %v1180
    %v1323 = vpop.f32.mrf.mxu0
    %v1324 = vadd.f32 0.0, %v1323
    %v1325 = vpop.f32.mrf.mxu0
    %1326 = vdwg.mxu0
    %v1327 = vmul.f32 %v1249, %v75
    %v1328 = vmul.f32 %v1254, %v76
    %v1329 = vmul.f32 %v1259, %v77
    %v1330 = vmul.f32 %v1264, %v78
    %v1331 = vmul.f32 %v1269, %v79
    %v1332 = vmul.f32 %v1274, %v80
    %v1333 = vmul.f32 %v1279, %v81
    %v1334 = vmul.f32 %v1284, %v82
    %v1335 = vmul.f32 %v1289, %v83
    %v1336 = vmul.f32 %v1294, %v84
    %v1337 = vmul.f32 %v1299, %v85
    %v1338 = vmul.f32 %v1304, %v86
    %v1339 = vmul.f32 %v1309, %v87
    %v1340 = vmul.f32 %v1314, %v88
    %v1341 = vmul.f32 %v1319, %v89
    %v1342 = vmul.f32 %v1324, %v90
    %v1343 = vadd.f32 %v1327, %v1331
    %v1344 = vadd.f32 %v1328, %v1332
    %v1345 = vadd.f32 %v1329, %v1333
    %v1346 = vadd.f32 %v1330, %v1334
    %v1347 = vadd.f32 %v1343, %v1335
    %v1348 = vadd.f32 %v1344, %v1336
    %v1349 = vadd.f32 %v1345, %v1337
    %v1350 = vadd.f32 %v1346, %v1338
    %v1351 = vadd.f32 %v1347, %v1339
    %v1352 = vadd.f32 %v1348, %v1340
    %v1353 = vadd.f32 %v1349, %v1341
    %v1354 = vadd.f32 %v1350, %v1342
    %s1355 = scalar_lea.vmem %s6, 96
    %v1356 = vld [vmem:[%s1355] sm:$0xff]
    %v1357 = vld [vmem:[%s1355 + $0x8] sm:$0xff]
    %v1358 = vld [vmem:[%s1355 + $0x10] sm:$0xff]
    %v1359 = vld [vmem:[%s1355 + $0x18] sm:$0xff]
    %v1360 = vlaneseq
    %v1361 = vshrl.u32 %v1360, 7
    %v1362 = vsub.s32 3, %v1361
    %v1363 = vrot.slane %v442, %v1362
    %v1365 = vsel %vm372, %v1351, 0
    %v1368 = vsel %vm372, %v1352, 0
    %v1371 = vsel %vm372, %v1353, 0
    %v1374 = vsel %vm372, %v1354, 0
    %1376 = vmatprep.subr.mxu0 0.0
    %1377 = vmatpush1.msra.mxu0 0.0
    %1378 = vmatprep.subr.mxu0 0.0
    %1379 = vmatpush1.msra.mxu0 0.0
    %1380 = vmatprep.subr.mxu0 0.0
    %1381 = vmatpush1.msra.mxu0 0.0
    %1382 = vmatprep.subr.mxu0 0.0
    %1383 = vmatpush1.msra.mxu0 0.0
    %1384 = vmatprep.subr.mxu0 0.0
    %1385 = vmatpush1.msra.mxu0 0.0
    %1386 = vmatprep.subr.mxu0 0.0
    %1387 = vmatpush1.msra.mxu0 0.0
    %1388 = vmatprep.subr.mxu0 0.0
    %1389 = vmatpush1.msra.mxu0 0.0
    %1390 = vmatprep.subr.mxu0 0.0
    %1391 = vmatpush1.msra.mxu0 0.0
    %1392 = vmatprep.subr.mxu0 0.0
    %1393 = vmatpush1.msra.mxu0 0.0
    %1394 = vmatprep.subr.mxu0 0.0
    %1395 = vmatpush1.msra.mxu0 0.0
    %1396 = vmatprep.subr.mxu0 0.0
    %1397 = vmatpush1.msra.mxu0 0.0
    %1398 = vmatprep.subr.mxu0 0.0
    %1399 = vmatpush1.msra.mxu0 0.0
    %1400 = vmatprep.subr.mxu0 0.0
    %1401 = vmatpush1.msra.mxu0 %v1359
    %1402 = vmatprep.subr.mxu0 0.0
    %1403 = vmatpush1.msra.mxu0 %v1358
    %1404 = vmatprep.subr.mxu0 0.0
    %1405 = vmatpush1.msra.mxu0 %v1357
    %1406 = vmatprep.subr.mxu0 0.0
    %1407 = vmatpush1.msra.mxu0 %v1356
    %1408 = vmatprep.subr.mxu0 0.0
    %1409 = vmatpush2.msra.mxu0 0.0
    %1410 = vmatprep.subr.mxu0 0.0
    %1411 = vmatpush2.msra.mxu0 0.0
    %1412 = vmatprep.subr.mxu0 0.0
    %1413 = vmatpush2.msra.mxu0 0.0
    %1414 = vmatprep.subr.mxu0 0.0
    %1415 = vmatpush2.msra.mxu0 0.0
    %1416 = vmatprep.subr.mxu0 0.0
    %1417 = vmatpush2.msra.mxu0 0.0
    %1418 = vmatprep.subr.mxu0 0.0
    %1419 = vmatpush2.msra.mxu0 0.0
    %1420 = vmatprep.subr.mxu0 0.0
    %1421 = vmatpush2.msra.mxu0 0.0
    %1422 = vmatprep.subr.mxu0 0.0
    %1423 = vmatpush2.msra.mxu0 0.0
    %1424 = vmatprep.subr.mxu0 0.0
    %1425 = vmatpush2.msra.mxu0 0.0
    %1426 = vmatprep.subr.mxu0 0.0
    %1427 = vmatpush2.msra.mxu0 0.0
    %1428 = vmatprep.subr.mxu0 0.0
    %1429 = vmatpush2.msra.mxu0 0.0
    %1430 = vmatprep.subr.mxu0 0.0
    %1431 = vmatpush2.msra.mxu0 0.0
    %1432 = vmatprep.subr.mxu0 0.0
    %1433 = vmatpush2.msra.mxu0 0.0
    %1434 = vmatprep.subr.mxu0 0.0
    %1435 = vmatpush2.msra.mxu0 0.0
    %1436 = vmatprep.subr.mxu0 0.0
    %1437 = vmatpush2.msra.mxu0 0.0
    %1438 = vmatprep.subr.mxu0 0.0
    %1439 = vmatpush2.msra.mxu0 0.0
    %1440 = vmatprep.mubr.f32.mxu0 0.0
    %1441 = vmatmul.mubr.f32.gmra.mxu0 %v1365
    %v1442 = vpop.f32.mrf.mxu0
    %v1443 = vadd.f32 %v1363, %v1442
    %v1444 = vpop.f32.mrf.mxu0
    %1445 = vmatprep.mubr.f32.mxu0 0.0
    %1446 = vmatmul.mubr.f32.gmra.mxu0 %v1368
    %v1447 = vpop.f32.mrf.mxu0
    %v1448 = vadd.f32 %v1363, %v1447
    %v1449 = vpop.f32.mrf.mxu0
    %1450 = vmatprep.mubr.f32.mxu0 0.0
    %1451 = vmatmul.mubr.f32.gmra.mxu0 %v1371
    %v1452 = vpop.f32.mrf.mxu0
    %v1453 = vadd.f32 %v1363, %v1452
    %v1454 = vpop.f32.mrf.mxu0
    %1455 = vmatprep.mubr.f32.mxu0 0.0
    %1456 = vmatmul.mubr.f32.gmra.mxu0 %v1374
    %v1457 = vpop.f32.mrf.mxu0
    %v1458 = vadd.f32 %v1363, %v1457
    %v1459 = vpop.f32.mrf.mxu0
    %1460 = vdwg.mxu0
    %v1461 = vadd.f32 %v438, %v1443
    %v1462 = vadd.f32 %v439, %v1448
    %v1463 = vadd.f32 %v440, %v1453
    %v1464 = vadd.f32 %v441, %v1458
    %v1465 = vsel %vm372, %v1461, 0.0
    %1466 = vadd.xlane.f32.xlu0 %v1465
    %v1467 = vpop.xlane.xlu0 %1466
    %v1468 = vsel %vm372, %v1462, 0.0
    %1469 = vadd.xlane.f32.xlu0 %v1468
    %v1470 = vpop.xlane.xlu0 %1469
    %v1471 = vsel %vm372, %v1463, 0.0
    %1472 = vadd.xlane.f32.xlu0 %v1471
    %v1473 = vpop.xlane.xlu0 %1472
    %v1474 = vsel %vm372, %v1464, 0.0
    %1475 = vadd.xlane.f32.xlu0 %v1474
    %v1476 = vpop.xlane.xlu0 %1475
    %v1477 = vmul.f32 %v1467, %v385
    %v1478 = vmul.f32 %v1470, %v385
    %v1479 = vmul.f32 %v1473, %v385
    %v1480 = vmul.f32 %v1476, %v385
    %v1481 = vsub.f32 %v1461, %v1477
    %v1482 = vsub.f32 %v1462, %v1478
    %v1483 = vsub.f32 %v1463, %v1479
    %v1484 = vsub.f32 %v1464, %v1480
    %v1485 = vmul.f32 %v1481, %v1481
    %v1486 = vmul.f32 %v1482, %v1482
    %v1487 = vmul.f32 %v1483, %v1483
    %v1488 = vmul.f32 %v1484, %v1484
    %v1489 = vsel %vm372, %v1485, 0.0
    %1490 = vadd.xlane.f32.xlu0 %v1489
    %v1491 = vpop.xlane.xlu0 %1490
    %v1492 = vsel %vm372, %v1486, 0.0
    %1493 = vadd.xlane.f32.xlu0 %v1492
    %v1494 = vpop.xlane.xlu0 %1493
    %v1495 = vsel %vm372, %v1487, 0.0
    %1496 = vadd.xlane.f32.xlu0 %v1495
    %v1497 = vpop.xlane.xlu0 %1496
    %v1498 = vsel %vm372, %v1488, 0.0
    %1499 = vadd.xlane.f32.xlu0 %v1498
    %v1500 = vpop.xlane.xlu0 %1499
    %v1501 = vmul.f32 %v1491, %v385
    %v1502 = vmul.f32 %v1494, %v385
    %v1503 = vmul.f32 %v1497, %v385
    %v1504 = vmul.f32 %v1500, %v385
    %v1505 = vadd.f32 %v1501, 1e-05
    %v1506 = vadd.f32 %v1502, 1e-05
    %v1507 = vadd.f32 %v1503, 1e-05
    %v1508 = vadd.f32 %v1504, 1e-05
    %v1509 = vrsqrt.pop %v1505
    %v1510 = vrsqrt.pop %v1506
    %v1511 = vrsqrt.pop %v1507
    %v1512 = vrsqrt.pop %v1508
    %v1513 = vmul.f32 %v1481, %v1509
    %v1514 = vmul.f32 %v1482, %v1510
    %v1515 = vmul.f32 %v1483, %v1511
    %v1516 = vmul.f32 %v1484, %v1512
    %v1517 = vlaneseq
    %v1518 = vshrl.u32 %v1517, 7
    %v1519 = vsub.s32 4, %v1518
    %v1520 = vrot.slane %v442, %v1519
    %v1521 = vmul.f32 %v1513, %v1520
    %v1522 = vmul.f32 %v1514, %v1520
    %v1523 = vmul.f32 %v1515, %v1520
    %v1524 = vmul.f32 %v1516, %v1520
    %v1525 = vlaneseq
    %v1526 = vshrl.u32 %v1525, 7
    %v1527 = vsub.s32 5, %v1526
    %v1528 = vrot.slane %v442, %v1527
    %v1529 = vadd.f32 %v1521, %v1528
    %v1530 = vadd.f32 %v1522, %v1528
    %v1531 = vadd.f32 %v1523, %v1528
    %v1532 = vadd.f32 %v1524, %v1528
    %v1533 = vld [vmem:[%s7] sm:$0xff]
    %v1534 = vld [vmem:[%s7 + $0x8] sm:$0xff]
    %v1535 = vld [vmem:[%s7 + $0x10] sm:$0xff]
    %v1536 = vld [vmem:[%s7 + $0x18] sm:$0xff]
    %v1537 = vld [vmem:[%s10] sm:$0x1]
    %v1538 = vlaneseq
    %v1539 = vshrl.u32 %v1538, 7
    %v1540 = vsub.s32 0, %v1539
    %v1541 = vrot.slane %v1537, %v1540
    %v1543 = vsel %vm372, %v1529, 0
    %v1546 = vsel %vm372, %v1530, 0
    %v1549 = vsel %vm372, %v1531, 0
    %v1552 = vsel %vm372, %v1532, 0
    %1554 = vmatprep.subr.mxu0 0.0
    %1555 = vmatpush1.msra.mxu0 0.0
    %1556 = vmatprep.subr.mxu0 0.0
    %1557 = vmatpush1.msra.mxu0 0.0
    %1558 = vmatprep.subr.mxu0 0.0
    %1559 = vmatpush1.msra.mxu0 0.0
    %1560 = vmatprep.subr.mxu0 0.0
    %1561 = vmatpush1.msra.mxu0 0.0
    %1562 = vmatprep.subr.mxu0 0.0
    %1563 = vmatpush1.msra.mxu0 0.0
    %1564 = vmatprep.subr.mxu0 0.0
    %1565 = vmatpush1.msra.mxu0 0.0
    %1566 = vmatprep.subr.mxu0 0.0
    %1567 = vmatpush1.msra.mxu0 0.0
    %1568 = vmatprep.subr.mxu0 0.0
    %1569 = vmatpush1.msra.mxu0 0.0
    %1570 = vmatprep.subr.mxu0 0.0
    %1571 = vmatpush1.msra.mxu0 0.0
    %1572 = vmatprep.subr.mxu0 0.0
    %1573 = vmatpush1.msra.mxu0 0.0
    %1574 = vmatprep.subr.mxu0 0.0
    %1575 = vmatpush1.msra.mxu0 0.0
    %1576 = vmatprep.subr.mxu0 0.0
    %1577 = vmatpush1.msra.mxu0 0.0
    %1578 = vmatprep.subr.mxu0 0.0
    %1579 = vmatpush1.msra.mxu0 %v1536
    %1580 = vmatprep.subr.mxu0 0.0
    %1581 = vmatpush1.msra.mxu0 %v1535
    %1582 = vmatprep.subr.mxu0 0.0
    %1583 = vmatpush1.msra.mxu0 %v1534
    %1584 = vmatprep.subr.mxu0 0.0
    %1585 = vmatpush1.msra.mxu0 %v1533
    %1586 = vmatprep.subr.mxu0 0.0
    %1587 = vmatpush2.msra.mxu0 0.0
    %1588 = vmatprep.subr.mxu0 0.0
    %1589 = vmatpush2.msra.mxu0 0.0
    %1590 = vmatprep.subr.mxu0 0.0
    %1591 = vmatpush2.msra.mxu0 0.0
    %1592 = vmatprep.subr.mxu0 0.0
    %1593 = vmatpush2.msra.mxu0 0.0
    %1594 = vmatprep.subr.mxu0 0.0
    %1595 = vmatpush2.msra.mxu0 0.0
    %1596 = vmatprep.subr.mxu0 0.0
    %1597 = vmatpush2.msra.mxu0 0.0
    %1598 = vmatprep.subr.mxu0 0.0
    %1599 = vmatpush2.msra.mxu0 0.0
    %1600 = vmatprep.subr.mxu0 0.0
    %1601 = vmatpush2.msra.mxu0 0.0
    %1602 = vmatprep.subr.mxu0 0.0
    %1603 = vmatpush2.msra.mxu0 0.0
    %1604 = vmatprep.subr.mxu0 0.0
    %1605 = vmatpush2.msra.mxu0 0.0
    %1606 = vmatprep.subr.mxu0 0.0
    %1607 = vmatpush2.msra.mxu0 0.0
    %1608 = vmatprep.subr.mxu0 0.0
    %1609 = vmatpush2.msra.mxu0 0.0
    %1610 = vmatprep.subr.mxu0 0.0
    %1611 = vmatpush2.msra.mxu0 0.0
    %1612 = vmatprep.subr.mxu0 0.0
    %1613 = vmatpush2.msra.mxu0 0.0
    %1614 = vmatprep.subr.mxu0 0.0
    %1615 = vmatpush2.msra.mxu0 0.0
    %1616 = vmatprep.subr.mxu0 0.0
    %1617 = vmatpush2.msra.mxu0 0.0
    %1618 = vmatprep.mubr.f32.mxu0 0.0
    %1619 = vmatmul.mubr.f32.gmra.mxu0 %v1543
    %v1620 = vpop.f32.mrf.mxu0
    %v1621 = vadd.f32 %v1541, %v1620
    %v1622 = vpop.f32.mrf.mxu0
    %1623 = vmatprep.mubr.f32.mxu0 0.0
    %1624 = vmatmul.mubr.f32.gmra.mxu0 %v1546
    %v1625 = vpop.f32.mrf.mxu0
    %v1626 = vadd.f32 %v1541, %v1625
    %v1627 = vpop.f32.mrf.mxu0
    %1628 = vmatprep.mubr.f32.mxu0 0.0
    %1629 = vmatmul.mubr.f32.gmra.mxu0 %v1549
    %v1630 = vpop.f32.mrf.mxu0
    %v1631 = vadd.f32 %v1541, %v1630
    %v1632 = vpop.f32.mrf.mxu0
    %1633 = vmatprep.mubr.f32.mxu0 0.0
    %1634 = vmatmul.mubr.f32.gmra.mxu0 %v1552
    %v1635 = vpop.f32.mrf.mxu0
    %v1636 = vadd.f32 %v1541, %v1635
    %v1637 = vpop.f32.mrf.mxu0
    %1638 = vdwg.mxu0
    %v1639 = vmul.f32 %v1621, %v1621
    %v1640 = vmul.f32 %v1626, %v1626
    %v1641 = vmul.f32 %v1631, %v1631
    %v1642 = vmul.f32 %v1636, %v1636
    %v1643 = vmul.f32 %v1621, %v1639
    %v1644 = vmul.f32 %v1626, %v1640
    %v1645 = vmul.f32 %v1631, %v1641
    %v1646 = vmul.f32 %v1636, %v1642
    %v1647 = vmul.f32 %v1643, 0.044715
    %v1648 = vmul.f32 %v1644, 0.044715
    %v1649 = vmul.f32 %v1645, 0.044715
    %v1650 = vmul.f32 %v1646, 0.044715
    %v1651 = vadd.f32 %v1621, %v1647
    %v1652 = vadd.f32 %v1626, %v1648
    %v1653 = vadd.f32 %v1631, %v1649
    %v1654 = vadd.f32 %v1636, %v1650
    %v1655 = vmul.f32 %v1651, 0.7978846
    %v1656 = vmul.f32 %v1652, 0.7978846
    %v1657 = vmul.f32 %v1653, 0.7978846
    %v1658 = vmul.f32 %v1654, 0.7978846
    %v1659 = vtanh.pop %v1655
    %v1660 = vtanh.pop %v1656
    %v1661 = vtanh.pop %v1657
    %v1662 = vtanh.pop %v1658
    %v1663 = vadd.f32 %v1659, 1.0
    %v1664 = vadd.f32 %v1660, 1.0
    %v1665 = vadd.f32 %v1661, 1.0
    %v1666 = vadd.f32 %v1662, 1.0
    %v1667 = vmul.f32 %v1663, 0.5
    %v1668 = vmul.f32 %v1664, 0.5
    %v1669 = vmul.f32 %v1665, 0.5
    %v1670 = vmul.f32 %v1666, 0.5
    %v1671 = vmul.f32 %v1621, %v1667
    %v1672 = vmul.f32 %v1626, %v1668
    %v1673 = vmul.f32 %v1631, %v1669
    %v1674 = vmul.f32 %v1636, %v1670
    %v1675 = vld [vmem:[%s8] sm:$0xff]
    %v1676 = vld [vmem:[%s8 + $0x8] sm:$0xff]
    %v1677 = vld [vmem:[%s8 + $0x10] sm:$0xff]
    %v1678 = vld [vmem:[%s8 + $0x18] sm:$0xff]
    %v1679 = vld [vmem:[%s8 + $0x20] sm:$0xff]
    %v1680 = vld [vmem:[%s8 + $0x28] sm:$0xff]
    %v1681 = vld [vmem:[%s8 + $0x30] sm:$0xff]
    %v1682 = vld [vmem:[%s8 + $0x38] sm:$0xff]
    %v1683 = vlaneseq
    %v1684 = vshrl.u32 %v1683, 7
    %v1685 = vsub.s32 6, %v1684
    %v1686 = vrot.slane %v442, %v1685
    %vm1687 = vcmask 523264
    %v1689 = vsel %vm1687, %v1671, 0
    %v1692 = vsel %vm1687, %v1672, 0
    %v1695 = vsel %vm1687, %v1673, 0
    %v1698 = vsel %vm1687, %v1674, 0
    %1700 = vmatprep.subr.mxu0 0.0
    %1701 = vmatpush1.msra.mxu0 0.0
    %1702 = vmatprep.subr.mxu0 0.0
    %1703 = vmatpush1.msra.mxu0 0.0
    %1704 = vmatprep.subr.mxu0 0.0
    %1705 = vmatpush1.msra.mxu0 0.0
    %1706 = vmatprep.subr.mxu0 0.0
    %1707 = vmatpush1.msra.mxu0 0.0
    %1708 = vmatprep.subr.mxu0 0.0
    %1709 = vmatpush1.msra.mxu0 0.0
    %1710 = vmatprep.subr.mxu0 0.0
    %1711 = vmatpush1.msra.mxu0 0.0
    %1712 = vmatprep.subr.mxu0 0.0
    %1713 = vmatpush1.msra.mxu0 0.0
    %1714 = vmatprep.subr.mxu0 0.0
    %1715 = vmatpush1.msra.mxu0 0.0
    %1716 = vmatprep.subr.mxu0 0.0
    %1717 = vmatpush1.msra.mxu0 %v1682
    %1718 = vmatprep.subr.mxu0 0.0
    %1719 = vmatpush1.msra.mxu0 %v1681
    %1720 = vmatprep.subr.mxu0 0.0
    %1721 = vmatpush1.msra.mxu0 %v1680
    %1722 = vmatprep.subr.mxu0 0.0
    %1723 = vmatpush1.msra.mxu0 %v1679
    %1724 = vmatprep.subr.mxu0 0.0
    %1725 = vmatpush1.msra.mxu0 %v1678
    %1726 = vmatprep.subr.mxu0 0.0
    %1727 = vmatpush1.msra.mxu0 %v1677
    %1728 = vmatprep.subr.mxu0 0.0
    %1729 = vmatpush1.msra.mxu0 %v1676
    %1730 = vmatprep.subr.mxu0 0.0
    %1731 = vmatpush1.msra.mxu0 %v1675
    %1732 = vmatprep.subr.mxu0 0.0
    %1733 = vmatpush2.msra.mxu0 0.0
    %1734 = vmatprep.subr.mxu0 0.0
    %1735 = vmatpush2.msra.mxu0 0.0
    %1736 = vmatprep.subr.mxu0 0.0
    %1737 = vmatpush2.msra.mxu0 0.0
    %1738 = vmatprep.subr.mxu0 0.0
    %1739 = vmatpush2.msra.mxu0 0.0
    %1740 = vmatprep.subr.mxu0 0.0
    %1741 = vmatpush2.msra.mxu0 0.0
    %1742 = vmatprep.subr.mxu0 0.0
    %1743 = vmatpush2.msra.mxu0 0.0
    %1744 = vmatprep.subr.mxu0 0.0
    %1745 = vmatpush2.msra.mxu0 0.0
    %1746 = vmatprep.subr.mxu0 0.0
    %1747 = vmatpush2.msra.mxu0 0.0
    %1748 = vmatprep.subr.mxu0 0.0
    %1749 = vmatpush2.msra.mxu0 0.0
    %1750 = vmatprep.subr.mxu0 0.0
    %1751 = vmatpush2.msra.mxu0 0.0
    %1752 = vmatprep.subr.mxu0 0.0
    %1753 = vmatpush2.msra.mxu0 0.0
    %1754 = vmatprep.subr.mxu0 0.0
    %1755 = vmatpush2.msra.mxu0 0.0
    %1756 = vmatprep.subr.mxu0 0.0
    %1757 = vmatpush2.msra.mxu0 0.0
    %1758 = vmatprep.subr.mxu0 0.0
    %1759 = vmatpush2.msra.mxu0 0.0
    %1760 = vmatprep.subr.mxu0 0.0
    %1761 = vmatpush2.msra.mxu0 0.0
    %1762 = vmatprep.subr.mxu0 0.0
    %1763 = vmatpush2.msra.mxu0 0.0
    %1764 = vmatprep.mubr.f32.mxu0 0.0
    %1765 = vmatmul.mubr.f32.gmra.mxu0 %v1689
    %v1766 = vpop.f32.mrf.mxu0
    %v1767 = vadd.f32 %v1686, %v1766
    %v1768 = vpop.f32.mrf.mxu0
    %1769 = vmatprep.mubr.f32.mxu0 0.0
    %1770 = vmatmul.mubr.f32.gmra.mxu0 %v1692
    %v1771 = vpop.f32.mrf.mxu0
    %v1772 = vadd.f32 %v1686, %v1771
    %v1773 = vpop.f32.mrf.mxu0
    %1774 = vmatprep.mubr.f32.mxu0 0.0
    %1775 = vmatmul.mubr.f32.gmra.mxu0 %v1695
    %v1776 = vpop.f32.mrf.mxu0
    %v1777 = vadd.f32 %v1686, %v1776
    %v1778 = vpop.f32.mrf.mxu0
    %1779 = vmatprep.mubr.f32.mxu0 0.0
    %1780 = vmatmul.mubr.f32.gmra.mxu0 %v1698
    %v1781 = vpop.f32.mrf.mxu0
    %v1782 = vadd.f32 %v1686, %v1781
    %v1783 = vpop.f32.mrf.mxu0
    %1784 = vdwg.mxu0
    %v1785 = vadd.f32 %v1529, %v1767
    %v1786 = vadd.f32 %v1530, %v1772
    %v1787 = vadd.f32 %v1531, %v1777
    %v1788 = vadd.f32 %v1532, %v1782
    %v1789 = vsel %vm372, %v1785, 0.0
    %1790 = vadd.xlane.f32.xlu0 %v1789
    %v1791 = vpop.xlane.xlu0 %1790
    %v1792 = vsel %vm372, %v1786, 0.0
    %1793 = vadd.xlane.f32.xlu0 %v1792
    %v1794 = vpop.xlane.xlu0 %1793
    %v1795 = vsel %vm372, %v1787, 0.0
    %1796 = vadd.xlane.f32.xlu0 %v1795
    %v1797 = vpop.xlane.xlu0 %1796
    %v1798 = vsel %vm372, %v1788, 0.0
    %1799 = vadd.xlane.f32.xlu0 %v1798
    %v1800 = vpop.xlane.xlu0 %1799
    %v1801 = vmul.f32 %v1791, %v385
    %v1802 = vmul.f32 %v1794, %v385
    %v1803 = vmul.f32 %v1797, %v385
    %v1804 = vmul.f32 %v1800, %v385
    %v1805 = vsub.f32 %v1785, %v1801
    %v1806 = vsub.f32 %v1786, %v1802
    %v1807 = vsub.f32 %v1787, %v1803
    %v1808 = vsub.f32 %v1788, %v1804
    %v1809 = vmul.f32 %v1805, %v1805
    %v1810 = vmul.f32 %v1806, %v1806
    %v1811 = vmul.f32 %v1807, %v1807
    %v1812 = vmul.f32 %v1808, %v1808
    %v1813 = vsel %vm372, %v1809, 0.0
    %1814 = vadd.xlane.f32.xlu0 %v1813
    %v1815 = vpop.xlane.xlu0 %1814
    %v1816 = vsel %vm372, %v1810, 0.0
    %1817 = vadd.xlane.f32.xlu0 %v1816
    %v1818 = vpop.xlane.xlu0 %1817
    %v1819 = vsel %vm372, %v1811, 0.0
    %1820 = vadd.xlane.f32.xlu0 %v1819
    %v1821 = vpop.xlane.xlu0 %1820
    %v1822 = vsel %vm372, %v1812, 0.0
    %1823 = vadd.xlane.f32.xlu0 %v1822
    %v1824 = vpop.xlane.xlu0 %1823
    %v1825 = vmul.f32 %v1815, %v385
    %v1826 = vmul.f32 %v1818, %v385
    %v1827 = vmul.f32 %v1821, %v385
    %v1828 = vmul.f32 %v1824, %v385
    %v1829 = vadd.f32 %v1825, 1e-05
    %v1830 = vadd.f32 %v1826, 1e-05
    %v1831 = vadd.f32 %v1827, 1e-05
    %v1832 = vadd.f32 %v1828, 1e-05
    %v1833 = vrsqrt.pop %v1829
    %v1834 = vrsqrt.pop %v1830
    %v1835 = vrsqrt.pop %v1831
    %v1836 = vrsqrt.pop %v1832
    %v1837 = vmul.f32 %v1805, %v1833
    %v1838 = vmul.f32 %v1806, %v1834
    %v1839 = vmul.f32 %v1807, %v1835
    %v1840 = vmul.f32 %v1808, %v1836
    %v1841 = vlaneseq
    %v1842 = vshrl.u32 %v1841, 7
    %v1843 = vsub.s32 7, %v1842
    %v1844 = vrot.slane %v442, %v1843
    %v1845 = vmul.f32 %v1837, %v1844
    %v1846 = vmul.f32 %v1838, %v1844
    %v1847 = vmul.f32 %v1839, %v1844
    %v1848 = vmul.f32 %v1840, %v1844
    %v1849 = vlaneseq
    %v1850 = vshrl.u32 %v1849, 7
    %v1851 = vsub.s32 0, %v1850
    %v1852 = vrot.slane %v443, %v1851
    %v1853 = vadd.f32 %v1845, %v1852
    %v1854 = vadd.f32 %v1846, %v1852
    %v1855 = vadd.f32 %v1847, %v1852
    %v1856 = vadd.f32 %v1848, %v1852
    %s1857 = scalar_lea.vmem %s9, 16
    %v1858 = vld [vmem:[%s1857] sm:$0xff]
    %v1859 = vld [vmem:[%s1857 + $0x8] sm:$0x1]
    %s1860 = scalar_lea.vmem %s6, 128
    %v1861 = vld [vmem:[%s1860] sm:$0xff]
    %v1862 = vld [vmem:[%s1860 + $0x8] sm:$0xff]
    %v1863 = vld [vmem:[%s1860 + $0x10] sm:$0xff]
    %v1864 = vld [vmem:[%s1860 + $0x18] sm:$0xff]
    %v1865 = vlaneseq
    %v1866 = vshrl.u32 %v1865, 7
    %v1867 = vsub.s32 0, %v1866
    %v1868 = vrot.slane %v1858, %v1867
    %v1870 = vsel %vm372, %v1853, 0
    %v1873 = vsel %vm372, %v1854, 0
    %v1876 = vsel %vm372, %v1855, 0
    %v1879 = vsel %vm372, %v1856, 0
    %1881 = vmatprep.subr.mxu0 0.0
    %1882 = vmatpush1.msra.mxu0 0.0
    %1883 = vmatprep.subr.mxu0 0.0
    %1884 = vmatpush1.msra.mxu0 0.0
    %1885 = vmatprep.subr.mxu0 0.0
    %1886 = vmatpush1.msra.mxu0 0.0
    %1887 = vmatprep.subr.mxu0 0.0
    %1888 = vmatpush1.msra.mxu0 0.0
    %1889 = vmatprep.subr.mxu0 0.0
    %1890 = vmatpush1.msra.mxu0 0.0
    %1891 = vmatprep.subr.mxu0 0.0
    %1892 = vmatpush1.msra.mxu0 0.0
    %1893 = vmatprep.subr.mxu0 0.0
    %1894 = vmatpush1.msra.mxu0 0.0
    %1895 = vmatprep.subr.mxu0 0.0
    %1896 = vmatpush1.msra.mxu0 0.0
    %1897 = vmatprep.subr.mxu0 0.0
    %1898 = vmatpush1.msra.mxu0 0.0
    %1899 = vmatprep.subr.mxu0 0.0
    %1900 = vmatpush1.msra.mxu0 0.0
    %1901 = vmatprep.subr.mxu0 0.0
    %1902 = vmatpush1.msra.mxu0 0.0
    %1903 = vmatprep.subr.mxu0 0.0
    %1904 = vmatpush1.msra.mxu0 0.0
    %1905 = vmatprep.subr.mxu0 0.0
    %1906 = vmatpush1.msra.mxu0 %v1864
    %1907 = vmatprep.subr.mxu0 0.0
    %1908 = vmatpush1.msra.mxu0 %v1863
    %1909 = vmatprep.subr.mxu0 0.0
    %1910 = vmatpush1.msra.mxu0 %v1862
    %1911 = vmatprep.subr.mxu0 0.0
    %1912 = vmatpush1.msra.mxu0 %v1861
    %1913 = vmatprep.subr.mxu0 0.0
    %1914 = vmatpush2.msra.mxu0 0.0
    %1915 = vmatprep.subr.mxu0 0.0
    %1916 = vmatpush2.msra.mxu0 0.0
    %1917 = vmatprep.subr.mxu0 0.0
    %1918 = vmatpush2.msra.mxu0 0.0
    %1919 = vmatprep.subr.mxu0 0.0
    %1920 = vmatpush2.msra.mxu0 0.0
    %1921 = vmatprep.subr.mxu0 0.0
    %1922 = vmatpush2.msra.mxu0 0.0
    %1923 = vmatprep.subr.mxu0 0.0
    %1924 = vmatpush2.msra.mxu0 0.0
    %1925 = vmatprep.subr.mxu0 0.0
    %1926 = vmatpush2.msra.mxu0 0.0
    %1927 = vmatprep.subr.mxu0 0.0
    %1928 = vmatpush2.msra.mxu0 0.0
    %1929 = vmatprep.subr.mxu0 0.0
    %1930 = vmatpush2.msra.mxu0 0.0
    %1931 = vmatprep.subr.mxu0 0.0
    %1932 = vmatpush2.msra.mxu0 0.0
    %1933 = vmatprep.subr.mxu0 0.0
    %1934 = vmatpush2.msra.mxu0 0.0
    %1935 = vmatprep.subr.mxu0 0.0
    %1936 = vmatpush2.msra.mxu0 0.0
    %1937 = vmatprep.subr.mxu0 0.0
    %1938 = vmatpush2.msra.mxu0 0.0
    %1939 = vmatprep.subr.mxu0 0.0
    %1940 = vmatpush2.msra.mxu0 0.0
    %1941 = vmatprep.subr.mxu0 0.0
    %1942 = vmatpush2.msra.mxu0 0.0
    %1943 = vmatprep.subr.mxu0 0.0
    %1944 = vmatpush2.msra.mxu0 0.0
    %1945 = vmatprep.mubr.f32.mxu0 0.0
    %1946 = vmatmul.mubr.f32.gmra.mxu0 %v1870
    %v1947 = vpop.f32.mrf.mxu0
    %v1948 = vadd.f32 %v1868, %v1947
    %v1949 = vpop.f32.mrf.mxu0
    %1950 = vmatprep.mubr.f32.mxu0 0.0
    %1951 = vmatmul.mubr.f32.gmra.mxu0 %v1873
    %v1952 = vpop.f32.mrf.mxu0
    %v1953 = vadd.f32 %v1868, %v1952
    %v1954 = vpop.f32.mrf.mxu0
    %1955 = vmatprep.mubr.f32.mxu0 0.0
    %1956 = vmatmul.mubr.f32.gmra.mxu0 %v1876
    %v1957 = vpop.f32.mrf.mxu0
    %v1958 = vadd.f32 %v1868, %v1957
    %v1959 = vpop.f32.mrf.mxu0
    %1960 = vmatprep.mubr.f32.mxu0 0.0
    %1961 = vmatmul.mubr.f32.gmra.mxu0 %v1879
    %v1962 = vpop.f32.mrf.mxu0
    %v1963 = vadd.f32 %v1868, %v1962
    %v1964 = vpop.f32.mrf.mxu0
    %1965 = vdwg.mxu0
    %s1966 = scalar_lea.vmem %s6, 160
    %v1967 = vld [vmem:[%s1966] sm:$0xff]
    %v1968 = vld [vmem:[%s1966 + $0x8] sm:$0xff]
    %v1969 = vld [vmem:[%s1966 + $0x10] sm:$0xff]
    %v1970 = vld [vmem:[%s1966 + $0x18] sm:$0xff]
    %v1971 = vlaneseq
    %v1972 = vshrl.u32 %v1971, 7
    %v1973 = vsub.s32 1, %v1972
    %v1974 = vrot.slane %v1858, %v1973
    %1975 = vmatprep.subr.mxu0 0.0
    %1976 = vmatpush1.msra.mxu0 0.0
    %1977 = vmatprep.subr.mxu0 0.0
    %1978 = vmatpush1.msra.mxu0 0.0
    %1979 = vmatprep.subr.mxu0 0.0
    %1980 = vmatpush1.msra.mxu0 0.0
    %1981 = vmatprep.subr.mxu0 0.0
    %1982 = vmatpush1.msra.mxu0 0.0
    %1983 = vmatprep.subr.mxu0 0.0
    %1984 = vmatpush1.msra.mxu0 0.0
    %1985 = vmatprep.subr.mxu0 0.0
    %1986 = vmatpush1.msra.mxu0 0.0
    %1987 = vmatprep.subr.mxu0 0.0
    %1988 = vmatpush1.msra.mxu0 0.0
    %1989 = vmatprep.subr.mxu0 0.0
    %1990 = vmatpush1.msra.mxu0 0.0
    %1991 = vmatprep.subr.mxu0 0.0
    %1992 = vmatpush1.msra.mxu0 0.0
    %1993 = vmatprep.subr.mxu0 0.0
    %1994 = vmatpush1.msra.mxu0 0.0
    %1995 = vmatprep.subr.mxu0 0.0
    %1996 = vmatpush1.msra.mxu0 0.0
    %1997 = vmatprep.subr.mxu0 0.0
    %1998 = vmatpush1.msra.mxu0 0.0
    %1999 = vmatprep.subr.mxu0 0.0
    %2000 = vmatpush1.msra.mxu0 %v1970
    %2001 = vmatprep.subr.mxu0 0.0
    %2002 = vmatpush1.msra.mxu0 %v1969
    %2003 = vmatprep.subr.mxu0 0.0
    %2004 = vmatpush1.msra.mxu0 %v1968
    %2005 = vmatprep.subr.mxu0 0.0
    %2006 = vmatpush1.msra.mxu0 %v1967
    %2007 = vmatprep.subr.mxu0 0.0
    %2008 = vmatpush2.msra.mxu0 0.0
    %2009 = vmatprep.subr.mxu0 0.0
    %2010 = vmatpush2.msra.mxu0 0.0
    %2011 = vmatprep.subr.mxu0 0.0
    %2012 = vmatpush2.msra.mxu0 0.0
    %2013 = vmatprep.subr.mxu0 0.0
    %2014 = vmatpush2.msra.mxu0 0.0
    %2015 = vmatprep.subr.mxu0 0.0
    %2016 = vmatpush2.msra.mxu0 0.0
    %2017 = vmatprep.subr.mxu0 0.0
    %2018 = vmatpush2.msra.mxu0 0.0
    %2019 = vmatprep.subr.mxu0 0.0
    %2020 = vmatpush2.msra.mxu0 0.0
    %2021 = vmatprep.subr.mxu0 0.0
    %2022 = vmatpush2.msra.mxu0 0.0
    %2023 = vmatprep.subr.mxu0 0.0
    %2024 = vmatpush2.msra.mxu0 0.0
    %2025 = vmatprep.subr.mxu0 0.0
    %2026 = vmatpush2.msra.mxu0 0.0
    %2027 = vmatprep.subr.mxu0 0.0
    %2028 = vmatpush2.msra.mxu0 0.0
    %2029 = vmatprep.subr.mxu0 0.0
    %2030 = vmatpush2.msra.mxu0 0.0
    %2031 = vmatprep.subr.mxu0 0.0
    %2032 = vmatpush2.msra.mxu0 0.0
    %2033 = vmatprep.subr.mxu0 0.0
    %2034 = vmatpush2.msra.mxu0 0.0
    %2035 = vmatprep.subr.mxu0 0.0
    %2036 = vmatpush2.msra.mxu0 0.0
    %2037 = vmatprep.subr.mxu0 0.0
    %2038 = vmatpush2.msra.mxu0 0.0
    %2039 = vmatprep.mubr.f32.mxu0 0.0
    %2040 = vmatmul.mubr.f32.gmra.mxu0 %v1870
    %v2041 = vpop.f32.mrf.mxu0
    %v2042 = vadd.f32 %v1974, %v2041
    %v2043 = vpop.f32.mrf.mxu0
    %2044 = vmatprep.mubr.f32.mxu0 0.0
    %2045 = vmatmul.mubr.f32.gmra.mxu0 %v1873
    %v2046 = vpop.f32.mrf.mxu0
    %v2047 = vadd.f32 %v1974, %v2046
    %v2048 = vpop.f32.mrf.mxu0
    %2049 = vmatprep.mubr.f32.mxu0 0.0
    %2050 = vmatmul.mubr.f32.gmra.mxu0 %v1876
    %v2051 = vpop.f32.mrf.mxu0
    %v2052 = vadd.f32 %v1974, %v2051
    %v2053 = vpop.f32.mrf.mxu0
    %2054 = vmatprep.mubr.f32.mxu0 0.0
    %2055 = vmatmul.mubr.f32.gmra.mxu0 %v1879
    %v2056 = vpop.f32.mrf.mxu0
    %v2057 = vadd.f32 %v1974, %v2056
    %v2058 = vpop.f32.mrf.mxu0
    %2059 = vdwg.mxu0
    %s2060 = scalar_lea.vmem %s6, 192
    %v2061 = vld [vmem:[%s2060] sm:$0xff]
    %v2062 = vld [vmem:[%s2060 + $0x8] sm:$0xff]
    %v2063 = vld [vmem:[%s2060 + $0x10] sm:$0xff]
    %v2064 = vld [vmem:[%s2060 + $0x18] sm:$0xff]
    %v2065 = vlaneseq
    %v2066 = vshrl.u32 %v2065, 7
    %v2067 = vsub.s32 2, %v2066
    %v2068 = vrot.slane %v1858, %v2067
    %2069 = vmatprep.subr.mxu0 0.0
    %2070 = vmatpush1.msra.mxu0 0.0
    %2071 = vmatprep.subr.mxu0 0.0
    %2072 = vmatpush1.msra.mxu0 0.0
    %2073 = vmatprep.subr.mxu0 0.0
    %2074 = vmatpush1.msra.mxu0 0.0
    %2075 = vmatprep.subr.mxu0 0.0
    %2076 = vmatpush1.msra.mxu0 0.0
    %2077 = vmatprep.subr.mxu0 0.0
    %2078 = vmatpush1.msra.mxu0 0.0
    %2079 = vmatprep.subr.mxu0 0.0
    %2080 = vmatpush1.msra.mxu0 0.0
    %2081 = vmatprep.subr.mxu0 0.0
    %2082 = vmatpush1.msra.mxu0 0.0
    %2083 = vmatprep.subr.mxu0 0.0
    %2084 = vmatpush1.msra.mxu0 0.0
    %2085 = vmatprep.subr.mxu0 0.0
    %2086 = vmatpush1.msra.mxu0 0.0
    %2087 = vmatprep.subr.mxu0 0.0
    %2088 = vmatpush1.msra.mxu0 0.0
    %2089 = vmatprep.subr.mxu0 0.0
    %2090 = vmatpush1.msra.mxu0 0.0
    %2091 = vmatprep.subr.mxu0 0.0
    %2092 = vmatpush1.msra.mxu0 0.0
    %2093 = vmatprep.subr.mxu0 0.0
    %2094 = vmatpush1.msra.mxu0 %v2064
    %2095 = vmatprep.subr.mxu0 0.0
    %2096 = vmatpush1.msra.mxu0 %v2063
    %2097 = vmatprep.subr.mxu0 0.0
    %2098 = vmatpush1.msra.mxu0 %v2062
    %2099 = vmatprep.subr.mxu0 0.0
    %2100 = vmatpush1.msra.mxu0 %v2061
    %2101 = vmatprep.subr.mxu0 0.0
    %2102 = vmatpush2.msra.mxu0 0.0
    %2103 = vmatprep.subr.mxu0 0.0
    %2104 = vmatpush2.msra.mxu0 0.0
    %2105 = vmatprep.subr.mxu0 0.0
    %2106 = vmatpush2.msra.mxu0 0.0
    %2107 = vmatprep.subr.mxu0 0.0
    %2108 = vmatpush2.msra.mxu0 0.0
    %2109 = vmatprep.subr.mxu0 0.0
    %2110 = vmatpush2.msra.mxu0 0.0
    %2111 = vmatprep.subr.mxu0 0.0
    %2112 = vmatpush2.msra.mxu0 0.0
    %2113 = vmatprep.subr.mxu0 0.0
    %2114 = vmatpush2.msra.mxu0 0.0
    %2115 = vmatprep.subr.mxu0 0.0
    %2116 = vmatpush2.msra.mxu0 0.0
    %2117 = vmatprep.subr.mxu0 0.0
    %2118 = vmatpush2.msra.mxu0 0.0
    %2119 = vmatprep.subr.mxu0 0.0
    %2120 = vmatpush2.msra.mxu0 0.0
    %2121 = vmatprep.subr.mxu0 0.0
    %2122 = vmatpush2.msra.mxu0 0.0
    %2123 = vmatprep.subr.mxu0 0.0
    %2124 = vmatpush2.msra.mxu0 0.0
    %2125 = vmatprep.subr.mxu0 0.0
    %2126 = vmatpush2.msra.mxu0 0.0
    %2127 = vmatprep.subr.mxu0 0.0
    %2128 = vmatpush2.msra.mxu0 0.0
    %2129 = vmatprep.subr.mxu0 0.0
    %2130 = vmatpush2.msra.mxu0 0.0
    %2131 = vmatprep.subr.mxu0 0.0
    %2132 = vmatpush2.msra.mxu0 0.0
    %2133 = vmatprep.mubr.f32.mxu0 0.0
    %2134 = vmatmul.mubr.f32.gmra.mxu0 %v1870
    %v2135 = vpop.f32.mrf.mxu0
    %v2136 = vadd.f32 %v2068, %v2135
    %v2137 = vpop.f32.mrf.mxu0
    %2138 = vmatprep.mubr.f32.mxu0 0.0
    %2139 = vmatmul.mubr.f32.gmra.mxu0 %v1873
    %v2140 = vpop.f32.mrf.mxu0
    %v2141 = vadd.f32 %v2068, %v2140
    %v2142 = vpop.f32.mrf.mxu0
    %2143 = vmatprep.mubr.f32.mxu0 0.0
    %2144 = vmatmul.mubr.f32.gmra.mxu0 %v1876
    %v2145 = vpop.f32.mrf.mxu0
    %v2146 = vadd.f32 %v2068, %v2145
    %v2147 = vpop.f32.mrf.mxu0
    %2148 = vmatprep.mubr.f32.mxu0 0.0
    %2149 = vmatmul.mubr.f32.gmra.mxu0 %v1879
    %v2150 = vpop.f32.mrf.mxu0
    %v2151 = vadd.f32 %v2068, %v2150
    %v2152 = vpop.f32.mrf.mxu0
    %2153 = vdwg.mxu0
    %v2154 = vmul.f32 %v1948, %v75
    %v2155 = vmul.f32 %v1953, %v76
    %v2156 = vmul.f32 %v1958, %v77
    %v2157 = vmul.f32 %v1963, %v78
    %v2158 = vmul.f32 %v1948, %v79
    %v2159 = vmul.f32 %v1953, %v80
    %v2160 = vmul.f32 %v1958, %v81
    %v2161 = vmul.f32 %v1963, %v82
    %v2162 = vmul.f32 %v1948, %v83
    %v2163 = vmul.f32 %v1953, %v84
    %v2164 = vmul.f32 %v1958, %v85
    %v2165 = vmul.f32 %v1963, %v86
    %v2166 = vmul.f32 %v1948, %v87
    %v2167 = vmul.f32 %v1953, %v88
    %v2168 = vmul.f32 %v1958, %v89
    %v2169 = vmul.f32 %v1963, %v90
    %v2171 = vsel %vm372, %v2154, 0
    %v2174 = vsel %vm372, %v2155, 0
    %v2177 = vsel %vm372, %v2156, 0
    %v2180 = vsel %vm372, %v2157, 0
    %v2183 = vsel %vm372, %v2158, 0
    %v2186 = vsel %vm372, %v2159, 0
    %v2189 = vsel %vm372, %v2160, 0
    %v2192 = vsel %vm372, %v2161, 0
    %v2195 = vsel %vm372, %v2162, 0
    %v2198 = vsel %vm372, %v2163, 0
    %v2201 = vsel %vm372, %v2164, 0
    %v2204 = vsel %vm372, %v2165, 0
    %v2207 = vsel %vm372, %v2166, 0
    %v2210 = vsel %vm372, %v2167, 0
    %v2213 = vsel %vm372, %v2168, 0
    %v2216 = vsel %vm372, %v2169, 0
    %v2219 = vsel %vm372, %v2042, 0
    %v2222 = vsel %vm372, %v2047, 0
    %v2225 = vsel %vm372, %v2052, 0
    %v2228 = vsel %vm372, %v2057, 0
    %2230 = vmatprep.subr.mxu0 0.0
    %2231 = vmatpush1.xpose.msra.mxu0 0.0
    %2232 = vmatprep.subr.mxu0 0.0
    %2233 = vmatpush1.xpose.msra.mxu0 0.0
    %2234 = vmatprep.subr.mxu0 0.0
    %2235 = vmatpush1.xpose.msra.mxu0 0.0
    %2236 = vmatprep.subr.mxu0 0.0
    %2237 = vmatpush1.xpose.msra.mxu0 0.0
    %2238 = vmatprep.subr.mxu0 0.0
    %2239 = vmatpush1.xpose.msra.mxu0 0.0
    %2240 = vmatprep.subr.mxu0 0.0
    %2241 = vmatpush1.xpose.msra.mxu0 0.0
    %2242 = vmatprep.subr.mxu0 0.0
    %2243 = vmatpush1.xpose.msra.mxu0 0.0
    %2244 = vmatprep.subr.mxu0 0.0
    %2245 = vmatpush1.xpose.msra.mxu0 0.0
    %2246 = vmatprep.subr.mxu0 0.0
    %2247 = vmatpush1.xpose.msra.mxu0 0.0
    %2248 = vmatprep.subr.mxu0 0.0
    %2249 = vmatpush1.xpose.msra.mxu0 0.0
    %2250 = vmatprep.subr.mxu0 0.0
    %2251 = vmatpush1.xpose.msra.mxu0 0.0
    %2252 = vmatprep.subr.mxu0 0.0
    %2253 = vmatpush1.xpose.msra.mxu0 0.0
    %2254 = vmatprep.subr.mxu0 0.0
    %2255 = vmatpush1.xpose.msra.mxu0 %v2228
    %2256 = vmatprep.subr.mxu0 0.0
    %2257 = vmatpush1.xpose.msra.mxu0 %v2225
    %2258 = vmatprep.subr.mxu0 0.0
    %2259 = vmatpush1.xpose.msra.mxu0 %v2222
    %2260 = vmatprep.subr.mxu0 0.0
    %2261 = vmatpush1.xpose.msra.mxu0 %v2219
    %2262 = vmatprep.subr.mxu0 0.0
    %2263 = vmatpush2.xpose.msra.mxu0 0.0
    %2264 = vmatprep.subr.mxu0 0.0
    %2265 = vmatpush2.xpose.msra.mxu0 0.0
    %2266 = vmatprep.subr.mxu0 0.0
    %2267 = vmatpush2.xpose.msra.mxu0 0.0
    %2268 = vmatprep.subr.mxu0 0.0
    %2269 = vmatpush2.xpose.msra.mxu0 0.0
    %2270 = vmatprep.subr.mxu0 0.0
    %2271 = vmatpush2.xpose.msra.mxu0 0.0
    %2272 = vmatprep.subr.mxu0 0.0
    %2273 = vmatpush2.xpose.msra.mxu0 0.0
    %2274 = vmatprep.subr.mxu0 0.0
    %2275 = vmatpush2.xpose.msra.mxu0 0.0
    %2276 = vmatprep.subr.mxu0 0.0
    %2277 = vmatpush2.xpose.msra.mxu0 0.0
    %2278 = vmatprep.subr.mxu0 0.0
    %2279 = vmatpush2.xpose.msra.mxu0 0.0
    %2280 = vmatprep.subr.mxu0 0.0
    %2281 = vmatpush2.xpose.msra.mxu0 0.0
    %2282 = vmatprep.subr.mxu0 0.0
    %2283 = vmatpush2.xpose.msra.mxu0 0.0
    %2284 = vmatprep.subr.mxu0 0.0
    %2285 = vmatpush2.xpose.msra.mxu0 0.0
    %2286 = vmatprep.subr.mxu0 0.0
    %2287 = vmatpush2.xpose.msra.mxu0 0.0
    %2288 = vmatprep.subr.mxu0 0.0
    %2289 = vmatpush2.xpose.msra.mxu0 0.0
    %2290 = vmatprep.subr.mxu0 0.0
    %2291 = vmatpush2.xpose.msra.mxu0 0.0
    %2292 = vmatprep.subr.mxu0 0.0
    %2293 = vmatpush2.xpose.msra.mxu0 0.0
    %2294 = vmatprep.mubr.f32.mxu0 0.0
    %2295 = vmatmul.mubr.f32.gmra.mxu0 %v2171
    %v2296 = vpop.f32.mrf.mxu0
    %v2297 = vadd.f32 %v59, %v2296
    %v2298 = vpop.f32.mrf.mxu0
    %2299 = vmatprep.mubr.f32.mxu0 0.0
    %2300 = vmatmul.mubr.f32.gmra.mxu0 %v2174
    %v2301 = vpop.f32.mrf.mxu0
    %v2302 = vadd.f32 %v60, %v2301
    %v2303 = vpop.f32.mrf.mxu0
    %2304 = vmatprep.mubr.f32.mxu0 0.0
    %2305 = vmatmul.mubr.f32.gmra.mxu0 %v2177
    %v2306 = vpop.f32.mrf.mxu0
    %v2307 = vadd.f32 %v61, %v2306
    %v2308 = vpop.f32.mrf.mxu0
    %2309 = vmatprep.mubr.f32.mxu0 0.0
    %2310 = vmatmul.mubr.f32.gmra.mxu0 %v2180
    %v2311 = vpop.f32.mrf.mxu0
    %v2312 = vadd.f32 %v62, %v2311
    %v2313 = vpop.f32.mrf.mxu0
    %2314 = vmatprep.mubr.f32.mxu0 0.0
    %2315 = vmatmul.mubr.f32.gmra.mxu0 %v2183
    %v2316 = vpop.f32.mrf.mxu0
    %v2317 = vadd.f32 %v63, %v2316
    %v2318 = vpop.f32.mrf.mxu0
    %2319 = vmatprep.mubr.f32.mxu0 0.0
    %2320 = vmatmul.mubr.f32.gmra.mxu0 %v2186
    %v2321 = vpop.f32.mrf.mxu0
    %v2322 = vadd.f32 %v64, %v2321
    %v2323 = vpop.f32.mrf.mxu0
    %2324 = vmatprep.mubr.f32.mxu0 0.0
    %2325 = vmatmul.mubr.f32.gmra.mxu0 %v2189
    %v2326 = vpop.f32.mrf.mxu0
    %v2327 = vadd.f32 %v65, %v2326
    %v2328 = vpop.f32.mrf.mxu0
    %2329 = vmatprep.mubr.f32.mxu0 0.0
    %2330 = vmatmul.mubr.f32.gmra.mxu0 %v2192
    %v2331 = vpop.f32.mrf.mxu0
    %v2332 = vadd.f32 %v66, %v2331
    %v2333 = vpop.f32.mrf.mxu0
    %2334 = vmatprep.mubr.f32.mxu0 0.0
    %2335 = vmatmul.mubr.f32.gmra.mxu0 %v2195
    %v2336 = vpop.f32.mrf.mxu0
    %v2337 = vadd.f32 %v67, %v2336
    %v2338 = vpop.f32.mrf.mxu0
    %2339 = vmatprep.mubr.f32.mxu0 0.0
    %2340 = vmatmul.mubr.f32.gmra.mxu0 %v2198
    %v2341 = vpop.f32.mrf.mxu0
    %v2342 = vadd.f32 %v68, %v2341
    %v2343 = vpop.f32.mrf.mxu0
    %2344 = vmatprep.mubr.f32.mxu0 0.0
    %2345 = vmatmul.mubr.f32.gmra.mxu0 %v2201
    %v2346 = vpop.f32.mrf.mxu0
    %v2347 = vadd.f32 %v69, %v2346
    %v2348 = vpop.f32.mrf.mxu0
    %2349 = vmatprep.mubr.f32.mxu0 0.0
    %2350 = vmatmul.mubr.f32.gmra.mxu0 %v2204
    %v2351 = vpop.f32.mrf.mxu0
    %v2352 = vadd.f32 %v70, %v2351
    %v2353 = vpop.f32.mrf.mxu0
    %2354 = vmatprep.mubr.f32.mxu0 0.0
    %2355 = vmatmul.mubr.f32.gmra.mxu0 %v2207
    %v2356 = vpop.f32.mrf.mxu0
    %v2357 = vadd.f32 %v71, %v2356
    %v2358 = vpop.f32.mrf.mxu0
    %2359 = vmatprep.mubr.f32.mxu0 0.0
    %2360 = vmatmul.mubr.f32.gmra.mxu0 %v2210
    %v2361 = vpop.f32.mrf.mxu0
    %v2362 = vadd.f32 %v72, %v2361
    %v2363 = vpop.f32.mrf.mxu0
    %2364 = vmatprep.mubr.f32.mxu0 0.0
    %2365 = vmatmul.mubr.f32.gmra.mxu0 %v2213
    %v2366 = vpop.f32.mrf.mxu0
    %v2367 = vadd.f32 %v73, %v2366
    %v2368 = vpop.f32.mrf.mxu0
    %2369 = vmatprep.mubr.f32.mxu0 0.0
    %2370 = vmatmul.mubr.f32.gmra.mxu0 %v2216
    %v2371 = vpop.f32.mrf.mxu0
    %v2372 = vadd.f32 %v74, %v2371
    %v2373 = vpop.f32.mrf.mxu0
    %2374 = vdwg.mxu0
    %v2375 = vsel %vm372, %v2297, -inf
    %2376 = vmax.xlane.f32.xlu0 %v2375
    %v2377 = vpop.xlane.xlu0 %2376
    %v2378 = vsel %vm372, %v2302, -inf
    %2379 = vmax.xlane.f32.xlu0 %v2378
    %v2380 = vpop.xlane.xlu0 %2379
    %v2381 = vsel %vm372, %v2307, -inf
    %2382 = vmax.xlane.f32.xlu0 %v2381
    %v2383 = vpop.xlane.xlu0 %2382
    %v2384 = vsel %vm372, %v2312, -inf
    %2385 = vmax.xlane.f32.xlu0 %v2384
    %v2386 = vpop.xlane.xlu0 %2385
    %v2387 = vsel %vm372, %v2317, -inf
    %2388 = vmax.xlane.f32.xlu0 %v2387
    %v2389 = vpop.xlane.xlu0 %2388
    %v2390 = vsel %vm372, %v2322, -inf
    %2391 = vmax.xlane.f32.xlu0 %v2390
    %v2392 = vpop.xlane.xlu0 %2391
    %v2393 = vsel %vm372, %v2327, -inf
    %2394 = vmax.xlane.f32.xlu0 %v2393
    %v2395 = vpop.xlane.xlu0 %2394
    %v2396 = vsel %vm372, %v2332, -inf
    %2397 = vmax.xlane.f32.xlu0 %v2396
    %v2398 = vpop.xlane.xlu0 %2397
    %v2399 = vsel %vm372, %v2337, -inf
    %2400 = vmax.xlane.f32.xlu0 %v2399
    %v2401 = vpop.xlane.xlu0 %2400
    %v2402 = vsel %vm372, %v2342, -inf
    %2403 = vmax.xlane.f32.xlu0 %v2402
    %v2404 = vpop.xlane.xlu0 %2403
    %v2405 = vsel %vm372, %v2347, -inf
    %2406 = vmax.xlane.f32.xlu0 %v2405
    %v2407 = vpop.xlane.xlu0 %2406
    %v2408 = vsel %vm372, %v2352, -inf
    %2409 = vmax.xlane.f32.xlu0 %v2408
    %v2410 = vpop.xlane.xlu0 %2409
    %v2411 = vsel %vm372, %v2357, -inf
    %2412 = vmax.xlane.f32.xlu0 %v2411
    %v2413 = vpop.xlane.xlu0 %2412
    %v2414 = vsel %vm372, %v2362, -inf
    %2415 = vmax.xlane.f32.xlu0 %v2414
    %v2416 = vpop.xlane.xlu0 %2415
    %v2417 = vsel %vm372, %v2367, -inf
    %2418 = vmax.xlane.f32.xlu0 %v2417
    %v2419 = vpop.xlane.xlu0 %2418
    %v2420 = vsel %vm372, %v2372, -inf
    %2421 = vmax.xlane.f32.xlu0 %v2420
    %v2422 = vpop.xlane.xlu0 %2421
    %v2423 = vsub.f32 %v2297, %v2377
    %v2424 = vsub.f32 %v2302, %v2380
    %v2425 = vsub.f32 %v2307, %v2383
    %v2426 = vsub.f32 %v2312, %v2386
    %v2427 = vsub.f32 %v2317, %v2389
    %v2428 = vsub.f32 %v2322, %v2392
    %v2429 = vsub.f32 %v2327, %v2395
    %v2430 = vsub.f32 %v2332, %v2398
    %v2431 = vsub.f32 %v2337, %v2401
    %v2432 = vsub.f32 %v2342, %v2404
    %v2433 = vsub.f32 %v2347, %v2407
    %v2434 = vsub.f32 %v2352, %v2410
    %v2435 = vsub.f32 %v2357, %v2413
    %v2436 = vsub.f32 %v2362, %v2416
    %v2437 = vsub.f32 %v2367, %v2419
    %v2438 = vsub.f32 %v2372, %v2422
    %v2439 = vmul.f32 %v2423, 1.442695
    %v2440 = vpow.pop %v2439
    %v2441 = vmul.f32 %v2424, 1.442695
    %v2442 = vpow.pop %v2441
    %v2443 = vmul.f32 %v2425, 1.442695
    %v2444 = vpow.pop %v2443
    %v2445 = vmul.f32 %v2426, 1.442695
    %v2446 = vpow.pop %v2445
    %v2447 = vmul.f32 %v2427, 1.442695
    %v2448 = vpow.pop %v2447
    %v2449 = vmul.f32 %v2428, 1.442695
    %v2450 = vpow.pop %v2449
    %v2451 = vmul.f32 %v2429, 1.442695
    %v2452 = vpow.pop %v2451
    %v2453 = vmul.f32 %v2430, 1.442695
    %v2454 = vpow.pop %v2453
    %v2455 = vmul.f32 %v2431, 1.442695
    %v2456 = vpow.pop %v2455
    %v2457 = vmul.f32 %v2432, 1.442695
    %v2458 = vpow.pop %v2457
    %v2459 = vmul.f32 %v2433, 1.442695
    %v2460 = vpow.pop %v2459
    %v2461 = vmul.f32 %v2434, 1.442695
    %v2462 = vpow.pop %v2461
    %v2463 = vmul.f32 %v2435, 1.442695
    %v2464 = vpow.pop %v2463
    %v2465 = vmul.f32 %v2436, 1.442695
    %v2466 = vpow.pop %v2465
    %v2467 = vmul.f32 %v2437, 1.442695
    %v2468 = vpow.pop %v2467
    %v2469 = vmul.f32 %v2438, 1.442695
    %v2470 = vpow.pop %v2469
    %v2471 = vsel %vm372, %v2440, 0.0
    %2472 = vadd.xlane.f32.xlu0 %v2471
    %v2473 = vpop.xlane.xlu0 %2472
    %v2474 = vsel %vm372, %v2442, 0.0
    %2475 = vadd.xlane.f32.xlu0 %v2474
    %v2476 = vpop.xlane.xlu0 %2475
    %v2477 = vsel %vm372, %v2444, 0.0
    %2478 = vadd.xlane.f32.xlu0 %v2477
    %v2479 = vpop.xlane.xlu0 %2478
    %v2480 = vsel %vm372, %v2446, 0.0
    %2481 = vadd.xlane.f32.xlu0 %v2480
    %v2482 = vpop.xlane.xlu0 %2481
    %v2483 = vsel %vm372, %v2448, 0.0
    %2484 = vadd.xlane.f32.xlu0 %v2483
    %v2485 = vpop.xlane.xlu0 %2484
    %v2486 = vsel %vm372, %v2450, 0.0
    %2487 = vadd.xlane.f32.xlu0 %v2486
    %v2488 = vpop.xlane.xlu0 %2487
    %v2489 = vsel %vm372, %v2452, 0.0
    %2490 = vadd.xlane.f32.xlu0 %v2489
    %v2491 = vpop.xlane.xlu0 %2490
    %v2492 = vsel %vm372, %v2454, 0.0
    %2493 = vadd.xlane.f32.xlu0 %v2492
    %v2494 = vpop.xlane.xlu0 %2493
    %v2495 = vsel %vm372, %v2456, 0.0
    %2496 = vadd.xlane.f32.xlu0 %v2495
    %v2497 = vpop.xlane.xlu0 %2496
    %v2498 = vsel %vm372, %v2458, 0.0
    %2499 = vadd.xlane.f32.xlu0 %v2498
    %v2500 = vpop.xlane.xlu0 %2499
    %v2501 = vsel %vm372, %v2460, 0.0
    %2502 = vadd.xlane.f32.xlu0 %v2501
    %v2503 = vpop.xlane.xlu0 %2502
    %v2504 = vsel %vm372, %v2462, 0.0
    %2505 = vadd.xlane.f32.xlu0 %v2504
    %v2506 = vpop.xlane.xlu0 %2505
    %v2507 = vsel %vm372, %v2464, 0.0
    %2508 = vadd.xlane.f32.xlu0 %v2507
    %v2509 = vpop.xlane.xlu0 %2508
    %v2510 = vsel %vm372, %v2466, 0.0
    %2511 = vadd.xlane.f32.xlu0 %v2510
    %v2512 = vpop.xlane.xlu0 %2511
    %v2513 = vsel %vm372, %v2468, 0.0
    %2514 = vadd.xlane.f32.xlu0 %v2513
    %v2515 = vpop.xlane.xlu0 %2514
    %v2516 = vsel %vm372, %v2470, 0.0
    %2517 = vadd.xlane.f32.xlu0 %v2516
    %v2518 = vpop.xlane.xlu0 %2517
    %v2519 = vrcp.pop %v2473
    %v2520 = vrcp.pop %v2476
    %v2521 = vrcp.pop %v2479
    %v2522 = vrcp.pop %v2482
    %v2523 = vrcp.pop %v2485
    %v2524 = vrcp.pop %v2488
    %v2525 = vrcp.pop %v2491
    %v2526 = vrcp.pop %v2494
    %v2527 = vrcp.pop %v2497
    %v2528 = vrcp.pop %v2500
    %v2529 = vrcp.pop %v2503
    %v2530 = vrcp.pop %v2506
    %v2531 = vrcp.pop %v2509
    %v2532 = vrcp.pop %v2512
    %v2533 = vrcp.pop %v2515
    %v2534 = vrcp.pop %v2518
    %v2535 = vmul.f32 %v2440, %v2519
    %v2536 = vmul.f32 %v2442, %v2520
    %v2537 = vmul.f32 %v2444, %v2521
    %v2538 = vmul.f32 %v2446, %v2522
    %v2539 = vmul.f32 %v2448, %v2523
    %v2540 = vmul.f32 %v2450, %v2524
    %v2541 = vmul.f32 %v2452, %v2525
    %v2542 = vmul.f32 %v2454, %v2526
    %v2543 = vmul.f32 %v2456, %v2527
    %v2544 = vmul.f32 %v2458, %v2528
    %v2545 = vmul.f32 %v2460, %v2529
    %v2546 = vmul.f32 %v2462, %v2530
    %v2547 = vmul.f32 %v2464, %v2531
    %v2548 = vmul.f32 %v2466, %v2532
    %v2549 = vmul.f32 %v2468, %v2533
    %v2550 = vmul.f32 %v2470, %v2534
    %v2552 = vsel %vm372, %v2535, 0
    %v2555 = vsel %vm372, %v2536, 0
    %v2558 = vsel %vm372, %v2537, 0
    %v2561 = vsel %vm372, %v2538, 0
    %v2564 = vsel %vm372, %v2539, 0
    %v2567 = vsel %vm372, %v2540, 0
    %v2570 = vsel %vm372, %v2541, 0
    %v2573 = vsel %vm372, %v2542, 0
    %v2576 = vsel %vm372, %v2543, 0
    %v2579 = vsel %vm372, %v2544, 0
    %v2582 = vsel %vm372, %v2545, 0
    %v2585 = vsel %vm372, %v2546, 0
    %v2588 = vsel %vm372, %v2547, 0
    %v2591 = vsel %vm372, %v2548, 0
    %v2594 = vsel %vm372, %v2549, 0
    %v2597 = vsel %vm372, %v2550, 0
    %2599 = vmatprep.subr.mxu0 0.0
    %2600 = vmatpush1.msra.mxu0 0.0
    %2601 = vmatprep.subr.mxu0 0.0
    %2602 = vmatpush1.msra.mxu0 0.0
    %2603 = vmatprep.subr.mxu0 0.0
    %2604 = vmatpush1.msra.mxu0 0.0
    %2605 = vmatprep.subr.mxu0 0.0
    %2606 = vmatpush1.msra.mxu0 0.0
    %2607 = vmatprep.subr.mxu0 0.0
    %2608 = vmatpush1.msra.mxu0 0.0
    %2609 = vmatprep.subr.mxu0 0.0
    %2610 = vmatpush1.msra.mxu0 0.0
    %2611 = vmatprep.subr.mxu0 0.0
    %2612 = vmatpush1.msra.mxu0 0.0
    %2613 = vmatprep.subr.mxu0 0.0
    %2614 = vmatpush1.msra.mxu0 0.0
    %2615 = vmatprep.subr.mxu0 0.0
    %2616 = vmatpush1.msra.mxu0 0.0
    %2617 = vmatprep.subr.mxu0 0.0
    %2618 = vmatpush1.msra.mxu0 0.0
    %2619 = vmatprep.subr.mxu0 0.0
    %2620 = vmatpush1.msra.mxu0 0.0
    %2621 = vmatprep.subr.mxu0 0.0
    %2622 = vmatpush1.msra.mxu0 0.0
    %2623 = vmatprep.subr.mxu0 0.0
    %2624 = vmatpush1.msra.mxu0 %v2151
    %2625 = vmatprep.subr.mxu0 0.0
    %2626 = vmatpush1.msra.mxu0 %v2146
    %2627 = vmatprep.subr.mxu0 0.0
    %2628 = vmatpush1.msra.mxu0 %v2141
    %2629 = vmatprep.subr.mxu0 0.0
    %2630 = vmatpush1.msra.mxu0 %v2136
    %2631 = vmatprep.subr.mxu0 0.0
    %2632 = vmatpush2.msra.mxu0 0.0
    %2633 = vmatprep.subr.mxu0 0.0
    %2634 = vmatpush2.msra.mxu0 0.0
    %2635 = vmatprep.subr.mxu0 0.0
    %2636 = vmatpush2.msra.mxu0 0.0
    %2637 = vmatprep.subr.mxu0 0.0
    %2638 = vmatpush2.msra.mxu0 0.0
    %2639 = vmatprep.subr.mxu0 0.0
    %2640 = vmatpush2.msra.mxu0 0.0
    %2641 = vmatprep.subr.mxu0 0.0
    %2642 = vmatpush2.msra.mxu0 0.0
    %2643 = vmatprep.subr.mxu0 0.0
    %2644 = vmatpush2.msra.mxu0 0.0
    %2645 = vmatprep.subr.mxu0 0.0
    %2646 = vmatpush2.msra.mxu0 0.0
    %2647 = vmatprep.subr.mxu0 0.0
    %2648 = vmatpush2.msra.mxu0 0.0
    %2649 = vmatprep.subr.mxu0 0.0
    %2650 = vmatpush2.msra.mxu0 0.0
    %2651 = vmatprep.subr.mxu0 0.0
    %2652 = vmatpush2.msra.mxu0 0.0
    %2653 = vmatprep.subr.mxu0 0.0
    %2654 = vmatpush2.msra.mxu0 0.0
    %2655 = vmatprep.subr.mxu0 0.0
    %2656 = vmatpush2.msra.mxu0 0.0
    %2657 = vmatprep.subr.mxu0 0.0
    %2658 = vmatpush2.msra.mxu0 0.0
    %2659 = vmatprep.subr.mxu0 0.0
    %2660 = vmatpush2.msra.mxu0 0.0
    %2661 = vmatprep.subr.mxu0 0.0
    %2662 = vmatpush2.msra.mxu0 0.0
    %2663 = vmatprep.mubr.f32.mxu0 0.0
    %2664 = vmatmul.mubr.f32.gmra.mxu0 %v2552
    %v2665 = vpop.f32.mrf.mxu0
    %v2666 = vadd.f32 0.0, %v2665
    %v2667 = vpop.f32.mrf.mxu0
    %2668 = vmatprep.mubr.f32.mxu0 0.0
    %2669 = vmatmul.mubr.f32.gmra.mxu0 %v2555
    %v2670 = vpop.f32.mrf.mxu0
    %v2671 = vadd.f32 0.0, %v2670
    %v2672 = vpop.f32.mrf.mxu0
    %2673 = vmatprep.mubr.f32.mxu0 0.0
    %2674 = vmatmul.mubr.f32.gmra.mxu0 %v2558
    %v2675 = vpop.f32.mrf.mxu0
    %v2676 = vadd.f32 0.0, %v2675
    %v2677 = vpop.f32.mrf.mxu0
    %2678 = vmatprep.mubr.f32.mxu0 0.0
    %2679 = vmatmul.mubr.f32.gmra.mxu0 %v2561
    %v2680 = vpop.f32.mrf.mxu0
    %v2681 = vadd.f32 0.0, %v2680
    %v2682 = vpop.f32.mrf.mxu0
    %2683 = vmatprep.mubr.f32.mxu0 0.0
    %2684 = vmatmul.mubr.f32.gmra.mxu0 %v2564
    %v2685 = vpop.f32.mrf.mxu0
    %v2686 = vadd.f32 0.0, %v2685
    %v2687 = vpop.f32.mrf.mxu0
    %2688 = vmatprep.mubr.f32.mxu0 0.0
    %2689 = vmatmul.mubr.f32.gmra.mxu0 %v2567
    %v2690 = vpop.f32.mrf.mxu0
    %v2691 = vadd.f32 0.0, %v2690
    %v2692 = vpop.f32.mrf.mxu0
    %2693 = vmatprep.mubr.f32.mxu0 0.0
    %2694 = vmatmul.mubr.f32.gmra.mxu0 %v2570
    %v2695 = vpop.f32.mrf.mxu0
    %v2696 = vadd.f32 0.0, %v2695
    %v2697 = vpop.f32.mrf.mxu0
    %2698 = vmatprep.mubr.f32.mxu0 0.0
    %2699 = vmatmul.mubr.f32.gmra.mxu0 %v2573
    %v2700 = vpop.f32.mrf.mxu0
    %v2701 = vadd.f32 0.0, %v2700
    %v2702 = vpop.f32.mrf.mxu0
    %2703 = vmatprep.mubr.f32.mxu0 0.0
    %2704 = vmatmul.mubr.f32.gmra.mxu0 %v2576
    %v2705 = vpop.f32.mrf.mxu0
    %v2706 = vadd.f32 0.0, %v2705
    %v2707 = vpop.f32.mrf.mxu0
    %2708 = vmatprep.mubr.f32.mxu0 0.0
    %2709 = vmatmul.mubr.f32.gmra.mxu0 %v2579
    %v2710 = vpop.f32.mrf.mxu0
    %v2711 = vadd.f32 0.0, %v2710
    %v2712 = vpop.f32.mrf.mxu0
    %2713 = vmatprep.mubr.f32.mxu0 0.0
    %2714 = vmatmul.mubr.f32.gmra.mxu0 %v2582
    %v2715 = vpop.f32.mrf.mxu0
    %v2716 = vadd.f32 0.0, %v2715
    %v2717 = vpop.f32.mrf.mxu0
    %2718 = vmatprep.mubr.f32.mxu0 0.0
    %2719 = vmatmul.mubr.f32.gmra.mxu0 %v2585
    %v2720 = vpop.f32.mrf.mxu0
    %v2721 = vadd.f32 0.0, %v2720
    %v2722 = vpop.f32.mrf.mxu0
    %2723 = vmatprep.mubr.f32.mxu0 0.0
    %2724 = vmatmul.mubr.f32.gmra.mxu0 %v2588
    %v2725 = vpop.f32.mrf.mxu0
    %v2726 = vadd.f32 0.0, %v2725
    %v2727 = vpop.f32.mrf.mxu0
    %2728 = vmatprep.mubr.f32.mxu0 0.0
    %2729 = vmatmul.mubr.f32.gmra.mxu0 %v2591
    %v2730 = vpop.f32.mrf.mxu0
    %v2731 = vadd.f32 0.0, %v2730
    %v2732 = vpop.f32.mrf.mxu0
    %2733 = vmatprep.mubr.f32.mxu0 0.0
    %2734 = vmatmul.mubr.f32.gmra.mxu0 %v2594
    %v2735 = vpop.f32.mrf.mxu0
    %v2736 = vadd.f32 0.0, %v2735
    %v2737 = vpop.f32.mrf.mxu0
    %2738 = vmatprep.mubr.f32.mxu0 0.0
    %2739 = vmatmul.mubr.f32.gmra.mxu0 %v2597
    %v2740 = vpop.f32.mrf.mxu0
    %v2741 = vadd.f32 0.0, %v2740
    %v2742 = vpop.f32.mrf.mxu0
    %2743 = vdwg.mxu0
    %v2744 = vmul.f32 %v2666, %v75
    %v2745 = vmul.f32 %v2671, %v76
    %v2746 = vmul.f32 %v2676, %v77
    %v2747 = vmul.f32 %v2681, %v78
    %v2748 = vmul.f32 %v2686, %v79
    %v2749 = vmul.f32 %v2691, %v80
    %v2750 = vmul.f32 %v2696, %v81
    %v2751 = vmul.f32 %v2701, %v82
    %v2752 = vmul.f32 %v2706, %v83
    %v2753 = vmul.f32 %v2711, %v84
    %v2754 = vmul.f32 %v2716, %v85
    %v2755 = vmul.f32 %v2721, %v86
    %v2756 = vmul.f32 %v2726, %v87
    %v2757 = vmul.f32 %v2731, %v88
    %v2758 = vmul.f32 %v2736, %v89
    %v2759 = vmul.f32 %v2741, %v90
    %v2760 = vadd.f32 %v2744, %v2748
    %v2761 = vadd.f32 %v2745, %v2749
    %v2762 = vadd.f32 %v2746, %v2750
    %v2763 = vadd.f32 %v2747, %v2751
    %v2764 = vadd.f32 %v2760, %v2752
    %v2765 = vadd.f32 %v2761, %v2753
    %v2766 = vadd.f32 %v2762, %v2754
    %v2767 = vadd.f32 %v2763, %v2755
    %v2768 = vadd.f32 %v2764, %v2756
    %v2769 = vadd.f32 %v2765, %v2757
    %v2770 = vadd.f32 %v2766, %v2758
    %v2771 = vadd.f32 %v2767, %v2759
    %s2772 = scalar_lea.vmem %s6, 224
    %v2773 = vld [vmem:[%s2772] sm:$0xff]
    %v2774 = vld [vmem:[%s2772 + $0x8] sm:$0xff]
    %v2775 = vld [vmem:[%s2772 + $0x10] sm:$0xff]
    %v2776 = vld [vmem:[%s2772 + $0x18] sm:$0xff]
    %v2777 = vlaneseq
    %v2778 = vshrl.u32 %v2777, 7
    %v2779 = vsub.s32 3, %v2778
    %v2780 = vrot.slane %v1858, %v2779
    %v2782 = vsel %vm372, %v2768, 0
    %v2785 = vsel %vm372, %v2769, 0
    %v2788 = vsel %vm372, %v2770, 0
    %v2791 = vsel %vm372, %v2771, 0
    %2793 = vmatprep.subr.mxu0 0.0
    %2794 = vmatpush1.msra.mxu0 0.0
    %2795 = vmatprep.subr.mxu0 0.0
    %2796 = vmatpush1.msra.mxu0 0.0
    %2797 = vmatprep.subr.mxu0 0.0
    %2798 = vmatpush1.msra.mxu0 0.0
    %2799 = vmatprep.subr.mxu0 0.0
    %2800 = vmatpush1.msra.mxu0 0.0
    %2801 = vmatprep.subr.mxu0 0.0
    %2802 = vmatpush1.msra.mxu0 0.0
    %2803 = vmatprep.subr.mxu0 0.0
    %2804 = vmatpush1.msra.mxu0 0.0
    %2805 = vmatprep.subr.mxu0 0.0
    %2806 = vmatpush1.msra.mxu0 0.0
    %2807 = vmatprep.subr.mxu0 0.0
    %2808 = vmatpush1.msra.mxu0 0.0
    %2809 = vmatprep.subr.mxu0 0.0
    %2810 = vmatpush1.msra.mxu0 0.0
    %2811 = vmatprep.subr.mxu0 0.0
    %2812 = vmatpush1.msra.mxu0 0.0
    %2813 = vmatprep.subr.mxu0 0.0
    %2814 = vmatpush1.msra.mxu0 0.0
    %2815 = vmatprep.subr.mxu0 0.0
    %2816 = vmatpush1.msra.mxu0 0.0
    %2817 = vmatprep.subr.mxu0 0.0
    %2818 = vmatpush1.msra.mxu0 %v2776
    %2819 = vmatprep.subr.mxu0 0.0
    %2820 = vmatpush1.msra.mxu0 %v2775
    %2821 = vmatprep.subr.mxu0 0.0
    %2822 = vmatpush1.msra.mxu0 %v2774
    %2823 = vmatprep.subr.mxu0 0.0
    %2824 = vmatpush1.msra.mxu0 %v2773
    %2825 = vmatprep.subr.mxu0 0.0
    %2826 = vmatpush2.msra.mxu0 0.0
    %2827 = vmatprep.subr.mxu0 0.0
    %2828 = vmatpush2.msra.mxu0 0.0
    %2829 = vmatprep.subr.mxu0 0.0
    %2830 = vmatpush2.msra.mxu0 0.0
    %2831 = vmatprep.subr.mxu0 0.0
    %2832 = vmatpush2.msra.mxu0 0.0
    %2833 = vmatprep.subr.mxu0 0.0
    %2834 = vmatpush2.msra.mxu0 0.0
    %2835 = vmatprep.subr.mxu0 0.0
    %2836 = vmatpush2.msra.mxu0 0.0
    %2837 = vmatprep.subr.mxu0 0.0
    %2838 = vmatpush2.msra.mxu0 0.0
    %2839 = vmatprep.subr.mxu0 0.0
    %2840 = vmatpush2.msra.mxu0 0.0
    %2841 = vmatprep.subr.mxu0 0.0
    %2842 = vmatpush2.msra.mxu0 0.0
    %2843 = vmatprep.subr.mxu0 0.0
    %2844 = vmatpush2.msra.mxu0 0.0
    %2845 = vmatprep.subr.mxu0 0.0
    %2846 = vmatpush2.msra.mxu0 0.0
    %2847 = vmatprep.subr.mxu0 0.0
    %2848 = vmatpush2.msra.mxu0 0.0
    %2849 = vmatprep.subr.mxu0 0.0
    %2850 = vmatpush2.msra.mxu0 0.0
    %2851 = vmatprep.subr.mxu0 0.0
    %2852 = vmatpush2.msra.mxu0 0.0
    %2853 = vmatprep.subr.mxu0 0.0
    %2854 = vmatpush2.msra.mxu0 0.0
    %2855 = vmatprep.subr.mxu0 0.0
    %2856 = vmatpush2.msra.mxu0 0.0
    %2857 = vmatprep.mubr.f32.mxu0 0.0
    %2858 = vmatmul.mubr.f32.gmra.mxu0 %v2782
    %v2859 = vpop.f32.mrf.mxu0
    %v2860 = vadd.f32 %v2780, %v2859
    %v2861 = vpop.f32.mrf.mxu0
    %2862 = vmatprep.mubr.f32.mxu0 0.0
    %2863 = vmatmul.mubr.f32.gmra.mxu0 %v2785
    %v2864 = vpop.f32.mrf.mxu0
    %v2865 = vadd.f32 %v2780, %v2864
    %v2866 = vpop.f32.mrf.mxu0
    %2867 = vmatprep.mubr.f32.mxu0 0.0
    %2868 = vmatmul.mubr.f32.gmra.mxu0 %v2788
    %v2869 = vpop.f32.mrf.mxu0
    %v2870 = vadd.f32 %v2780, %v2869
    %v2871 = vpop.f32.mrf.mxu0
    %2872 = vmatprep.mubr.f32.mxu0 0.0
    %2873 = vmatmul.mubr.f32.gmra.mxu0 %v2791
    %v2874 = vpop.f32.mrf.mxu0
    %v2875 = vadd.f32 %v2780, %v2874
    %v2876 = vpop.f32.mrf.mxu0
    %2877 = vdwg.mxu0
    %v2878 = vadd.f32 %v1853, %v2860
    %v2879 = vadd.f32 %v1854, %v2865
    %v2880 = vadd.f32 %v1855, %v2870
    %v2881 = vadd.f32 %v1856, %v2875
    %v2882 = vsel %vm372, %v2878, 0.0
    %2883 = vadd.xlane.f32.xlu0 %v2882
    %v2884 = vpop.xlane.xlu0 %2883
    %v2885 = vsel %vm372, %v2879, 0.0
    %2886 = vadd.xlane.f32.xlu0 %v2885
    %v2887 = vpop.xlane.xlu0 %2886
    %v2888 = vsel %vm372, %v2880, 0.0
    %2889 = vadd.xlane.f32.xlu0 %v2888
    %v2890 = vpop.xlane.xlu0 %2889
    %v2891 = vsel %vm372, %v2881, 0.0
    %2892 = vadd.xlane.f32.xlu0 %v2891
    %v2893 = vpop.xlane.xlu0 %2892
    %v2894 = vmul.f32 %v2884, %v385
    %v2895 = vmul.f32 %v2887, %v385
    %v2896 = vmul.f32 %v2890, %v385
    %v2897 = vmul.f32 %v2893, %v385
    %v2898 = vsub.f32 %v2878, %v2894
    %v2899 = vsub.f32 %v2879, %v2895
    %v2900 = vsub.f32 %v2880, %v2896
    %v2901 = vsub.f32 %v2881, %v2897
    %v2902 = vmul.f32 %v2898, %v2898
    %v2903 = vmul.f32 %v2899, %v2899
    %v2904 = vmul.f32 %v2900, %v2900
    %v2905 = vmul.f32 %v2901, %v2901
    %v2906 = vsel %vm372, %v2902, 0.0
    %2907 = vadd.xlane.f32.xlu0 %v2906
    %v2908 = vpop.xlane.xlu0 %2907
    %v2909 = vsel %vm372, %v2903, 0.0
    %2910 = vadd.xlane.f32.xlu0 %v2909
    %v2911 = vpop.xlane.xlu0 %2910
    %v2912 = vsel %vm372, %v2904, 0.0
    %2913 = vadd.xlane.f32.xlu0 %v2912
    %v2914 = vpop.xlane.xlu0 %2913
    %v2915 = vsel %vm372, %v2905, 0.0
    %2916 = vadd.xlane.f32.xlu0 %v2915
    %v2917 = vpop.xlane.xlu0 %2916
    %v2918 = vmul.f32 %v2908, %v385
    %v2919 = vmul.f32 %v2911, %v385
    %v2920 = vmul.f32 %v2914, %v385
    %v2921 = vmul.f32 %v2917, %v385
    %v2922 = vadd.f32 %v2918, 1e-05
    %v2923 = vadd.f32 %v2919, 1e-05
    %v2924 = vadd.f32 %v2920, 1e-05
    %v2925 = vadd.f32 %v2921, 1e-05
    %v2926 = vrsqrt.pop %v2922
    %v2927 = vrsqrt.pop %v2923
    %v2928 = vrsqrt.pop %v2924
    %v2929 = vrsqrt.pop %v2925
    %v2930 = vmul.f32 %v2898, %v2926
    %v2931 = vmul.f32 %v2899, %v2927
    %v2932 = vmul.f32 %v2900, %v2928
    %v2933 = vmul.f32 %v2901, %v2929
    %v2934 = vlaneseq
    %v2935 = vshrl.u32 %v2934, 7
    %v2936 = vsub.s32 4, %v2935
    %v2937 = vrot.slane %v1858, %v2936
    %v2938 = vmul.f32 %v2930, %v2937
    %v2939 = vmul.f32 %v2931, %v2937
    %v2940 = vmul.f32 %v2932, %v2937
    %v2941 = vmul.f32 %v2933, %v2937
    %v2942 = vlaneseq
    %v2943 = vshrl.u32 %v2942, 7
    %v2944 = vsub.s32 5, %v2943
    %v2945 = vrot.slane %v1858, %v2944
    %v2946 = vadd.f32 %v2938, %v2945
    %v2947 = vadd.f32 %v2939, %v2945
    %v2948 = vadd.f32 %v2940, %v2945
    %v2949 = vadd.f32 %v2941, %v2945
    %s2950 = scalar_lea.vmem %s7, 32
    %v2951 = vld [vmem:[%s2950] sm:$0xff]
    %v2952 = vld [vmem:[%s2950 + $0x8] sm:$0xff]
    %v2953 = vld [vmem:[%s2950 + $0x10] sm:$0xff]
    %v2954 = vld [vmem:[%s2950 + $0x18] sm:$0xff]
    %v2955 = vld [vmem:[%s10 + $0x1] sm:$0x1]
    %v2956 = vlaneseq
    %v2957 = vshrl.u32 %v2956, 7
    %v2958 = vsub.s32 0, %v2957
    %v2959 = vrot.slane %v2955, %v2958
    %v2961 = vsel %vm372, %v2946, 0
    %v2964 = vsel %vm372, %v2947, 0
    %v2967 = vsel %vm372, %v2948, 0
    %v2970 = vsel %vm372, %v2949, 0
    %2972 = vmatprep.subr.mxu0 0.0
    %2973 = vmatpush1.msra.mxu0 0.0
    %2974 = vmatprep.subr.mxu0 0.0
    %2975 = vmatpush1.msra.mxu0 0.0
    %2976 = vmatprep.subr.mxu0 0.0
    %2977 = vmatpush1.msra.mxu0 0.0
    %2978 = vmatprep.subr.mxu0 0.0
    %2979 = vmatpush1.msra.mxu0 0.0
    %2980 = vmatprep.subr.mxu0 0.0
    %2981 = vmatpush1.msra.mxu0 0.0
    %2982 = vmatprep.subr.mxu0 0.0
    %2983 = vmatpush1.msra.mxu0 0.0
    %2984 = vmatprep.subr.mxu0 0.0
    %2985 = vmatpush1.msra.mxu0 0.0
    %2986 = vmatprep.subr.mxu0 0.0
    %2987 = vmatpush1.msra.mxu0 0.0
    %2988 = vmatprep.subr.mxu0 0.0
    %2989 = vmatpush1.msra.mxu0 0.0
    %2990 = vmatprep.subr.mxu0 0.0
    %2991 = vmatpush1.msra.mxu0 0.0
    %2992 = vmatprep.subr.mxu0 0.0
    %2993 = vmatpush1.msra.mxu0 0.0
    %2994 = vmatprep.subr.mxu0 0.0
    %2995 = vmatpush1.msra.mxu0 0.0
    %2996 = vmatprep.subr.mxu0 0.0
    %2997 = vmatpush1.msra.mxu0 %v2954
    %2998 = vmatprep.subr.mxu0 0.0
    %2999 = vmatpush1.msra.mxu0 %v2953
    %3000 = vmatprep.subr.mxu0 0.0
    %3001 = vmatpush1.msra.mxu0 %v2952
    %3002 = vmatprep.subr.mxu0 0.0
    %3003 = vmatpush1.msra.mxu0 %v2951
    %3004 = vmatprep.subr.mxu0 0.0
    %3005 = vmatpush2.msra.mxu0 0.0
    %3006 = vmatprep.subr.mxu0 0.0
    %3007 = vmatpush2.msra.mxu0 0.0
    %3008 = vmatprep.subr.mxu0 0.0
    %3009 = vmatpush2.msra.mxu0 0.0
    %3010 = vmatprep.subr.mxu0 0.0
    %3011 = vmatpush2.msra.mxu0 0.0
    %3012 = vmatprep.subr.mxu0 0.0
    %3013 = vmatpush2.msra.mxu0 0.0
    %3014 = vmatprep.subr.mxu0 0.0
    %3015 = vmatpush2.msra.mxu0 0.0
    %3016 = vmatprep.subr.mxu0 0.0
    %3017 = vmatpush2.msra.mxu0 0.0
    %3018 = vmatprep.subr.mxu0 0.0
    %3019 = vmatpush2.msra.mxu0 0.0
    %3020 = vmatprep.subr.mxu0 0.0
    %3021 = vmatpush2.msra.mxu0 0.0
    %3022 = vmatprep.subr.mxu0 0.0
    %3023 = vmatpush2.msra.mxu0 0.0
    %3024 = vmatprep.subr.mxu0 0.0
    %3025 = vmatpush2.msra.mxu0 0.0
    %3026 = vmatprep.subr.mxu0 0.0
    %3027 = vmatpush2.msra.mxu0 0.0
    %3028 = vmatprep.subr.mxu0 0.0
    %3029 = vmatpush2.msra.mxu0 0.0
    %3030 = vmatprep.subr.mxu0 0.0
    %3031 = vmatpush2.msra.mxu0 0.0
    %3032 = vmatprep.subr.mxu0 0.0
    %3033 = vmatpush2.msra.mxu0 0.0
    %3034 = vmatprep.subr.mxu0 0.0
    %3035 = vmatpush2.msra.mxu0 0.0
    %3036 = vmatprep.mubr.f32.mxu0 0.0
    %3037 = vmatmul.mubr.f32.gmra.mxu0 %v2961
    %v3038 = vpop.f32.mrf.mxu0
    %v3039 = vadd.f32 %v2959, %v3038
    %v3040 = vpop.f32.mrf.mxu0
    %3041 = vmatprep.mubr.f32.mxu0 0.0
    %3042 = vmatmul.mubr.f32.gmra.mxu0 %v2964
    %v3043 = vpop.f32.mrf.mxu0
    %v3044 = vadd.f32 %v2959, %v3043
    %v3045 = vpop.f32.mrf.mxu0
    %3046 = vmatprep.mubr.f32.mxu0 0.0
    %3047 = vmatmul.mubr.f32.gmra.mxu0 %v2967
    %v3048 = vpop.f32.mrf.mxu0
    %v3049 = vadd.f32 %v2959, %v3048
    %v3050 = vpop.f32.mrf.mxu0
    %3051 = vmatprep.mubr.f32.mxu0 0.0
    %3052 = vmatmul.mubr.f32.gmra.mxu0 %v2970
    %v3053 = vpop.f32.mrf.mxu0
    %v3054 = vadd.f32 %v2959, %v3053
    %v3055 = vpop.f32.mrf.mxu0
    %3056 = vdwg.mxu0
    %v3057 = vmul.f32 %v3039, %v3039
    %v3058 = vmul.f32 %v3044, %v3044
    %v3059 = vmul.f32 %v3049, %v3049
    %v3060 = vmul.f32 %v3054, %v3054
    %v3061 = vmul.f32 %v3039, %v3057
    %v3062 = vmul.f32 %v3044, %v3058
    %v3063 = vmul.f32 %v3049, %v3059
    %v3064 = vmul.f32 %v3054, %v3060
    %v3065 = vmul.f32 %v3061, 0.044715
    %v3066 = vmul.f32 %v3062, 0.044715
    %v3067 = vmul.f32 %v3063, 0.044715
    %v3068 = vmul.f32 %v3064, 0.044715
    %v3069 = vadd.f32 %v3039, %v3065
    %v3070 = vadd.f32 %v3044, %v3066
    %v3071 = vadd.f32 %v3049, %v3067
    %v3072 = vadd.f32 %v3054, %v3068
    %v3073 = vmul.f32 %v3069, 0.7978846
    %v3074 = vmul.f32 %v3070, 0.7978846
    %v3075 = vmul.f32 %v3071, 0.7978846
    %v3076 = vmul.f32 %v3072, 0.7978846
    %v3077 = vtanh.pop %v3073
    %v3078 = vtanh.pop %v3074
    %v3079 = vtanh.pop %v3075
    %v3080 = vtanh.pop %v3076
    %v3081 = vadd.f32 %v3077, 1.0
    %v3082 = vadd.f32 %v3078, 1.0
    %v3083 = vadd.f32 %v3079, 1.0
    %v3084 = vadd.f32 %v3080, 1.0
    %v3085 = vmul.f32 %v3081, 0.5
    %v3086 = vmul.f32 %v3082, 0.5
    %v3087 = vmul.f32 %v3083, 0.5
    %v3088 = vmul.f32 %v3084, 0.5
    %v3089 = vmul.f32 %v3039, %v3085
    %v3090 = vmul.f32 %v3044, %v3086
    %v3091 = vmul.f32 %v3049, %v3087
    %v3092 = vmul.f32 %v3054, %v3088
    %s3093 = scalar_lea.vmem %s8, 64
    %v3094 = vld [vmem:[%s3093] sm:$0xff]
    %v3095 = vld [vmem:[%s3093 + $0x8] sm:$0xff]
    %v3096 = vld [vmem:[%s3093 + $0x10] sm:$0xff]
    %v3097 = vld [vmem:[%s3093 + $0x18] sm:$0xff]
    %v3098 = vld [vmem:[%s3093 + $0x20] sm:$0xff]
    %v3099 = vld [vmem:[%s3093 + $0x28] sm:$0xff]
    %v3100 = vld [vmem:[%s3093 + $0x30] sm:$0xff]
    %v3101 = vld [vmem:[%s3093 + $0x38] sm:$0xff]
    %v3102 = vlaneseq
    %v3103 = vshrl.u32 %v3102, 7
    %v3104 = vsub.s32 6, %v3103
    %v3105 = vrot.slane %v1858, %v3104
    %v3107 = vsel %vm1687, %v3089, 0
    %v3110 = vsel %vm1687, %v3090, 0
    %v3113 = vsel %vm1687, %v3091, 0
    %v3116 = vsel %vm1687, %v3092, 0
    %3118 = vmatprep.subr.mxu0 0.0
    %3119 = vmatpush1.msra.mxu0 0.0
    %3120 = vmatprep.subr.mxu0 0.0
    %3121 = vmatpush1.msra.mxu0 0.0
    %3122 = vmatprep.subr.mxu0 0.0
    %3123 = vmatpush1.msra.mxu0 0.0
    %3124 = vmatprep.subr.mxu0 0.0
    %3125 = vmatpush1.msra.mxu0 0.0
    %3126 = vmatprep.subr.mxu0 0.0
    %3127 = vmatpush1.msra.mxu0 0.0
    %3128 = vmatprep.subr.mxu0 0.0
    %3129 = vmatpush1.msra.mxu0 0.0
    %3130 = vmatprep.subr.mxu0 0.0
    %3131 = vmatpush1.msra.mxu0 0.0
    %3132 = vmatprep.subr.mxu0 0.0
    %3133 = vmatpush1.msra.mxu0 0.0
    %3134 = vmatprep.subr.mxu0 0.0
    %3135 = vmatpush1.msra.mxu0 %v3101
    %3136 = vmatprep.subr.mxu0 0.0
    %3137 = vmatpush1.msra.mxu0 %v3100
    %3138 = vmatprep.subr.mxu0 0.0
    %3139 = vmatpush1.msra.mxu0 %v3099
    %3140 = vmatprep.subr.mxu0 0.0
    %3141 = vmatpush1.msra.mxu0 %v3098
    %3142 = vmatprep.subr.mxu0 0.0
    %3143 = vmatpush1.msra.mxu0 %v3097
    %3144 = vmatprep.subr.mxu0 0.0
    %3145 = vmatpush1.msra.mxu0 %v3096
    %3146 = vmatprep.subr.mxu0 0.0
    %3147 = vmatpush1.msra.mxu0 %v3095
    %3148 = vmatprep.subr.mxu0 0.0
    %3149 = vmatpush1.msra.mxu0 %v3094
    %3150 = vmatprep.subr.mxu0 0.0
    %3151 = vmatpush2.msra.mxu0 0.0
    %3152 = vmatprep.subr.mxu0 0.0
    %3153 = vmatpush2.msra.mxu0 0.0
    %3154 = vmatprep.subr.mxu0 0.0
    %3155 = vmatpush2.msra.mxu0 0.0
    %3156 = vmatprep.subr.mxu0 0.0
    %3157 = vmatpush2.msra.mxu0 0.0
    %3158 = vmatprep.subr.mxu0 0.0
    %3159 = vmatpush2.msra.mxu0 0.0
    %3160 = vmatprep.subr.mxu0 0.0
    %3161 = vmatpush2.msra.mxu0 0.0
    %3162 = vmatprep.subr.mxu0 0.0
    %3163 = vmatpush2.msra.mxu0 0.0
    %3164 = vmatprep.subr.mxu0 0.0
    %3165 = vmatpush2.msra.mxu0 0.0
    %3166 = vmatprep.subr.mxu0 0.0
    %3167 = vmatpush2.msra.mxu0 0.0
    %3168 = vmatprep.subr.mxu0 0.0
    %3169 = vmatpush2.msra.mxu0 0.0
    %3170 = vmatprep.subr.mxu0 0.0
    %3171 = vmatpush2.msra.mxu0 0.0
    %3172 = vmatprep.subr.mxu0 0.0
    %3173 = vmatpush2.msra.mxu0 0.0
    %3174 = vmatprep.subr.mxu0 0.0
    %3175 = vmatpush2.msra.mxu0 0.0
    %3176 = vmatprep.subr.mxu0 0.0
    %3177 = vmatpush2.msra.mxu0 0.0
    %3178 = vmatprep.subr.mxu0 0.0
    %3179 = vmatpush2.msra.mxu0 0.0
    %3180 = vmatprep.subr.mxu0 0.0
    %3181 = vmatpush2.msra.mxu0 0.0
    %3182 = vmatprep.mubr.f32.mxu0 0.0
    %3183 = vmatmul.mubr.f32.gmra.mxu0 %v3107
    %v3184 = vpop.f32.mrf.mxu0
    %v3185 = vadd.f32 %v3105, %v3184
    %v3186 = vpop.f32.mrf.mxu0
    %3187 = vmatprep.mubr.f32.mxu0 0.0
    %3188 = vmatmul.mubr.f32.gmra.mxu0 %v3110
    %v3189 = vpop.f32.mrf.mxu0
    %v3190 = vadd.f32 %v3105, %v3189
    %v3191 = vpop.f32.mrf.mxu0
    %3192 = vmatprep.mubr.f32.mxu0 0.0
    %3193 = vmatmul.mubr.f32.gmra.mxu0 %v3113
    %v3194 = vpop.f32.mrf.mxu0
    %v3195 = vadd.f32 %v3105, %v3194
    %v3196 = vpop.f32.mrf.mxu0
    %3197 = vmatprep.mubr.f32.mxu0 0.0
    %3198 = vmatmul.mubr.f32.gmra.mxu0 %v3116
    %v3199 = vpop.f32.mrf.mxu0
    %v3200 = vadd.f32 %v3105, %v3199
    %v3201 = vpop.f32.mrf.mxu0
    %3202 = vdwg.mxu0
    %v3203 = vadd.f32 %v2946, %v3185
    %v3204 = vadd.f32 %v2947, %v3190
    %v3205 = vadd.f32 %v2948, %v3195
    %v3206 = vadd.f32 %v2949, %v3200
    %v3207 = vsel %vm372, %v3203, 0.0
    %3208 = vadd.xlane.f32.xlu0 %v3207
    %v3209 = vpop.xlane.xlu0 %3208
    %v3210 = vsel %vm372, %v3204, 0.0
    %3211 = vadd.xlane.f32.xlu0 %v3210
    %v3212 = vpop.xlane.xlu0 %3211
    %v3213 = vsel %vm372, %v3205, 0.0
    %3214 = vadd.xlane.f32.xlu0 %v3213
    %v3215 = vpop.xlane.xlu0 %3214
    %v3216 = vsel %vm372, %v3206, 0.0
    %3217 = vadd.xlane.f32.xlu0 %v3216
    %v3218 = vpop.xlane.xlu0 %3217
    %v3219 = vmul.f32 %v3209, %v385
    %v3220 = vmul.f32 %v3212, %v385
    %v3221 = vmul.f32 %v3215, %v385
    %v3222 = vmul.f32 %v3218, %v385
    %v3223 = vsub.f32 %v3203, %v3219
    %v3224 = vsub.f32 %v3204, %v3220
    %v3225 = vsub.f32 %v3205, %v3221
    %v3226 = vsub.f32 %v3206, %v3222
    %v3227 = vmul.f32 %v3223, %v3223
    %v3228 = vmul.f32 %v3224, %v3224
    %v3229 = vmul.f32 %v3225, %v3225
    %v3230 = vmul.f32 %v3226, %v3226
    %v3231 = vsel %vm372, %v3227, 0.0
    %3232 = vadd.xlane.f32.xlu0 %v3231
    %v3233 = vpop.xlane.xlu0 %3232
    %v3234 = vsel %vm372, %v3228, 0.0
    %3235 = vadd.xlane.f32.xlu0 %v3234
    %v3236 = vpop.xlane.xlu0 %3235
    %v3237 = vsel %vm372, %v3229, 0.0
    %3238 = vadd.xlane.f32.xlu0 %v3237
    %v3239 = vpop.xlane.xlu0 %3238
    %v3240 = vsel %vm372, %v3230, 0.0
    %3241 = vadd.xlane.f32.xlu0 %v3240
    %v3242 = vpop.xlane.xlu0 %3241
    %v3243 = vmul.f32 %v3233, %v385
    %v3244 = vmul.f32 %v3236, %v385
    %v3245 = vmul.f32 %v3239, %v385
    %v3246 = vmul.f32 %v3242, %v385
    %v3247 = vadd.f32 %v3243, 1e-05
    %v3248 = vadd.f32 %v3244, 1e-05
    %v3249 = vadd.f32 %v3245, 1e-05
    %v3250 = vadd.f32 %v3246, 1e-05
    %v3251 = vrsqrt.pop %v3247
    %v3252 = vrsqrt.pop %v3248
    %v3253 = vrsqrt.pop %v3249
    %v3254 = vrsqrt.pop %v3250
    %v3255 = vmul.f32 %v3223, %v3251
    %v3256 = vmul.f32 %v3224, %v3252
    %v3257 = vmul.f32 %v3225, %v3253
    %v3258 = vmul.f32 %v3226, %v3254
    %v3259 = vlaneseq
    %v3260 = vshrl.u32 %v3259, 7
    %v3261 = vsub.s32 7, %v3260
    %v3262 = vrot.slane %v1858, %v3261
    %v3263 = vmul.f32 %v3255, %v3262
    %v3264 = vmul.f32 %v3256, %v3262
    %v3265 = vmul.f32 %v3257, %v3262
    %v3266 = vmul.f32 %v3258, %v3262
    %v3267 = vlaneseq
    %v3268 = vshrl.u32 %v3267, 7
    %v3269 = vsub.s32 0, %v3268
    %v3270 = vrot.slane %v1859, %v3269
    %v3271 = vadd.f32 %v3263, %v3270
    %v3272 = vadd.f32 %v3264, %v3270
    %v3273 = vadd.f32 %v3265, %v3270
    %v3274 = vadd.f32 %v3266, %v3270
    %3275 = vst.msk [vmem:[#allocation2] sm:$0xff] %vm372, %v3271
    %3276 = vst.msk [vmem:[#allocation2 + $0x8] sm:$0xff] %vm372, %v3272
    %3277 = vst.msk [vmem:[#allocation2 + $0x10] sm:$0xff] %vm372, %v3273
    %3278 = vst.msk [vmem:[#allocation2 + $0x18] sm:$0xff] %vm372, %v3274
    // Predicated region
    $region46: #{tpu_custom_call.1} parent=1 // pred_check
      _
    $region47: #{tpu_custom_call.1} parent=1 // pred_check_branch
      %3280 = sbr.rel (0) target = $region49
    $region48: #{tpu_custom_call.1} parent=1 // pred_region
      %s3282 = ssub.s32 512, 512
      %3283 = vsyncadd [#allocation3], %s3282
      %s3284 = sshll.u32 [#allocation2], 4
      %s3285 = int_to_ptr.vmem [resolvable:$true] %s3284
      %3290 = dma.vmem_to_hbm [thread:$0]  %s3285, 512, %s11, [#allocation3], 128, 128, 8
    $region49: #{tpu_custom_call.1} parent=1 // pred_fallthru
      _
    // Predicated region
    $region50: #{tpu_custom_call.1} parent=1 // pred_check
      _
    $region51: #{tpu_custom_call.1} parent=1 // pred_check_branch
      %3292 = sbr.rel (0) target = $region53
    $region52: #{tpu_custom_call.1} parent=1 // pred_region
      %3293 = dma.done [#allocation3], 512
    $region53: #{tpu_custom_call.1} parent=1 // pred_fallthru
      _
    %3294 = vsyncpa [#allocation3], 1

</llo_original>
